<compile_context>
chip_gen: v7x
topology: tpu7x:2x2x1
jax: 0.10.0
libtpu: 0.0.40
codegen_flags: <defaults>
</compile_context>

<pallas_src>
import jax
import jax.numpy as jnp
from jax.experimental import pallas as pl
from jax.experimental.pallas import tpu as pltpu
from jax.scipy.linalg import block_diag


def _round_up(x, m):
    return ((x + m - 1) // m) * m


# ----------------------------------------------------------------------------
# The single fused kernel.
#   x_ref     : (Tp, Cp)  bf16  gathered bilinear-tap input rows (Tp = rup(4B, 8))
#   blend_ref : (Bp, Tp)  f32   per-batch bilinear blend weights
#   20 param refs (see pack_params), then o_ref : (Bp, 128) f32 packed output:
#     lane 0 = sigmoid(qual), lanes 1:5 = quat, lane 5 = width.
# ----------------------------------------------------------------------------
def fused_kernel(x_ref, blend_ref, *refs):
    o_ref = refs[-1]
    p = refs[:-1]
    hwA, hbA, hwB, hbB, hwC, hbC, hwD, hbD, wlin, blin = p[10:20]

    # --- grasp_conv: 5 x (1x1 conv + bias + ReLU) on the tap rows -------------
    h = x_ref[...]                                               # (Tp, Cp) bf16
    for i in range(5):
        w = p[2 * i][...]
        b = p[2 * i + 1][...]
        h = jnp.maximum(
            jnp.dot(h, w, preferred_element_type=jnp.float32) + b, 0.0)
        if i < 4:
            h = h.astype(jnp.bfloat16)                           # keep last layer f32

    # --- bilinear grid_sample == per-batch blend of the 4 tap rows ------------
    s = jnp.dot(blend_ref[...], h, preferred_element_type=jnp.float32)   # (Bp, 32)

    # --- three prediction towers: merged first layer + block-diagonal packing -
    def layer(a, w_ref, b_ref):
        return jnp.maximum(
            jnp.dot(a.astype(jnp.bfloat16), w_ref[...],
                    preferred_element_type=jnp.float32) + b_ref[...], 0.0)

    hA = layer(s, hwA, hbA)           # (Bp, 384)  = [qual | quat | width] x 128
    hB = layer(hA, hwB, hbB)          # (Bp, 768)
    hC = layer(hB, hwC, hbC)          # (Bp, 384)
    hD = layer(hC, hwD, hbD)          # (Bp, 128)  lanes 0/1/2 = qual/quat/width scalars

    # final nn.Linear(1, out) of all three towers folded into one lane-dense matmul
    out = jnp.dot(hD, wlin[...], preferred_element_type=jnp.float32) + blin[...]
    lane = jax.lax.broadcasted_iota(jnp.int32, out.shape, 1)
    o_ref[...] = jnp.where(lane == 0, jax.nn.sigmoid(out), out)  # single full-width store


def run_fused(x_taps, blend, ops):
    Bp, Tp = blend.shape
    g_ws = ops[0:10:2]
    h_ws = ops[10:20:2]
    flops = 2 * Tp * sum(int(w.shape[0]) * int(w.shape[1]) for w in g_ws)
    flops += 2 * Bp * (Tp * int(g_ws[-1].shape[1])
                       + sum(int(w.shape[0]) * int(w.shape[1]) for w in h_ws))
    bytes_acc = sum(int(a.size) * a.dtype.itemsize for a in (x_taps, blend, *ops))
    bytes_acc += Bp * 128 * 4
    return pl.pallas_call(
        fused_kernel,
        out_shape=jax.ShapeDtypeStruct((Bp, 128), jnp.float32),
        in_specs=[pl.BlockSpec(memory_space=pltpu.MemorySpace.VMEM)] * (2 + len(ops)),
        out_specs=pl.BlockSpec(memory_space=pltpu.MemorySpace.VMEM),
        cost_estimate=pl.CostEstimate(
            flops=flops, transcendentals=Bp * 128, bytes_accessed=bytes_acc),
    )(x_taps, blend, *ops)


# ----------------------------------------------------------------------------
# Parameter init (deterministic, synthetic) and one-time packing.
# ----------------------------------------------------------------------------
def init_params(key, in_channels=256, out_channels=32):
    keys = iter(jax.random.split(key, 64))

    def dense(cin, cout):   # row-major: y = x @ w + b   w:(cin,cout)  b:(1,cout)
        w = jax.random.normal(next(keys), (cin, cout), jnp.float32) / jnp.sqrt(float(cin))
        b = jax.random.normal(next(keys), (1, cout), jnp.float32) * 0.01
        return w, b

    params = {}
    grasp_dims = [in_channels, 128, 64, 32, 16, out_channels]
    g = []
    for a, c in zip(grasp_dims[:-1], grasp_dims[1:]):
        g.extend(dense(a, c))
    params["grasp"] = g

    head_dims = [out_channels, 128, 256, 128, 1]
    for name, lin_out in (("qual", 1), ("quat", 4), ("width", 1)):
        hp = []
        for a, c in zip(head_dims[:-1], head_dims[1:]):
            hp.extend(dense(a, c))
        hp.extend(dense(1, lin_out))             # nn.Linear(1, lin_out)
        params[name] = hp
    return params


def pack_params(params):
    """One-time (outside jit) packing into the fused kernel's operand list."""
    bf16 = jnp.bfloat16
    ops = []

    g = params["grasp"]
    cin = g[0].shape[0]
    cp = _round_up(cin, 128)                                  # lane-align the input dim
    ops += [jnp.pad(g[0], ((0, cp - cin), (0, 0))).astype(bf16), g[1].astype(jnp.float32)]
    for i in range(1, 5):
        ops += [g[2 * i].astype(bf16), g[2 * i + 1].astype(jnp.float32)]

    towers = [params["qual"], params["quat"], params["width"]]    # column order: q, quat, w

    def cat_b(idx):
        return jnp.concatenate([t[idx] for t in towers], axis=1).astype(jnp.float32)

    hwA = jnp.concatenate([t[0] for t in towers], axis=1).astype(bf16)      # (32, 384)
    hbA = cat_b(1)                                                          # (1, 384)
    hwB = block_diag(*[t[2] for t in towers]).astype(bf16)                  # (384, 768)
    hbB = cat_b(3)
    hwC = block_diag(*[t[4] for t in towers]).astype(bf16)                  # (768, 384)
    hbC = cat_b(5)
    hwD = jnp.pad(block_diag(*[t[6] for t in towers]), ((0, 0), (0, 125))).astype(bf16)  # (384,128)
    hbD = jnp.pad(cat_b(7), ((0, 0), (0, 125)))                             # (1, 128)

    qual_p, quat_p, width_p = towers
    wlin = jnp.zeros((128, 128), jnp.float32)
    wlin = wlin.at[0, 0].set(qual_p[8][0, 0])
    wlin = wlin.at[1, 1:5].set(quat_p[8][0, :])
    wlin = wlin.at[2, 5].set(width_p[8][0, 0])
    blin = jnp.zeros((1, 128), jnp.float32)
    blin = blin.at[0, 0].set(qual_p[9][0, 0])
    blin = blin.at[0, 1:5].set(quat_p[9][0, :])
    blin = blin.at[0, 5].set(width_p[9][0, 0])

    ops += [hwA, hbA, hwB, hbB, hwC, hbC, hwD, hbD, wlin, blin]
    return ops


# ----------------------------------------------------------------------------
# forward_train prediction path:
#   x = x[1]; x_grasp = grasp_conv(x); pos = pos*2-1;
#   x_sampled = grid_sample(x_grasp, pos, border, align_corners=True, bilinear)
#   pred_qual = sigmoid(conv_qual(x_sampled)); pred_quat = conv_quat(...); pred_width = ...
# ----------------------------------------------------------------------------
def grasp_head_forward(x_list, pos, ops):
    x = x_list[1]                                   # x = x[1] in forward_train
    B, C, H, W = x.shape
    cp = ops[0].shape[0]                            # padded Cin expected by the kernel

    # bilinear taps of F.grid_sample(..., padding_mode='border', align_corners=True)
    grid = pos * 2.0 - 1.0                          # pos = pos * 2 - 1
    gx, gy = grid[:, 0], grid[:, 1]
    ix = jnp.clip((gx + 1.0) * 0.5 * (W - 1), 0.0, float(W - 1))
    iy = jnp.clip((gy + 1.0) * 0.5 * (H - 1), 0.0, float(H - 1))
    ix0 = jnp.floor(ix)
    iy0 = jnp.floor(iy)
    wx1, wy1 = ix - ix0, iy - iy0
    wx0, wy0 = 1.0 - wx1, 1.0 - wy1
    ix0i = ix0.astype(jnp.int32)
    iy0i = iy0.astype(jnp.int32)
    ix1i = jnp.minimum(ix0i + 1, W - 1)
    iy1i = jnp.minimum(iy0i + 1, H - 1)
    tap_idx = jnp.stack([iy0i * W + ix0i, iy0i * W + ix1i,
                         iy1i * W + ix0i, iy1i * W + ix1i], axis=1)        # (B, 4)
    w4 = jnp.stack([wy0 * wx0, wy0 * wx1, wy1 * wx0, wy1 * wx1], axis=1)   # (B, 4)

    # grasp_conv is pointwise, so only the 4*B tapped input rows are ever needed.
    x_flat = x.reshape(B, C, H * W)
    x_taps = jnp.take_along_axis(x_flat, tap_idx[:, None, :], axis=2)      # (B, C, 4)
    x_taps = jnp.swapaxes(x_taps, 1, 2).reshape(B * 4, C)                  # (4B, C)

    Tp = _round_up(B * 4, 8)
    Bp = _round_up(max(B, 8), 8)
    x_taps = jnp.pad(x_taps, ((0, Tp - B * 4), (0, cp - C))).astype(jnp.bfloat16)
    blend = (jnp.eye(B, dtype=jnp.float32)[:, :, None] * w4[:, None, :]).reshape(B, B * 4)
    blend = jnp.pad(blend, ((0, Bp - B), (0, Tp - B * 4)))

    out = run_fused(x_taps, blend, ops)             # (Bp, 128) packed slab
    pred_qual = out[:B, 0]                          # .flatten().sigmoid()
    pred_quat = out[:B, 1:5]                        # .squeeze(-2) -> (B, 4)
    pred_width = out[:B, 5]                         # .flatten()
    return pred_qual, pred_quat, pred_width


if __name__ == "__main__":
    key = jax.random.PRNGKey(0)
    kp, kx0, kx1, kpos, kq, kqt, kw = jax.random.split(key, 7)

    B, Cin, H, W = 2, 256, 16, 16
    params = init_params(kp, in_channels=Cin, out_channels=32)
    ops = pack_params(params)                       # one-time offline packing (bf16 weights)

    x0 = jax.random.normal(kx0, (B, Cin, H, W), jnp.float32)
    x1 = jax.random.normal(kx1, (B, Cin, H, W), jnp.float32)
    pos = jax.random.uniform(kpos, (B, 2), jnp.float32)        # normalized [0, 1] coords
    gt_qual = (jax.random.uniform(kq, (B,)) > 0.5).astype(jnp.float32)
    gt_quat = jax.random.normal(kqt, (B, 4), jnp.float32)
    gt_width = jax.random.normal(kw, (B,), jnp.float32)

    fwd = jax.jit(grasp_head_forward)
    pred_qual, pred_quat, pred_width = fwd([x0, x1], pos, ops)

    # losses (plain JAX glue).  Faithful to the module: mmdet
    # CrossEntropyLoss(use_sigmoid=True) == BCE-with-logits, and forward_train feeds it
    # the already-sigmoided pred_qual (that is literally what the module does);
    # MSELoss == mean squared error.
    # TODO(synk): mmdet build_loss / print(loss_qual) have no Pallas equivalent; kept as JAX glue.
    p = pred_qual
    loss_qual = jnp.mean(jnp.maximum(p, 0.0) - p * gt_qual + jnp.log1p(jnp.exp(-jnp.abs(p))))
    loss_quat = jnp.mean((pred_quat - gt_quat) ** 2)
    loss_width = jnp.mean((pred_width - gt_width) ** 2)
    losses = dict(loss_width=loss_width, loss_qual=loss_qual, loss_quat=loss_quat)

    jax.block_until_ready((pred_qual, pred_quat, pred_width, losses))
    assert pred_qual.shape == (B,) and pred_quat.shape == (B, 4) and pred_width.shape == (B,)
    print("KERNEL_OK")
</pallas_src>

<mosaic_0001>
module attributes {stable_mosaic.version = 11 : i64} {
  func.func @fused_kernel(%arg0: memref<8x256xbf16, #tpu.memory_space<vmem>>, %arg1: memref<8x8xf32, #tpu.memory_space<vmem>>, %arg2: memref<256x128xbf16, #tpu.memory_space<vmem>>, %arg3: memref<1x128xf32, #tpu.memory_space<vmem>>, %arg4: memref<128x64xbf16, #tpu.memory_space<vmem>>, %arg5: memref<1x64xf32, #tpu.memory_space<vmem>>, %arg6: memref<64x32xbf16, #tpu.memory_space<vmem>>, %arg7: memref<1x32xf32, #tpu.memory_space<vmem>>, %arg8: memref<32x16xbf16, #tpu.memory_space<vmem>>, %arg9: memref<1x16xf32, #tpu.memory_space<vmem>>, %arg10: memref<16x32xbf16, #tpu.memory_space<vmem>>, %arg11: memref<1x32xf32, #tpu.memory_space<vmem>>, %arg12: memref<32x384xbf16, #tpu.memory_space<vmem>>, %arg13: memref<1x384xf32, #tpu.memory_space<vmem>>, %arg14: memref<384x768xbf16, #tpu.memory_space<vmem>>, %arg15: memref<1x768xf32, #tpu.memory_space<vmem>>, %arg16: memref<768x384xbf16, #tpu.memory_space<vmem>>, %arg17: memref<1x384xf32, #tpu.memory_space<vmem>>, %arg18: memref<384x128xbf16, #tpu.memory_space<vmem>>, %arg19: memref<1x128xf32, #tpu.memory_space<vmem>>, %arg20: memref<128x128xf32, #tpu.memory_space<vmem>>, %arg21: memref<1x128xf32, #tpu.memory_space<vmem>>, %arg22: memref<8x128xf32, #tpu.memory_space<vmem>>) attributes {dimension_semantics = [], scalar_prefetch = 0 : i64, scratch_operands = 0 : i64, tpu.core_type = #tpu.core_type<tc>} {
    %c0 = arith.constant 0 : index
    %c0_0 = arith.constant 0 : index
    %0 = vector.load %arg0[%c0, %c0_0] : memref<8x256xbf16, #tpu.memory_space<vmem>>, vector<8x256xbf16>
    %c0_1 = arith.constant 0 : index
    %c0_2 = arith.constant 0 : index
    %1 = vector.load %arg2[%c0_1, %c0_2] : memref<256x128xbf16, #tpu.memory_space<vmem>>, vector<256x128xbf16>
    %c0_3 = arith.constant 0 : index
    %c0_4 = arith.constant 0 : index
    %2 = vector.load %arg3[%c0_3, %c0_4] : memref<1x128xf32, #tpu.memory_space<vmem>>, vector<1x128xf32>
    %cst = arith.constant dense<0.000000e+00> : vector<8x128xf32>
    %3 = tpu.matmul %0, %1, %cst {dimension_numbers = #tpu.dot_dimension_numbers<[1], [0], [0], [1], [0, 0, 1, 1], [], []>} : vector<8x256xbf16>, vector<256x128xbf16>, vector<8x128xf32> -> vector<8x128xf32>
    %4 = vector.broadcast %2 : vector<1x128xf32> to vector<8x128xf32>
    %5 = arith.addf %3, %4 : vector<8x128xf32>
    %cst_5 = arith.constant 0.000000e+00 : f32
    %6 = vector.broadcast %cst_5 : f32 to vector<8x128xf32>
    %7 = arith.maximumf %5, %6 : vector<8x128xf32>
    %8 = arith.truncf %7 : vector<8x128xf32> to vector<8x128xbf16>
    %c0_6 = arith.constant 0 : index
    %c0_7 = arith.constant 0 : index
    %9 = vector.load %arg4[%c0_6, %c0_7] : memref<128x64xbf16, #tpu.memory_space<vmem>>, vector<128x64xbf16>
    %c0_8 = arith.constant 0 : index
    %c0_9 = arith.constant 0 : index
    %10 = vector.load %arg5[%c0_8, %c0_9] : memref<1x64xf32, #tpu.memory_space<vmem>>, vector<1x64xf32>
    %cst_10 = arith.constant dense<0.000000e+00> : vector<8x64xf32>
    %11 = tpu.matmul %8, %9, %cst_10 {dimension_numbers = #tpu.dot_dimension_numbers<[1], [0], [0], [1], [0, 0, 1, 1], [], []>} : vector<8x128xbf16>, vector<128x64xbf16>, vector<8x64xf32> -> vector<8x64xf32>
    %12 = vector.broadcast %10 : vector<1x64xf32> to vector<8x64xf32>
    %13 = arith.addf %11, %12 : vector<8x64xf32>
    %cst_11 = arith.constant 0.000000e+00 : f32
    %14 = vector.broadcast %cst_11 : f32 to vector<8x64xf32>
    %15 = arith.maximumf %13, %14 : vector<8x64xf32>
    %16 = arith.truncf %15 : vector<8x64xf32> to vector<8x64xbf16>
    %c0_12 = arith.constant 0 : index
    %c0_13 = arith.constant 0 : index
    %17 = vector.load %arg6[%c0_12, %c0_13] : memref<64x32xbf16, #tpu.memory_space<vmem>>, vector<64x32xbf16>
    %c0_14 = arith.constant 0 : index
    %c0_15 = arith.constant 0 : index
    %18 = vector.load %arg7[%c0_14, %c0_15] : memref<1x32xf32, #tpu.memory_space<vmem>>, vector<1x32xf32>
    %cst_16 = arith.constant dense<0.000000e+00> : vector<8x32xf32>
    %19 = tpu.matmul %16, %17, %cst_16 {dimension_numbers = #tpu.dot_dimension_numbers<[1], [0], [0], [1], [0, 0, 1, 1], [], []>} : vector<8x64xbf16>, vector<64x32xbf16>, vector<8x32xf32> -> vector<8x32xf32>
    %20 = vector.broadcast %18 : vector<1x32xf32> to vector<8x32xf32>
    %21 = arith.addf %19, %20 : vector<8x32xf32>
    %cst_17 = arith.constant 0.000000e+00 : f32
    %22 = vector.broadcast %cst_17 : f32 to vector<8x32xf32>
    %23 = arith.maximumf %21, %22 : vector<8x32xf32>
    %24 = arith.truncf %23 : vector<8x32xf32> to vector<8x32xbf16>
    %c0_18 = arith.constant 0 : index
    %c0_19 = arith.constant 0 : index
    %25 = vector.load %arg8[%c0_18, %c0_19] : memref<32x16xbf16, #tpu.memory_space<vmem>>, vector<32x16xbf16>
    %c0_20 = arith.constant 0 : index
    %c0_21 = arith.constant 0 : index
    %26 = vector.load %arg9[%c0_20, %c0_21] : memref<1x16xf32, #tpu.memory_space<vmem>>, vector<1x16xf32>
    %cst_22 = arith.constant dense<0.000000e+00> : vector<8x16xf32>
    %27 = tpu.matmul %24, %25, %cst_22 {dimension_numbers = #tpu.dot_dimension_numbers<[1], [0], [0], [1], [0, 0, 1, 1], [], []>} : vector<8x32xbf16>, vector<32x16xbf16>, vector<8x16xf32> -> vector<8x16xf32>
    %28 = vector.broadcast %26 : vector<1x16xf32> to vector<8x16xf32>
    %29 = arith.addf %27, %28 : vector<8x16xf32>
    %cst_23 = arith.constant 0.000000e+00 : f32
    %30 = vector.broadcast %cst_23 : f32 to vector<8x16xf32>
    %31 = arith.maximumf %29, %30 : vector<8x16xf32>
    %32 = arith.truncf %31 : vector<8x16xf32> to vector<8x16xbf16>
    %c0_24 = arith.constant 0 : index
    %c0_25 = arith.constant 0 : index
    %33 = vector.load %arg10[%c0_24, %c0_25] : memref<16x32xbf16, #tpu.memory_space<vmem>>, vector<16x32xbf16>
    %c0_26 = arith.constant 0 : index
    %c0_27 = arith.constant 0 : index
    %34 = vector.load %arg11[%c0_26, %c0_27] : memref<1x32xf32, #tpu.memory_space<vmem>>, vector<1x32xf32>
    %cst_28 = arith.constant dense<0.000000e+00> : vector<8x32xf32>
    %35 = tpu.matmul %32, %33, %cst_28 {dimension_numbers = #tpu.dot_dimension_numbers<[1], [0], [0], [1], [0, 0, 1, 1], [], []>} : vector<8x16xbf16>, vector<16x32xbf16>, vector<8x32xf32> -> vector<8x32xf32>
    %36 = vector.broadcast %34 : vector<1x32xf32> to vector<8x32xf32>
    %37 = arith.addf %35, %36 : vector<8x32xf32>
    %cst_29 = arith.constant 0.000000e+00 : f32
    %38 = vector.broadcast %cst_29 : f32 to vector<8x32xf32>
    %39 = arith.maximumf %37, %38 : vector<8x32xf32>
    %c0_30 = arith.constant 0 : index
    %c0_31 = arith.constant 0 : index
    %40 = vector.load %arg1[%c0_30, %c0_31] : memref<8x8xf32, #tpu.memory_space<vmem>>, vector<8x8xf32>
    %cst_32 = arith.constant dense<0.000000e+00> : vector<8x32xf32>
    %41 = tpu.matmul %40, %39, %cst_32 {dimension_numbers = #tpu.dot_dimension_numbers<[1], [0], [0], [1], [0, 0, 1, 1], [], []>} : vector<8x8xf32>, vector<8x32xf32>, vector<8x32xf32> -> vector<8x32xf32>
    %42 = arith.truncf %41 : vector<8x32xf32> to vector<8x32xbf16>
    %c0_33 = arith.constant 0 : index
    %c0_34 = arith.constant 0 : index
    %43 = vector.load %arg12[%c0_33, %c0_34] : memref<32x384xbf16, #tpu.memory_space<vmem>>, vector<32x384xbf16>
    %cst_35 = arith.constant dense<0.000000e+00> : vector<8x384xf32>
    %44 = tpu.matmul %42, %43, %cst_35 {dimension_numbers = #tpu.dot_dimension_numbers<[1], [0], [0], [1], [0, 0, 1, 1], [], []>} : vector<8x32xbf16>, vector<32x384xbf16>, vector<8x384xf32> -> vector<8x384xf32>
    %c0_36 = arith.constant 0 : index
    %c0_37 = arith.constant 0 : index
    %45 = vector.load %arg13[%c0_36, %c0_37] : memref<1x384xf32, #tpu.memory_space<vmem>>, vector<1x384xf32>
    %46 = vector.broadcast %45 : vector<1x384xf32> to vector<8x384xf32>
    %47 = arith.addf %44, %46 : vector<8x384xf32>
    %cst_38 = arith.constant 0.000000e+00 : f32
    %48 = vector.broadcast %cst_38 : f32 to vector<8x384xf32>
    %49 = arith.maximumf %47, %48 : vector<8x384xf32>
    %50 = arith.truncf %49 : vector<8x384xf32> to vector<8x384xbf16>
    %c0_39 = arith.constant 0 : index
    %c0_40 = arith.constant 0 : index
    %51 = vector.load %arg14[%c0_39, %c0_40] : memref<384x768xbf16, #tpu.memory_space<vmem>>, vector<384x768xbf16>
    %cst_41 = arith.constant dense<0.000000e+00> : vector<8x768xf32>
    %52 = tpu.matmul %50, %51, %cst_41 {dimension_numbers = #tpu.dot_dimension_numbers<[1], [0], [0], [1], [0, 0, 1, 1], [], []>} : vector<8x384xbf16>, vector<384x768xbf16>, vector<8x768xf32> -> vector<8x768xf32>
    %c0_42 = arith.constant 0 : index
    %c0_43 = arith.constant 0 : index
    %53 = vector.load %arg15[%c0_42, %c0_43] : memref<1x768xf32, #tpu.memory_space<vmem>>, vector<1x768xf32>
    %54 = vector.broadcast %53 : vector<1x768xf32> to vector<8x768xf32>
    %55 = arith.addf %52, %54 : vector<8x768xf32>
    %cst_44 = arith.constant 0.000000e+00 : f32
    %56 = vector.broadcast %cst_44 : f32 to vector<8x768xf32>
    %57 = arith.maximumf %55, %56 : vector<8x768xf32>
    %58 = arith.truncf %57 : vector<8x768xf32> to vector<8x768xbf16>
    %c0_45 = arith.constant 0 : index
    %c0_46 = arith.constant 0 : index
    %59 = vector.load %arg16[%c0_45, %c0_46] : memref<768x384xbf16, #tpu.memory_space<vmem>>, vector<768x384xbf16>
    %cst_47 = arith.constant dense<0.000000e+00> : vector<8x384xf32>
    %60 = tpu.matmul %58, %59, %cst_47 {dimension_numbers = #tpu.dot_dimension_numbers<[1], [0], [0], [1], [0, 0, 1, 1], [], []>} : vector<8x768xbf16>, vector<768x384xbf16>, vector<8x384xf32> -> vector<8x384xf32>
    %c0_48 = arith.constant 0 : index
    %c0_49 = arith.constant 0 : index
    %61 = vector.load %arg17[%c0_48, %c0_49] : memref<1x384xf32, #tpu.memory_space<vmem>>, vector<1x384xf32>
    %62 = vector.broadcast %61 : vector<1x384xf32> to vector<8x384xf32>
    %63 = arith.addf %60, %62 : vector<8x384xf32>
    %cst_50 = arith.constant 0.000000e+00 : f32
    %64 = vector.broadcast %cst_50 : f32 to vector<8x384xf32>
    %65 = arith.maximumf %63, %64 : vector<8x384xf32>
    %66 = arith.truncf %65 : vector<8x384xf32> to vector<8x384xbf16>
    %c0_51 = arith.constant 0 : index
    %c0_52 = arith.constant 0 : index
    %67 = vector.load %arg18[%c0_51, %c0_52] : memref<384x128xbf16, #tpu.memory_space<vmem>>, vector<384x128xbf16>
    %cst_53 = arith.constant dense<0.000000e+00> : vector<8x128xf32>
    %68 = tpu.matmul %66, %67, %cst_53 {dimension_numbers = #tpu.dot_dimension_numbers<[1], [0], [0], [1], [0, 0, 1, 1], [], []>} : vector<8x384xbf16>, vector<384x128xbf16>, vector<8x128xf32> -> vector<8x128xf32>
    %c0_54 = arith.constant 0 : index
    %c0_55 = arith.constant 0 : index
    %69 = vector.load %arg19[%c0_54, %c0_55] : memref<1x128xf32, #tpu.memory_space<vmem>>, vector<1x128xf32>
    %70 = vector.broadcast %69 : vector<1x128xf32> to vector<8x128xf32>
    %71 = arith.addf %68, %70 : vector<8x128xf32>
    %cst_56 = arith.constant 0.000000e+00 : f32
    %72 = vector.broadcast %cst_56 : f32 to vector<8x128xf32>
    %73 = arith.maximumf %71, %72 : vector<8x128xf32>
    %c0_57 = arith.constant 0 : index
    %c0_58 = arith.constant 0 : index
    %74 = vector.load %arg20[%c0_57, %c0_58] : memref<128x128xf32, #tpu.memory_space<vmem>>, vector<128x128xf32>
    %cst_59 = arith.constant dense<0.000000e+00> : vector<8x128xf32>
    %75 = tpu.matmul %73, %74, %cst_59 {dimension_numbers = #tpu.dot_dimension_numbers<[1], [0], [0], [1], [0, 0, 1, 1], [], []>} : vector<8x128xf32>, vector<128x128xf32>, vector<8x128xf32> -> vector<8x128xf32>
    %c0_60 = arith.constant 0 : index
    %c0_61 = arith.constant 0 : index
    %76 = vector.load %arg21[%c0_60, %c0_61] : memref<1x128xf32, #tpu.memory_space<vmem>>, vector<1x128xf32>
    %77 = vector.broadcast %76 : vector<1x128xf32> to vector<8x128xf32>
    %78 = arith.addf %75, %77 : vector<8x128xf32>
    %79 = tpu.iota {dimensions = array<i32: 1>} : vector<8x128xi32>
    %c0_i32 = arith.constant 0 : i32
    %80 = vector.broadcast %c0_i32 : i32 to vector<8x128xi32>
    %81 = arith.cmpi eq, %79, %80 : vector<8x128xi32>
    %82 = arith.negf %78 : vector<8x128xf32>
    %83 = math.exp %82 : vector<8x128xf32>
    %cst_62 = arith.constant 1.000000e+00 : f32
    %84 = vector.broadcast %cst_62 : f32 to vector<8x128xf32>
    %85 = arith.addf %84, %83 : vector<8x128xf32>
    %86 = arith.divf %84, %85 : vector<8x128xf32>
    %87 = arith.select %81, %86, %78 : vector<8x128xi1>, vector<8x128xf32>
    %c0_63 = arith.constant 0 : index
    %c0_64 = arith.constant 0 : index
    %88 = vector.load %arg22[%c0_63, %c0_64] : memref<8x128xf32, #tpu.memory_space<vmem>>, vector<8x128xf32>
    tpu.vector_store %arg22[%c0_63, %c0_64], %87 {strides = array<i32>} : memref<8x128xf32, #tpu.memory_space<vmem>>, vector<8x128xf32>,
    return
  }
}

</mosaic_0001>

<llo_original>
// kernel: grasp_head_forward.1
$region0: #{grasp_head_forward.1}
  #allocation0 [shape = 'u32[]', space=smem, size = 0x4, offset = 0x4, fixed_abs, tag = 'smem constant byte address 0x4 - core index']
  #allocation1 [shape = 'u32[144,128]{1,0:T(1,128)}', space=vmem, size = 0x12000, scoped, tag = 'internal scratch']
  %s0 = inlined_call_operand.vmem [shape: bf16[8,256], index: 0, kind: input, shape index: {}]
  %s1 = inlined_call_operand.vmem [shape: f32[8,8], index: 1, kind: input, shape index: {}]
  %s2 = inlined_call_operand.vmem [shape: bf16[256,128], index: 2, kind: input, shape index: {}]
  %s3 = inlined_call_operand.vmem [shape: f32[1,128], index: 3, kind: input, shape index: {}]
  %s4 = inlined_call_operand.vmem [shape: bf16[128,64], index: 4, kind: input, shape index: {}]
  %s5 = inlined_call_operand.hbm [shape: f32[1,64], index: 5, kind: input, shape index: {}]
  %s6 = inlined_call_operand.vmem [shape: bf16[64,32], index: 6, kind: input, shape index: {}]
  %s7 = inlined_call_operand.hbm [shape: f32[1,32], index: 7, kind: input, shape index: {}]
  %s8 = inlined_call_operand.vmem [shape: bf16[32,16], index: 8, kind: input, shape index: {}]
  %s9 = inlined_call_operand.hbm [shape: f32[1,16], index: 9, kind: input, shape index: {}]
  %s10 = inlined_call_operand.vmem [shape: bf16[16,32], index: 10, kind: input, shape index: {}]
  %s11 = inlined_call_operand.hbm [shape: f32[1,32], index: 11, kind: input, shape index: {}]
  %s12 = inlined_call_operand.vmem [shape: bf16[32,384], index: 12, kind: input, shape index: {}]
  %s13 = inlined_call_operand.vmem [shape: f32[1,384], index: 13, kind: input, shape index: {}]
  %s14 = inlined_call_operand.vmem [shape: bf16[384,768], index: 14, kind: input, shape index: {}]
  %s15 = inlined_call_operand.vmem [shape: f32[1,768], index: 15, kind: input, shape index: {}]
  %s16 = inlined_call_operand.vmem [shape: bf16[768,384], index: 16, kind: input, shape index: {}]
  %s17 = inlined_call_operand.vmem [shape: f32[1,384], index: 17, kind: input, shape index: {}]
  %s18 = inlined_call_operand.vmem [shape: bf16[384,128], index: 18, kind: input, shape index: {}]
  %s19 = inlined_call_operand.vmem [shape: f32[1,128], index: 19, kind: input, shape index: {}]
  %s20 = inlined_call_operand.hbm [shape: f32[128,128], index: 20, kind: input, shape index: {}]
  %s21 = inlined_call_operand.vmem [shape: f32[1,128], index: 21, kind: input, shape index: {}]
  %s22 = inlined_call_operand.vmem [shape: f32[8,128], index: 22, kind: output, shape index: {}]
  %s23 = sld [smem:[#allocation0]]
  $region118: #{grasp_head_forward.1} parent=0
    _
  %s25 = ssub.s32 1, %s23
  %s26 = scalar_select 0, %s25, %s23
  $region1: #{grasp_head_forward.1} parent=0
    #allocation2 [shape = 'u8[512]{0}', space=vmem, size = 0x400, scoped, tag = 'input window, operand 5, single buffered']
    #allocation3 [shape = 's32[1]{0}', space=sflag, size = 0x4, scoped, tag = 'scoped memory for grasp_head_forward.1']
    #allocation4 [shape = 'u8[512]{0}', space=vmem, size = 0x400, scoped, tag = 'input window, operand 7, single buffered']
    #allocation5 [shape = 's32[1]{0}', space=sflag, size = 0x4, scoped, tag = 'scoped memory for grasp_head_forward.1']
    #allocation6 [shape = 'u8[512]{0}', space=vmem, size = 0x400, scoped, tag = 'input window, operand 9, single buffered']
    #allocation7 [shape = 'u8[512]{0}', space=vmem, size = 0x400, scoped, tag = 'input window, operand 11, single buffered']
    #allocation8 [shape = 's32[1]{0}', space=sflag, size = 0x4, scoped, tag = 'scoped memory for grasp_head_forward.1']
    #allocation9 [shape = 'u8[65536]{0}', space=vmem, size = 0x10000, scoped, tag = 'input window, operand 20, single buffered']
    %27 = vsyncpa [#allocation3], 0
    %28 = vsyncpa [#allocation5], 0
    %29 = vsyncpa [#allocation8], 0
    // Predicated region
    $region2: #{grasp_head_forward.1} parent=1 // pred_check
      _
    $region3: #{grasp_head_forward.1} parent=1 // pred_check_branch
      %31 = sbr.rel (0) target = $region5
    $region4: #{grasp_head_forward.1} parent=1 // pred_region
      _
    $region5: #{grasp_head_forward.1} parent=1 // pred_fallthru
      _
    // Predicated region
    $region6: #{grasp_head_forward.1} parent=1 // pred_check
      _
    $region7: #{grasp_head_forward.1} parent=1 // pred_check_branch
      %33 = sbr.rel (0) target = $region9
    $region8: #{grasp_head_forward.1} parent=1 // pred_region
      _
    $region9: #{grasp_head_forward.1} parent=1 // pred_fallthru
      _
    // Predicated region
    $region10: #{grasp_head_forward.1} parent=1 // pred_check
      _
    $region11: #{grasp_head_forward.1} parent=1 // pred_check_branch
      %35 = sbr.rel (0) target = $region13
    $region12: #{grasp_head_forward.1} parent=1 // pred_region
      _
    $region13: #{grasp_head_forward.1} parent=1 // pred_fallthru
      _
    // Predicated region
    $region14: #{grasp_head_forward.1} parent=1 // pred_check
      _
    $region15: #{grasp_head_forward.1} parent=1 // pred_check_branch
      %37 = sbr.rel (0) target = $region17
    $region16: #{grasp_head_forward.1} parent=1 // pred_region
      _
    $region17: #{grasp_head_forward.1} parent=1 // pred_fallthru
      _
    // Predicated region
    $region18: #{grasp_head_forward.1} parent=1 // pred_check
      _
    $region19: #{grasp_head_forward.1} parent=1 // pred_check_branch
      %39 = sbr.rel (0) target = $region21
    $region20: #{grasp_head_forward.1} parent=1 // pred_region
      _
    $region21: #{grasp_head_forward.1} parent=1 // pred_fallthru
      _
    // Predicated region
    $region22: #{grasp_head_forward.1} parent=1 // pred_check
      _
    $region23: #{grasp_head_forward.1} parent=1 // pred_check_branch
      %41 = sbr.rel (0) target = $region25
    $region24: #{grasp_head_forward.1} parent=1 // pred_region
      %s43 = ssub.s32 16, 16
      %44 = vsyncadd [#allocation3], %s43
      %s46 = sshll.u32 [#allocation2], 4
      %s47 = int_to_ptr.vmem [resolvable:$true] %s46
      %49 = dma.hbm_to_vmem [thread:$0]  %s5, 16, %s47, [#allocation3]
    $region25: #{grasp_head_forward.1} parent=1 // pred_fallthru
      _
    // Predicated region
    $region26: #{grasp_head_forward.1} parent=1 // pred_check
      _
    $region27: #{grasp_head_forward.1} parent=1 // pred_check_branch
      %51 = sbr.rel (0) target = $region29
    $region28: #{grasp_head_forward.1} parent=1 // pred_region
      _
    $region29: #{grasp_head_forward.1} parent=1 // pred_fallthru
      _
    // Predicated region
    $region30: #{grasp_head_forward.1} parent=1 // pred_check
      _
    $region31: #{grasp_head_forward.1} parent=1 // pred_check_branch
      %53 = sbr.rel (0) target = $region33
    $region32: #{grasp_head_forward.1} parent=1 // pred_region
      %s55 = ssub.s32 16, 16
      %56 = vsyncadd [#allocation5], %s55
      %s58 = sshll.u32 [#allocation4], 4
      %s59 = int_to_ptr.vmem [resolvable:$true] %s58
      %61 = dma.hbm_to_vmem [thread:$0]  %s7, 16, %s59, [#allocation5]
    $region33: #{grasp_head_forward.1} parent=1 // pred_fallthru
      _
    // Predicated region
    $region34: #{grasp_head_forward.1} parent=1 // pred_check
      _
    $region35: #{grasp_head_forward.1} parent=1 // pred_check_branch
      %63 = sbr.rel (0) target = $region37
    $region36: #{grasp_head_forward.1} parent=1 // pred_region
      _
    $region37: #{grasp_head_forward.1} parent=1 // pred_fallthru
      _
    // Predicated region
    $region38: #{grasp_head_forward.1} parent=1 // pred_check
      _
    $region39: #{grasp_head_forward.1} parent=1 // pred_check_branch
      %65 = sbr.rel (0) target = $region41
    $region40: #{grasp_head_forward.1} parent=1 // pred_region
      %s67 = ssub.s32 16, 16
      %68 = vsyncadd [#allocation5], %s67
      %s70 = sshll.u32 [#allocation6], 4
      %s71 = int_to_ptr.vmem [resolvable:$true] %s70
      %73 = dma.hbm_to_vmem [thread:$0]  %s9, 16, %s71, [#allocation5]
    $region41: #{grasp_head_forward.1} parent=1 // pred_fallthru
      _
    // Predicated region
    $region42: #{grasp_head_forward.1} parent=1 // pred_check
      _
    $region43: #{grasp_head_forward.1} parent=1 // pred_check_branch
      %75 = sbr.rel (0) target = $region45
    $region44: #{grasp_head_forward.1} parent=1 // pred_region
      _
    $region45: #{grasp_head_forward.1} parent=1 // pred_fallthru
      _
    // Predicated region
    $region46: #{grasp_head_forward.1} parent=1 // pred_check
      _
    $region47: #{grasp_head_forward.1} parent=1 // pred_check_branch
      %77 = sbr.rel (0) target = $region49
    $region48: #{grasp_head_forward.1} parent=1 // pred_region
      %s79 = ssub.s32 16, 16
      %80 = vsyncadd [#allocation8], %s79
      %s82 = sshll.u32 [#allocation7], 4
      %s83 = int_to_ptr.vmem [resolvable:$true] %s82
      %85 = dma.hbm_to_vmem [thread:$0]  %s11, 16, %s83, [#allocation8]
    $region49: #{grasp_head_forward.1} parent=1 // pred_fallthru
      _
    // Predicated region
    $region50: #{grasp_head_forward.1} parent=1 // pred_check
      _
    $region51: #{grasp_head_forward.1} parent=1 // pred_check_branch
      %87 = sbr.rel (0) target = $region53
    $region52: #{grasp_head_forward.1} parent=1 // pred_region
      _
    $region53: #{grasp_head_forward.1} parent=1 // pred_fallthru
      _
    // Predicated region
    $region54: #{grasp_head_forward.1} parent=1 // pred_check
      _
    $region55: #{grasp_head_forward.1} parent=1 // pred_check_branch
      %89 = sbr.rel (0) target = $region57
    $region56: #{grasp_head_forward.1} parent=1 // pred_region
      _
    $region57: #{grasp_head_forward.1} parent=1 // pred_fallthru
      _
    // Predicated region
    $region58: #{grasp_head_forward.1} parent=1 // pred_check
      _
    $region59: #{grasp_head_forward.1} parent=1 // pred_check_branch
      %91 = sbr.rel (0) target = $region61
    $region60: #{grasp_head_forward.1} parent=1 // pred_region
      _
    $region61: #{grasp_head_forward.1} parent=1 // pred_fallthru
      _
    // Predicated region
    $region62: #{grasp_head_forward.1} parent=1 // pred_check
      _
    $region63: #{grasp_head_forward.1} parent=1 // pred_check_branch
      %93 = sbr.rel (0) target = $region65
    $region64: #{grasp_head_forward.1} parent=1 // pred_region
      _
    $region65: #{grasp_head_forward.1} parent=1 // pred_fallthru
      _
    // Predicated region
    $region66: #{grasp_head_forward.1} parent=1 // pred_check
      _
    $region67: #{grasp_head_forward.1} parent=1 // pred_check_branch
      %95 = sbr.rel (0) target = $region69
    $region68: #{grasp_head_forward.1} parent=1 // pred_region
      _
    $region69: #{grasp_head_forward.1} parent=1 // pred_fallthru
      _
    // Predicated region
    $region70: #{grasp_head_forward.1} parent=1 // pred_check
      _
    $region71: #{grasp_head_forward.1} parent=1 // pred_check_branch
      %97 = sbr.rel (0) target = $region73
    $region72: #{grasp_head_forward.1} parent=1 // pred_region
      _
    $region73: #{grasp_head_forward.1} parent=1 // pred_fallthru
      _
    // Predicated region
    $region74: #{grasp_head_forward.1} parent=1 // pred_check
      _
    $region75: #{grasp_head_forward.1} parent=1 // pred_check_branch
      %99 = sbr.rel (0) target = $region77
    $region76: #{grasp_head_forward.1} parent=1 // pred_region
      _
    $region77: #{grasp_head_forward.1} parent=1 // pred_fallthru
      _
    // Predicated region
    $region78: #{grasp_head_forward.1} parent=1 // pred_check
      _
    $region79: #{grasp_head_forward.1} parent=1 // pred_check_branch
      %101 = sbr.rel (0) target = $region81
    $region80: #{grasp_head_forward.1} parent=1 // pred_region
      _
    $region81: #{grasp_head_forward.1} parent=1 // pred_fallthru
      _
    // Predicated region
    $region82: #{grasp_head_forward.1} parent=1 // pred_check
      _
    $region83: #{grasp_head_forward.1} parent=1 // pred_check_branch
      %103 = sbr.rel (0) target = $region85
    $region84: #{grasp_head_forward.1} parent=1 // pred_region
      %s105 = ssub.s32 2048, 2048
      %106 = vsyncadd [#allocation8], %s105
      %s107 = sshll.u32 [#allocation9], 4
      %s108 = int_to_ptr.vmem [resolvable:$true] %s107
      %113 = dma.hbm_to_vmem [thread:$0]  %s20, 2048, %s108, [#allocation8], 128, 128, 8
    $region85: #{grasp_head_forward.1} parent=1 // pred_fallthru
      _
    // Predicated region
    $region86: #{grasp_head_forward.1} parent=1 // pred_check
      _
    $region87: #{grasp_head_forward.1} parent=1 // pred_check_branch
      %115 = sbr.rel (0) target = $region89
    $region88: #{grasp_head_forward.1} parent=1 // pred_region
      _
    $region89: #{grasp_head_forward.1} parent=1 // pred_fallthru
      _
    // Predicated region
    $region90: #{grasp_head_forward.1} parent=1 // pred_check
      _
    $region91: #{grasp_head_forward.1} parent=1 // pred_check_branch
      %117 = sbr.rel (0) target = $region93
    $region92: #{grasp_head_forward.1} parent=1 // pred_region
      %118 = dma.done [#allocation3], 16
    $region93: #{grasp_head_forward.1} parent=1 // pred_fallthru
      _
    // Predicated region
    $region94: #{grasp_head_forward.1} parent=1 // pred_check
      _
    $region95: #{grasp_head_forward.1} parent=1 // pred_check_branch
      %120 = sbr.rel (0) target = $region97
    $region96: #{grasp_head_forward.1} parent=1 // pred_region
      %121 = dma.done [#allocation5], 16
    $region97: #{grasp_head_forward.1} parent=1 // pred_fallthru
      _
    // Predicated region
    $region98: #{grasp_head_forward.1} parent=1 // pred_check
      _
    $region99: #{grasp_head_forward.1} parent=1 // pred_check_branch
      %123 = sbr.rel (0) target = $region101
    $region100: #{grasp_head_forward.1} parent=1 // pred_region
      %124 = dma.done [#allocation5], 16
    $region101: #{grasp_head_forward.1} parent=1 // pred_fallthru
      _
    // Predicated region
    $region102: #{grasp_head_forward.1} parent=1 // pred_check
      _
    $region103: #{grasp_head_forward.1} parent=1 // pred_check_branch
      %126 = sbr.rel (0) target = $region105
    $region104: #{grasp_head_forward.1} parent=1 // pred_region
      %127 = dma.done [#allocation8], 16
    $region105: #{grasp_head_forward.1} parent=1 // pred_fallthru
      _
    // Predicated region
    $region106: #{grasp_head_forward.1} parent=1 // pred_check
      _
    $region107: #{grasp_head_forward.1} parent=1 // pred_check_branch
      %129 = sbr.rel (0) target = $region109
    $region108: #{grasp_head_forward.1} parent=1 // pred_region
      %130 = dma.done [#allocation8], 2048
    $region109: #{grasp_head_forward.1} parent=1 // pred_fallthru
      _
    %v132 = vld [vmem:[%s0] sm:$0xff]
    %v133 = vld [vmem:[%s2] sm:$0xf]
    %v134 = vld [vmem:[%s2 + $0x4] sm:$0xf]
    %v135 = vld [vmem:[%s2 + $0x8] sm:$0xf]
    %v136 = vld [vmem:[%s2 + $0xc] sm:$0xf]
    %v137 = vld [vmem:[%s2 + $0x10] sm:$0xf]
    %v138 = vld [vmem:[%s2 + $0x14] sm:$0xf]
    %v139 = vld [vmem:[%s2 + $0x18] sm:$0xf]
    %v140 = vld [vmem:[%s2 + $0x1c] sm:$0xf]
    %v141 = vld [vmem:[%s2 + $0x20] sm:$0xf]
    %v142 = vld [vmem:[%s2 + $0x24] sm:$0xf]
    %v143 = vld [vmem:[%s2 + $0x28] sm:$0xf]
    %v144 = vld [vmem:[%s2 + $0x2c] sm:$0xf]
    %v145 = vld [vmem:[%s2 + $0x30] sm:$0xf]
    %v146 = vld [vmem:[%s2 + $0x34] sm:$0xf]
    %v147 = vld [vmem:[%s2 + $0x38] sm:$0xf]
    %v148 = vld [vmem:[%s2 + $0x3c] sm:$0xf]
    %v149 = vld [vmem:[%s2 + $0x40] sm:$0xf]
    %v150 = vld [vmem:[%s2 + $0x44] sm:$0xf]
    %v151 = vld [vmem:[%s2 + $0x48] sm:$0xf]
    %v152 = vld [vmem:[%s2 + $0x4c] sm:$0xf]
    %v153 = vld [vmem:[%s2 + $0x50] sm:$0xf]
    %v154 = vld [vmem:[%s2 + $0x54] sm:$0xf]
    %v155 = vld [vmem:[%s2 + $0x58] sm:$0xf]
    %v156 = vld [vmem:[%s2 + $0x5c] sm:$0xf]
    %v157 = vld [vmem:[%s2 + $0x60] sm:$0xf]
    %v158 = vld [vmem:[%s2 + $0x64] sm:$0xf]
    %v159 = vld [vmem:[%s2 + $0x68] sm:$0xf]
    %v160 = vld [vmem:[%s2 + $0x6c] sm:$0xf]
    %v161 = vld [vmem:[%s2 + $0x70] sm:$0xf]
    %v162 = vld [vmem:[%s2 + $0x74] sm:$0xf]
    %v163 = vld [vmem:[%s2 + $0x78] sm:$0xf]
    %v164 = vld [vmem:[%s2 + $0x7c] sm:$0xf]
    %v165 = vld [vmem:[%s3] sm:$0x1]
    %v167 = vlaneseq
    %v168 = vshrl.u32 %v167, 7
    %v169 = vsub.s32 0, %v168
    %v170 = vrot.slane %v165, %v169
    %v173 = vunpack.c.l.b16 %v132
    %v174 = vunpack.c.h.b16 %v132
    %v175 = vpack.c.b16 %v173, %v173
    %v176 = vpack.c.b16 %v174, %v174
    %v211 = vunpack.c.l.b16 %v133
    %v212 = vunpack.c.l.b16 %v134
    %v213 = vunpack.c.l.b16 %v135
    %v214 = vunpack.c.l.b16 %v136
    %v215 = vunpack.c.l.b16 %v137
    %v216 = vunpack.c.l.b16 %v138
    %v217 = vunpack.c.l.b16 %v139
    %v218 = vunpack.c.l.b16 %v140
    %v219 = vunpack.c.l.b16 %v141
    %v220 = vunpack.c.l.b16 %v142
    %v221 = vunpack.c.l.b16 %v143
    %v222 = vunpack.c.l.b16 %v144
    %v223 = vunpack.c.l.b16 %v145
    %v224 = vunpack.c.l.b16 %v146
    %v225 = vunpack.c.l.b16 %v147
    %v226 = vunpack.c.l.b16 %v148
    %v227 = vunpack.c.l.b16 %v149
    %v228 = vunpack.c.l.b16 %v150
    %v229 = vunpack.c.l.b16 %v151
    %v230 = vunpack.c.l.b16 %v152
    %v231 = vunpack.c.l.b16 %v153
    %v232 = vunpack.c.l.b16 %v154
    %v233 = vunpack.c.l.b16 %v155
    %v234 = vunpack.c.l.b16 %v156
    %v235 = vunpack.c.l.b16 %v157
    %v236 = vunpack.c.l.b16 %v158
    %v237 = vunpack.c.l.b16 %v159
    %v238 = vunpack.c.l.b16 %v160
    %v239 = vunpack.c.l.b16 %v161
    %v240 = vunpack.c.l.b16 %v162
    %v241 = vunpack.c.l.b16 %v163
    %v242 = vunpack.c.l.b16 %v164
    %v243 = vpack.c.b16 %v212, %v211
    %v244 = vpack.c.b16 %v214, %v213
    %v245 = vpack.c.b16 %v216, %v215
    %v246 = vpack.c.b16 %v218, %v217
    %v247 = vpack.c.b16 %v220, %v219
    %v248 = vpack.c.b16 %v222, %v221
    %v249 = vpack.c.b16 %v224, %v223
    %v250 = vpack.c.b16 %v226, %v225
    %v251 = vpack.c.b16 %v228, %v227
    %v252 = vpack.c.b16 %v230, %v229
    %v253 = vpack.c.b16 %v232, %v231
    %v254 = vpack.c.b16 %v234, %v233
    %v255 = vpack.c.b16 %v236, %v235
    %v256 = vpack.c.b16 %v238, %v237
    %v257 = vpack.c.b16 %v240, %v239
    %v258 = vpack.c.b16 %v242, %v241
    %275 = vmatprep.subr.bf16.mxu0 0
    %276 = vmatpush1.bf16.msra.mxu0 %v243
    %277 = vmatprep.subr.bf16.mxu0 0
    %278 = vmatpush1.bf16.msra.mxu0 %v244
    %279 = vmatprep.subr.bf16.mxu0 0
    %280 = vmatpush1.bf16.msra.mxu0 %v245
    %281 = vmatprep.subr.bf16.mxu0 0
    %282 = vmatpush1.bf16.msra.mxu0 %v246
    %283 = vmatprep.subr.bf16.mxu0 0
    %284 = vmatpush1.bf16.msra.mxu0 %v247
    %285 = vmatprep.subr.bf16.mxu0 0
    %286 = vmatpush1.bf16.msra.mxu0 %v248
    %287 = vmatprep.subr.bf16.mxu0 0
    %288 = vmatpush1.bf16.msra.mxu0 %v249
    %289 = vmatprep.subr.bf16.mxu0 0
    %290 = vmatpush1.bf16.msra.mxu0 %v250
    %291 = vmatprep.subr.bf16.mxu0 0
    %292 = vmatpush1.bf16.msra.mxu0 %v251
    %293 = vmatprep.subr.bf16.mxu0 0
    %294 = vmatpush1.bf16.msra.mxu0 %v252
    %295 = vmatprep.subr.bf16.mxu0 0
    %296 = vmatpush1.bf16.msra.mxu0 %v253
    %297 = vmatprep.subr.bf16.mxu0 0
    %298 = vmatpush1.bf16.msra.mxu0 %v254
    %299 = vmatprep.subr.bf16.mxu0 0
    %300 = vmatpush1.bf16.msra.mxu0 %v255
    %301 = vmatprep.subr.bf16.mxu0 0
    %302 = vmatpush1.bf16.msra.mxu0 %v256
    %303 = vmatprep.subr.bf16.mxu0 0
    %304 = vmatpush1.bf16.msra.mxu0 %v257
    %305 = vmatprep.subr.bf16.mxu0 0
    %306 = vmatpush1.bf16.msra.mxu0 %v258
    %307 = vmatprep.mubr.bf16.mxu0 %v176
    %308 = vmatmul.mubr.bf16.gmra.mrb[0].mxu0 %v175
    %v309 = vpop.f32.mrb[0].mxu0
    %v310 = vadd.f32 %v170, %v309
    %v311 = vpop.f32.mrb[0].mxu0
    %v312 = vpop.f32.mrb[0].mxu0
    %v313 = vpop.f32.mrb[0].mxu0
    %314 = vdwg.mxu0
    %v315 = vmax.f32 %v310, 0.0
    %v316 = vpack.c.bf16 %v315, %v315
    %v317 = vld [vmem:[%s4] sm:$0xf]
    %v318 = vld [vmem:[%s4 + $0x4] sm:$0xf]
    %v319 = vld [vmem:[%s4 + $0x8] sm:$0xf]
    %v320 = vld [vmem:[%s4 + $0xc] sm:$0xf]
    %v321 = vld [vmem:[%s4 + $0x10] sm:$0xf]
    %v322 = vld [vmem:[%s4 + $0x14] sm:$0xf]
    %v323 = vld [vmem:[%s4 + $0x18] sm:$0xf]
    %v324 = vld [vmem:[%s4 + $0x1c] sm:$0xf]
    %v325 = vld [vmem:[%s4 + $0x20] sm:$0xf]
    %v326 = vld [vmem:[%s4 + $0x24] sm:$0xf]
    %v327 = vld [vmem:[%s4 + $0x28] sm:$0xf]
    %v328 = vld [vmem:[%s4 + $0x2c] sm:$0xf]
    %v329 = vld [vmem:[%s4 + $0x30] sm:$0xf]
    %v330 = vld [vmem:[%s4 + $0x34] sm:$0xf]
    %v331 = vld [vmem:[%s4 + $0x38] sm:$0xf]
    %v332 = vld [vmem:[%s4 + $0x3c] sm:$0xf]
    %v333 = vld [vmem:[#allocation2] sm:$0x1]
    %v335 = vlaneseq
    %v336 = vshrl.u32 %v335, 7
    %v337 = vsub.s32 0, %v336
    %v338 = vrot.slane %v333, %v337
    %v356 = vunpack.c.l.b16 %v317
    %v357 = vunpack.c.l.b16 %v318
    %v358 = vunpack.c.l.b16 %v319
    %v359 = vunpack.c.l.b16 %v320
    %v360 = vunpack.c.l.b16 %v321
    %v361 = vunpack.c.l.b16 %v322
    %v362 = vunpack.c.l.b16 %v323
    %v363 = vunpack.c.l.b16 %v324
    %v364 = vunpack.c.l.b16 %v325
    %v365 = vunpack.c.l.b16 %v326
    %v366 = vunpack.c.l.b16 %v327
    %v367 = vunpack.c.l.b16 %v328
    %v368 = vunpack.c.l.b16 %v329
    %v369 = vunpack.c.l.b16 %v330
    %v370 = vunpack.c.l.b16 %v331
    %v371 = vunpack.c.l.b16 %v332
    %v372 = vpack.c.b16 %v357, %v356
    %v373 = vpack.c.b16 %v359, %v358
    %v374 = vpack.c.b16 %v361, %v360
    %v375 = vpack.c.b16 %v363, %v362
    %v376 = vpack.c.b16 %v365, %v364
    %v377 = vpack.c.b16 %v367, %v366
    %v378 = vpack.c.b16 %v369, %v368
    %v379 = vpack.c.b16 %v371, %v370
    %388 = vmatprep.subr.bf16.mxu0 0
    %389 = vmatpush1.bf16.msra.mxu0 %v372
    %390 = vmatprep.subr.bf16.mxu0 0
    %391 = vmatpush1.bf16.msra.mxu0 %v373
    %392 = vmatprep.subr.bf16.mxu0 0
    %393 = vmatpush1.bf16.msra.mxu0 %v374
    %394 = vmatprep.subr.bf16.mxu0 0
    %395 = vmatpush1.bf16.msra.mxu0 %v375
    %396 = vmatprep.subr.bf16.mxu0 0
    %397 = vmatpush1.bf16.msra.mxu0 %v376
    %398 = vmatprep.subr.bf16.mxu0 0
    %399 = vmatpush1.bf16.msra.mxu0 %v377
    %400 = vmatprep.subr.bf16.mxu0 0
    %401 = vmatpush1.bf16.msra.mxu0 %v378
    %402 = vmatprep.subr.bf16.mxu0 0
    %403 = vmatpush1.bf16.msra.mxu0 %v379
    %404 = vmatprep.subr.bf16.mxu0 0
    %405 = vmatpush1.bf16.msra.mxu0 0
    %406 = vmatprep.subr.bf16.mxu0 0
    %407 = vmatpush1.bf16.msra.mxu0 0
    %408 = vmatprep.subr.bf16.mxu0 0
    %409 = vmatpush1.bf16.msra.mxu0 0
    %410 = vmatprep.subr.bf16.mxu0 0
    %411 = vmatpush1.bf16.msra.mxu0 0
    %412 = vmatprep.subr.bf16.mxu0 0
    %413 = vmatpush1.bf16.msra.mxu0 0
    %414 = vmatprep.subr.bf16.mxu0 0
    %415 = vmatpush1.bf16.msra.mxu0 0
    %416 = vmatprep.subr.bf16.mxu0 0
    %417 = vmatpush1.bf16.msra.mxu0 0
    %418 = vmatprep.subr.bf16.mxu0 0
    %419 = vmatpush1.bf16.msra.mxu0 0
    %420 = vmatprep.mubr.bf16.mxu0 0
    %421 = vmatmul.mubr.bf16.gmra.mrb[0].mxu0 %v316
    %v422 = vpop.f32.mrb[0].mxu0
    %v423 = vadd.f32 %v338, %v422
    %v424 = vpop.f32.mrb[0].mxu0
    %v425 = vpop.f32.mrb[0].mxu0
    %v426 = vpop.f32.mrb[0].mxu0
    %427 = vdwg.mxu0
    %v428 = vmax.f32 %v423, 0.0
    %v429 = vpack.c.bf16 %v428, %v428
    %v430 = vld [vmem:[%s6] sm:$0xf]
    %v431 = vld [vmem:[%s6 + $0x4] sm:$0xf]
    %v432 = vld [vmem:[%s6 + $0x8] sm:$0xf]
    %v433 = vld [vmem:[%s6 + $0xc] sm:$0xf]
    %v434 = vld [vmem:[%s6 + $0x10] sm:$0xf]
    %v435 = vld [vmem:[%s6 + $0x14] sm:$0xf]
    %v436 = vld [vmem:[%s6 + $0x18] sm:$0xf]
    %v437 = vld [vmem:[%s6 + $0x1c] sm:$0xf]
    %v438 = vld [vmem:[#allocation4] sm:$0x1]
    %v440 = vlaneseq
    %v441 = vshrl.u32 %v440, 7
    %v442 = vsub.s32 0, %v441
    %v443 = vrot.slane %v438, %v442
    %v453 = vunpack.c.l.b16 %v430
    %v454 = vunpack.c.l.b16 %v431
    %v455 = vunpack.c.l.b16 %v432
    %v456 = vunpack.c.l.b16 %v433
    %v457 = vunpack.c.l.b16 %v434
    %v458 = vunpack.c.l.b16 %v435
    %v459 = vunpack.c.l.b16 %v436
    %v460 = vunpack.c.l.b16 %v437
    %v461 = vpack.c.b16 %v454, %v453
    %v462 = vpack.c.b16 %v456, %v455
    %v463 = vpack.c.b16 %v458, %v457
    %v464 = vpack.c.b16 %v460, %v459
    %vm469 = vcmask 523264
    %v471 = vsel %vm469, %v429, 0
    %473 = vmatprep.subr.bf16.mxu0 0
    %474 = vmatpush1.bf16.msra.mxu0 %v461
    %475 = vmatprep.subr.bf16.mxu0 0
    %476 = vmatpush1.bf16.msra.mxu0 %v462
    %477 = vmatprep.subr.bf16.mxu0 0
    %478 = vmatpush1.bf16.msra.mxu0 %v463
    %479 = vmatprep.subr.bf16.mxu0 0
    %480 = vmatpush1.bf16.msra.mxu0 %v464
    %481 = vmatprep.subr.bf16.mxu0 0
    %482 = vmatpush1.bf16.msra.mxu0 0
    %483 = vmatprep.subr.bf16.mxu0 0
    %484 = vmatpush1.bf16.msra.mxu0 0
    %485 = vmatprep.subr.bf16.mxu0 0
    %486 = vmatpush1.bf16.msra.mxu0 0
    %487 = vmatprep.subr.bf16.mxu0 0
    %488 = vmatpush1.bf16.msra.mxu0 0
    %489 = vmatprep.subr.bf16.mxu0 0
    %490 = vmatpush1.bf16.msra.mxu0 0
    %491 = vmatprep.subr.bf16.mxu0 0
    %492 = vmatpush1.bf16.msra.mxu0 0
    %493 = vmatprep.subr.bf16.mxu0 0
    %494 = vmatpush1.bf16.msra.mxu0 0
    %495 = vmatprep.subr.bf16.mxu0 0
    %496 = vmatpush1.bf16.msra.mxu0 0
    %497 = vmatprep.subr.bf16.mxu0 0
    %498 = vmatpush1.bf16.msra.mxu0 0
    %499 = vmatprep.subr.bf16.mxu0 0
    %500 = vmatpush1.bf16.msra.mxu0 0
    %501 = vmatprep.subr.bf16.mxu0 0
    %502 = vmatpush1.bf16.msra.mxu0 0
    %503 = vmatprep.subr.bf16.mxu0 0
    %504 = vmatpush1.bf16.msra.mxu0 0
    %505 = vmatprep.mubr.bf16.mxu0 0
    %506 = vmatmul.mubr.bf16.gmra.mrb[0].mxu0 %v471
    %v507 = vpop.f32.mrb[0].mxu0
    %v508 = vadd.f32 %v443, %v507
    %v509 = vpop.f32.mrb[0].mxu0
    %v510 = vpop.f32.mrb[0].mxu0
    %v511 = vpop.f32.mrb[0].mxu0
    %512 = vdwg.mxu0
    %v513 = vmax.f32 %v508, 0.0
    %v514 = vpack.c.bf16 %v513, %v513
    %v515 = vld [vmem:[%s8] sm:$0xf]
    %v516 = vld [vmem:[%s8 + $0x4] sm:$0xf]
    %v517 = vld [vmem:[%s8 + $0x8] sm:$0xf]
    %v518 = vld [vmem:[%s8 + $0xc] sm:$0xf]
    %v519 = vld [vmem:[#allocation6] sm:$0x1]
    %v521 = vlaneseq
    %v522 = vshrl.u32 %v521, 7
    %v523 = vsub.s32 0, %v522
    %v524 = vrot.slane %v519, %v523
    %v530 = vunpack.c.l.b16 %v515
    %v531 = vunpack.c.l.b16 %v516
    %v532 = vunpack.c.l.b16 %v517
    %v533 = vunpack.c.l.b16 %v518
    %v534 = vpack.c.b16 %v531, %v530
    %v535 = vpack.c.b16 %v533, %v532
    %vm538 = vcmask 261120
    %v540 = vsel %vm538, %v514, 0
    %542 = vmatprep.subr.bf16.mxu0 0
    %543 = vmatpush1.bf16.msra.mxu0 %v534
    %544 = vmatprep.subr.bf16.mxu0 0
    %545 = vmatpush1.bf16.msra.mxu0 %v535
    %546 = vmatprep.subr.bf16.mxu0 0
    %547 = vmatpush1.bf16.msra.mxu0 0
    %548 = vmatprep.subr.bf16.mxu0 0
    %549 = vmatpush1.bf16.msra.mxu0 0
    %550 = vmatprep.subr.bf16.mxu0 0
    %551 = vmatpush1.bf16.msra.mxu0 0
    %552 = vmatprep.subr.bf16.mxu0 0
    %553 = vmatpush1.bf16.msra.mxu0 0
    %554 = vmatprep.subr.bf16.mxu0 0
    %555 = vmatpush1.bf16.msra.mxu0 0
    %556 = vmatprep.subr.bf16.mxu0 0
    %557 = vmatpush1.bf16.msra.mxu0 0
    %558 = vmatprep.subr.bf16.mxu0 0
    %559 = vmatpush1.bf16.msra.mxu0 0
    %560 = vmatprep.subr.bf16.mxu0 0
    %561 = vmatpush1.bf16.msra.mxu0 0
    %562 = vmatprep.subr.bf16.mxu0 0
    %563 = vmatpush1.bf16.msra.mxu0 0
    %564 = vmatprep.subr.bf16.mxu0 0
    %565 = vmatpush1.bf16.msra.mxu0 0
    %566 = vmatprep.subr.bf16.mxu0 0
    %567 = vmatpush1.bf16.msra.mxu0 0
    %568 = vmatprep.subr.bf16.mxu0 0
    %569 = vmatpush1.bf16.msra.mxu0 0
    %570 = vmatprep.subr.bf16.mxu0 0
    %571 = vmatpush1.bf16.msra.mxu0 0
    %572 = vmatprep.subr.bf16.mxu0 0
    %573 = vmatpush1.bf16.msra.mxu0 0
    %574 = vmatprep.mubr.bf16.mxu0 0
    %575 = vmatmul.mubr.bf16.gmra.mrb[0].mxu0 %v540
    %v576 = vpop.f32.mrb[0].mxu0
    %v577 = vadd.f32 %v524, %v576
    %v578 = vpop.f32.mrb[0].mxu0
    %v579 = vpop.f32.mrb[0].mxu0
    %v580 = vpop.f32.mrb[0].mxu0
    %581 = vdwg.mxu0
    %v582 = vmax.f32 %v577, 0.0
    %v583 = vpack.c.bf16 %v582, %v582
    %v584 = vld [vmem:[%s10] sm:$0xf]
    %v585 = vld [vmem:[%s10 + $0x4] sm:$0xf]
    %v586 = vld [vmem:[#allocation7] sm:$0x1]
    %v588 = vlaneseq
    %v589 = vshrl.u32 %v588, 7
    %v590 = vsub.s32 0, %v589
    %v591 = vrot.slane %v586, %v590
    %v595 = vunpack.c.l.b16 %v584
    %v596 = vunpack.c.l.b16 %v585
    %v597 = vpack.c.b16 %v596, %v595
    %vm599 = vcmask 130048
    %v601 = vsel %vm599, %v583, 0
    %603 = vmatprep.subr.bf16.mxu0 0
    %604 = vmatpush1.bf16.msra.mxu0 %v597
    %605 = vmatprep.subr.bf16.mxu0 0
    %606 = vmatpush1.bf16.msra.mxu0 0
    %607 = vmatprep.subr.bf16.mxu0 0
    %608 = vmatpush1.bf16.msra.mxu0 0
    %609 = vmatprep.subr.bf16.mxu0 0
    %610 = vmatpush1.bf16.msra.mxu0 0
    %611 = vmatprep.subr.bf16.mxu0 0
    %612 = vmatpush1.bf16.msra.mxu0 0
    %613 = vmatprep.subr.bf16.mxu0 0
    %614 = vmatpush1.bf16.msra.mxu0 0
    %615 = vmatprep.subr.bf16.mxu0 0
    %616 = vmatpush1.bf16.msra.mxu0 0
    %617 = vmatprep.subr.bf16.mxu0 0
    %618 = vmatpush1.bf16.msra.mxu0 0
    %619 = vmatprep.subr.bf16.mxu0 0
    %620 = vmatpush1.bf16.msra.mxu0 0
    %621 = vmatprep.subr.bf16.mxu0 0
    %622 = vmatpush1.bf16.msra.mxu0 0
    %623 = vmatprep.subr.bf16.mxu0 0
    %624 = vmatpush1.bf16.msra.mxu0 0
    %625 = vmatprep.subr.bf16.mxu0 0
    %626 = vmatpush1.bf16.msra.mxu0 0
    %627 = vmatprep.subr.bf16.mxu0 0
    %628 = vmatpush1.bf16.msra.mxu0 0
    %629 = vmatprep.subr.bf16.mxu0 0
    %630 = vmatpush1.bf16.msra.mxu0 0
    %631 = vmatprep.subr.bf16.mxu0 0
    %632 = vmatpush1.bf16.msra.mxu0 0
    %633 = vmatprep.subr.bf16.mxu0 0
    %634 = vmatpush1.bf16.msra.mxu0 0
    %635 = vmatprep.mubr.bf16.mxu0 0
    %636 = vmatmul.mubr.bf16.gmra.mrb[0].mxu0 %v601
    %v637 = vpop.f32.mrb[0].mxu0
    %v638 = vadd.f32 %v591, %v637
    %v639 = vpop.f32.mrb[0].mxu0
    %v640 = vpop.f32.mrb[0].mxu0
    %v641 = vpop.f32.mrb[0].mxu0
    %642 = vdwg.mxu0
    %v643 = vmax.f32 %v638, 0.0
    %v644 = vld [vmem:[%s1] sm:$0xff]
    %vm645 = vcmask 64512
    %v647 = vsel %vm645, %v644, 0
    %649 = vmatprep.subr.mxu0 0.0
    %650 = vmatpush1.msra.mxu0 %v643
    %651 = vmatprep.subr.mxu0 0.0
    %652 = vmatpush1.msra.mxu0 0.0
    %653 = vmatprep.subr.mxu0 0.0
    %654 = vmatpush1.msra.mxu0 0.0
    %655 = vmatprep.subr.mxu0 0.0
    %656 = vmatpush1.msra.mxu0 0.0
    %657 = vmatprep.subr.mxu0 0.0
    %658 = vmatpush1.msra.mxu0 0.0
    %659 = vmatprep.subr.mxu0 0.0
    %660 = vmatpush1.msra.mxu0 0.0
    %661 = vmatprep.subr.mxu0 0.0
    %662 = vmatpush1.msra.mxu0 0.0
    %663 = vmatprep.subr.mxu0 0.0
    %664 = vmatpush1.msra.mxu0 0.0
    %665 = vmatprep.subr.mxu0 0.0
    %666 = vmatpush1.msra.mxu0 0.0
    %667 = vmatprep.subr.mxu0 0.0
    %668 = vmatpush1.msra.mxu0 0.0
    %669 = vmatprep.subr.mxu0 0.0
    %670 = vmatpush1.msra.mxu0 0.0
    %671 = vmatprep.subr.mxu0 0.0
    %672 = vmatpush1.msra.mxu0 0.0
    %673 = vmatprep.subr.mxu0 0.0
    %674 = vmatpush1.msra.mxu0 0.0
    %675 = vmatprep.subr.mxu0 0.0
    %676 = vmatpush1.msra.mxu0 0.0
    %677 = vmatprep.subr.mxu0 0.0
    %678 = vmatpush1.msra.mxu0 0.0
    %679 = vmatprep.subr.mxu0 0.0
    %680 = vmatpush1.msra.mxu0 0.0
    %681 = vmatprep.subr.mxu0 0.0
    %682 = vmatpush1.msra.mxu0 0.0
    %683 = vmatprep.subr.mxu0 0.0
    %684 = vmatpush1.msra.mxu0 0.0
    %685 = vmatprep.subr.mxu0 0.0
    %686 = vmatpush1.msra.mxu0 0.0
    %687 = vmatprep.subr.mxu0 0.0
    %688 = vmatpush1.msra.mxu0 0.0
    %689 = vmatprep.subr.mxu0 0.0
    %690 = vmatpush1.msra.mxu0 0.0
    %691 = vmatprep.subr.mxu0 0.0
    %692 = vmatpush1.msra.mxu0 0.0
    %693 = vmatprep.subr.mxu0 0.0
    %694 = vmatpush1.msra.mxu0 0.0
    %695 = vmatprep.subr.mxu0 0.0
    %696 = vmatpush1.msra.mxu0 0.0
    %697 = vmatprep.subr.mxu0 0.0
    %698 = vmatpush1.msra.mxu0 0.0
    %699 = vmatprep.subr.mxu0 0.0
    %700 = vmatpush1.msra.mxu0 0.0
    %701 = vmatprep.subr.mxu0 0.0
    %702 = vmatpush1.msra.mxu0 0.0
    %703 = vmatprep.subr.mxu0 0.0
    %704 = vmatpush1.msra.mxu0 0.0
    %705 = vmatprep.subr.mxu0 0.0
    %706 = vmatpush1.msra.mxu0 0.0
    %707 = vmatprep.subr.mxu0 0.0
    %708 = vmatpush1.msra.mxu0 0.0
    %709 = vmatprep.subr.mxu0 0.0
    %710 = vmatpush1.msra.mxu0 0.0
    %711 = vmatprep.subr.mxu0 0.0
    %712 = vmatpush1.msra.mxu0 0.0
    %713 = vmatprep.mubr.f32.mxu0 0.0
    %714 = vmatmul.mubr.f32.gmra.mrb[0].mxu0 %v647
    %v715 = vpop.f32.mrb[0].mxu0
    %v716 = vadd.f32 0.0, %v715
    %v717 = vpop.f32.mrb[0].mxu0
    %718 = vdwg.mxu0
    %v719 = vpack.c.bf16 %v716, %v716
    %v720 = vld [vmem:[%s12] sm:$0xff]
    %v721 = vld [vmem:[%s12 + $0x8] sm:$0xf]
    %v722 = vld [vmem:[%s12 + $0xc] sm:$0xff]
    %v723 = vld [vmem:[%s12 + $0x14] sm:$0xf]
    %v724 = vld [vmem:[%s12 + $0x18] sm:$0xff]
    %v725 = vld [vmem:[%s12 + $0x20] sm:$0xf]
    %v726 = vld [vmem:[%s12 + $0x24] sm:$0xff]
    %v727 = vld [vmem:[%s12 + $0x2c] sm:$0xf]
    %v728 = vld [vmem:[%s13] sm:$0x7]
    %v730 = vlaneseq
    %v731 = vshrl.u32 %v730, 7
    %v732 = vsub.s32 0, %v731
    %v733 = vrot.slane %v728, %v732
    %v734 = vlaneseq
    %v735 = vshrl.u32 %v734, 7
    %v736 = vsub.s32 1, %v735
    %v737 = vrot.slane %v728, %v736
    %v738 = vlaneseq
    %v739 = vshrl.u32 %v738, 7
    %v740 = vsub.s32 2, %v739
    %v741 = vrot.slane %v728, %v740
    %v753 = vunpack.c.l.b16 %v720
    %v754 = vunpack.c.h.b16 %v720
    %v755 = vunpack.c.l.b16 %v721
    %v756 = vunpack.c.l.b16 %v722
    %v757 = vunpack.c.h.b16 %v722
    %v758 = vunpack.c.l.b16 %v723
    %v759 = vunpack.c.l.b16 %v724
    %v760 = vunpack.c.h.b16 %v724
    %v761 = vunpack.c.l.b16 %v725
    %v762 = vunpack.c.l.b16 %v726
    %v763 = vunpack.c.h.b16 %v726
    %v764 = vunpack.c.l.b16 %v727
    %v765 = vpack.c.b16 %v756, %v753
    %v766 = vpack.c.b16 %v757, %v754
    %v767 = vpack.c.b16 %v758, %v755
    %v768 = vpack.c.b16 %v762, %v759
    %v769 = vpack.c.b16 %v763, %v760
    %v770 = vpack.c.b16 %v764, %v761
    %v778 = vsel %vm538, %v719, 0
    %780 = vmatprep.subr.bf16.mxu0 %v766
    %781 = vmatpush1.bf16.msra.mxu0 %v765
    %782 = vmatprep.subr.bf16.mxu0 %v769
    %783 = vmatpush1.bf16.msra.mxu0 %v768
    %784 = vmatprep.subr.bf16.mxu0 0
    %785 = vmatpush1.bf16.msra.mxu0 0
    %786 = vmatprep.subr.bf16.mxu0 0
    %787 = vmatpush1.bf16.msra.mxu0 0
    %788 = vmatprep.subr.bf16.mxu0 0
    %789 = vmatpush1.bf16.msra.mxu0 0
    %790 = vmatprep.subr.bf16.mxu0 0
    %791 = vmatpush1.bf16.msra.mxu0 0
    %792 = vmatprep.subr.bf16.mxu0 0
    %793 = vmatpush1.bf16.msra.mxu0 0
    %794 = vmatprep.subr.bf16.mxu0 0
    %795 = vmatpush1.bf16.msra.mxu0 0
    %796 = vmatprep.subr.bf16.mxu0 0
    %797 = vmatpush1.bf16.msra.mxu0 0
    %798 = vmatprep.subr.bf16.mxu0 0
    %799 = vmatpush1.bf16.msra.mxu0 0
    %800 = vmatprep.subr.bf16.mxu0 0
    %801 = vmatpush1.bf16.msra.mxu0 0
    %802 = vmatprep.subr.bf16.mxu0 0
    %803 = vmatpush1.bf16.msra.mxu0 0
    %804 = vmatprep.subr.bf16.mxu0 0
    %805 = vmatpush1.bf16.msra.mxu0 0
    %806 = vmatprep.subr.bf16.mxu0 0
    %807 = vmatpush1.bf16.msra.mxu0 0
    %808 = vmatprep.subr.bf16.mxu0 0
    %809 = vmatpush1.bf16.msra.mxu0 0
    %810 = vmatprep.subr.bf16.mxu0 0
    %811 = vmatpush1.bf16.msra.mxu0 0
    %812 = vmatprep.mubr.bf16.mxu0 0
    %813 = vmatmul.mubr.bf16.gmra.mrb[0].mxu0 %v778
    %v814 = vpop.f32.mrb[0].mxu0
    %v815 = vadd.f32 %v733, %v814
    %v816 = vpop.f32.mrb[0].mxu0
    %v817 = vadd.f32 %v737, %v816
    %v818 = vpop.f32.mrb[0].mxu0
    %v819 = vpop.f32.mrb[0].mxu0
    %820 = vdwg.mxu0
    %821 = vmatprep.subr.bf16.mxu0 0
    %822 = vmatpush1.bf16.msra.mxu0 %v767
    %823 = vmatprep.subr.bf16.mxu0 0
    %824 = vmatpush1.bf16.msra.mxu0 %v770
    %825 = vmatprep.subr.bf16.mxu0 0
    %826 = vmatpush1.bf16.msra.mxu0 0
    %827 = vmatprep.subr.bf16.mxu0 0
    %828 = vmatpush1.bf16.msra.mxu0 0
    %829 = vmatprep.subr.bf16.mxu0 0
    %830 = vmatpush1.bf16.msra.mxu0 0
    %831 = vmatprep.subr.bf16.mxu0 0
    %832 = vmatpush1.bf16.msra.mxu0 0
    %833 = vmatprep.subr.bf16.mxu0 0
    %834 = vmatpush1.bf16.msra.mxu0 0
    %835 = vmatprep.subr.bf16.mxu0 0
    %836 = vmatpush1.bf16.msra.mxu0 0
    %837 = vmatprep.subr.bf16.mxu0 0
    %838 = vmatpush1.bf16.msra.mxu0 0
    %839 = vmatprep.subr.bf16.mxu0 0
    %840 = vmatpush1.bf16.msra.mxu0 0
    %841 = vmatprep.subr.bf16.mxu0 0
    %842 = vmatpush1.bf16.msra.mxu0 0
    %843 = vmatprep.subr.bf16.mxu0 0
    %844 = vmatpush1.bf16.msra.mxu0 0
    %845 = vmatprep.subr.bf16.mxu0 0
    %846 = vmatpush1.bf16.msra.mxu0 0
    %847 = vmatprep.subr.bf16.mxu0 0
    %848 = vmatpush1.bf16.msra.mxu0 0
    %849 = vmatprep.subr.bf16.mxu0 0
    %850 = vmatpush1.bf16.msra.mxu0 0
    %851 = vmatprep.subr.bf16.mxu0 0
    %852 = vmatpush1.bf16.msra.mxu0 0
    %853 = vmatprep.mubr.bf16.mxu0 0
    %854 = vmatmul.mubr.bf16.gmra.mrb[0].mxu0 %v778
    %v855 = vpop.f32.mrb[0].mxu0
    %v856 = vadd.f32 %v741, %v855
    %v857 = vpop.f32.mrb[0].mxu0
    %v858 = vpop.f32.mrb[0].mxu0
    %v859 = vpop.f32.mrb[0].mxu0
    %860 = vdwg.mxu0
    %v861 = vmax.f32 %v815, 0.0
    %v862 = vmax.f32 %v817, 0.0
    %v863 = vmax.f32 %v856, 0.0
    %v864 = vpack.c.bf16 %v861, %v861
    %v865 = vpack.c.bf16 %v862, %v862
    %v866 = vpack.c.bf16 %v863, %v863
    %v867 = vld [vmem:[%s14] sm:$0xff]
    %v868 = vld [vmem:[%s14 + $0x8] sm:$0xff]
    %v869 = vld [vmem:[%s14 + $0x10] sm:$0xff]
    %v870 = vld [vmem:[%s14 + $0x18] sm:$0xff]
    %v871 = vld [vmem:[%s14 + $0x20] sm:$0xff]
    %v872 = vld [vmem:[%s14 + $0x28] sm:$0xff]
    %v873 = vld [vmem:[%s14 + $0x30] sm:$0xff]
    %v874 = vld [vmem:[%s14 + $0x38] sm:$0xff]
    %v875 = vld [vmem:[%s14 + $0x40] sm:$0xff]
    %v876 = vld [vmem:[%s14 + $0x48] sm:$0xff]
    %v877 = vld [vmem:[%s14 + $0x50] sm:$0xff]
    %v878 = vld [vmem:[%s14 + $0x58] sm:$0xff]
    %v879 = vld [vmem:[%s14 + $0x60] sm:$0xff]
    %v880 = vld [vmem:[%s14 + $0x68] sm:$0xff]
    %v881 = vld [vmem:[%s14 + $0x70] sm:$0xff]
    %v882 = vld [vmem:[%s14 + $0x78] sm:$0xff]
    %v883 = vld [vmem:[%s14 + $0x80] sm:$0xff]
    %v884 = vld [vmem:[%s14 + $0x88] sm:$0xff]
    %v885 = vld [vmem:[%s14 + $0x90] sm:$0xff]
    %v886 = vld [vmem:[%s14 + $0x98] sm:$0xff]
    %v887 = vld [vmem:[%s14 + $0xa0] sm:$0xff]
    %v888 = vld [vmem:[%s14 + $0xa8] sm:$0xff]
    %v889 = vld [vmem:[%s14 + $0xb0] sm:$0xff]
    %v890 = vld [vmem:[%s14 + $0xb8] sm:$0xff]
    %v891 = vld [vmem:[%s14 + $0xc0] sm:$0xff]
    %v892 = vld [vmem:[%s14 + $0xc8] sm:$0xff]
    %v893 = vld [vmem:[%s14 + $0xd0] sm:$0xff]
    %v894 = vld [vmem:[%s14 + $0xd8] sm:$0xff]
    %v895 = vld [vmem:[%s14 + $0xe0] sm:$0xff]
    %v896 = vld [vmem:[%s14 + $0xe8] sm:$0xff]
    %v897 = vld [vmem:[%s14 + $0xf0] sm:$0xff]
    %v898 = vld [vmem:[%s14 + $0xf8] sm:$0xff]
    %v899 = vld [vmem:[%s14 + $0x100] sm:$0xff]
    %v900 = vld [vmem:[%s14 + $0x108] sm:$0xff]
    %v901 = vld [vmem:[%s14 + $0x110] sm:$0xff]
    %v902 = vld [vmem:[%s14 + $0x118] sm:$0xff]
    %v903 = vld [vmem:[%s14 + $0x120] sm:$0xff]
    %v904 = vld [vmem:[%s14 + $0x128] sm:$0xff]
    %v905 = vld [vmem:[%s14 + $0x130] sm:$0xff]
    %v906 = vld [vmem:[%s14 + $0x138] sm:$0xff]
    %v907 = vld [vmem:[%s14 + $0x140] sm:$0xff]
    %v908 = vld [vmem:[%s14 + $0x148] sm:$0xff]
    %v909 = vld [vmem:[%s14 + $0x150] sm:$0xff]
    %v910 = vld [vmem:[%s14 + $0x158] sm:$0xff]
    %v911 = vld [vmem:[%s14 + $0x160] sm:$0xff]
    %v912 = vld [vmem:[%s14 + $0x168] sm:$0xff]
    %v913 = vld [vmem:[%s14 + $0x170] sm:$0xff]
    %v914 = vld [vmem:[%s14 + $0x178] sm:$0xff]
    %v915 = vld [vmem:[%s14 + $0x180] sm:$0xff]
    %v916 = vld [vmem:[%s14 + $0x188] sm:$0xff]
    %v917 = vld [vmem:[%s14 + $0x190] sm:$0xff]
    %v918 = vld [vmem:[%s14 + $0x198] sm:$0xff]
    %v919 = vld [vmem:[%s14 + $0x1a0] sm:$0xff]
    %v920 = vld [vmem:[%s14 + $0x1a8] sm:$0xff]
    %v921 = vld [vmem:[%s14 + $0x1b0] sm:$0xff]
    %v922 = vld [vmem:[%s14 + $0x1b8] sm:$0xff]
    %v923 = vld [vmem:[%s14 + $0x1c0] sm:$0xff]
    %v924 = vld [vmem:[%s14 + $0x1c8] sm:$0xff]
    %v925 = vld [vmem:[%s14 + $0x1d0] sm:$0xff]
    %v926 = vld [vmem:[%s14 + $0x1d8] sm:$0xff]
    %v927 = vld [vmem:[%s14 + $0x1e0] sm:$0xff]
    %v928 = vld [vmem:[%s14 + $0x1e8] sm:$0xff]
    %v929 = vld [vmem:[%s14 + $0x1f0] sm:$0xff]
    %v930 = vld [vmem:[%s14 + $0x1f8] sm:$0xff]
    %v931 = vld [vmem:[%s14 + $0x200] sm:$0xff]
    %v932 = vld [vmem:[%s14 + $0x208] sm:$0xff]
    %v933 = vld [vmem:[%s14 + $0x210] sm:$0xff]
    %v934 = vld [vmem:[%s14 + $0x218] sm:$0xff]
    %v935 = vld [vmem:[%s14 + $0x220] sm:$0xff]
    %v936 = vld [vmem:[%s14 + $0x228] sm:$0xff]
    %v937 = vld [vmem:[%s14 + $0x230] sm:$0xff]
    %v938 = vld [vmem:[%s14 + $0x238] sm:$0xff]
    %v939 = vld [vmem:[%s14 + $0x240] sm:$0xff]
    %v940 = vld [vmem:[%s14 + $0x248] sm:$0xff]
    %v941 = vld [vmem:[%s14 + $0x250] sm:$0xff]
    %v942 = vld [vmem:[%s14 + $0x258] sm:$0xff]
    %v943 = vld [vmem:[%s14 + $0x260] sm:$0xff]
    %v944 = vld [vmem:[%s14 + $0x268] sm:$0xff]
    %v945 = vld [vmem:[%s14 + $0x270] sm:$0xff]
    %v946 = vld [vmem:[%s14 + $0x278] sm:$0xff]
    %v947 = vld [vmem:[%s14 + $0x280] sm:$0xff]
    %v948 = vld [vmem:[%s14 + $0x288] sm:$0xff]
    %v949 = vld [vmem:[%s14 + $0x290] sm:$0xff]
    %v950 = vld [vmem:[%s14 + $0x298] sm:$0xff]
    %v951 = vld [vmem:[%s14 + $0x2a0] sm:$0xff]
    %v952 = vld [vmem:[%s14 + $0x2a8] sm:$0xff]
    %v953 = vld [vmem:[%s14 + $0x2b0] sm:$0xff]
    %v954 = vld [vmem:[%s14 + $0x2b8] sm:$0xff]
    %v955 = vld [vmem:[%s14 + $0x2c0] sm:$0xff]
    %v956 = vld [vmem:[%s14 + $0x2c8] sm:$0xff]
    %v957 = vld [vmem:[%s14 + $0x2d0] sm:$0xff]
    %v958 = vld [vmem:[%s14 + $0x2d8] sm:$0xff]
    %v959 = vld [vmem:[%s14 + $0x2e0] sm:$0xff]
    %v960 = vld [vmem:[%s14 + $0x2e8] sm:$0xff]
    %v961 = vld [vmem:[%s14 + $0x2f0] sm:$0xff]
    %v962 = vld [vmem:[%s14 + $0x2f8] sm:$0xff]
    %v963 = vld [vmem:[%s14 + $0x300] sm:$0xff]
    %v964 = vld [vmem:[%s14 + $0x308] sm:$0xff]
    %v965 = vld [vmem:[%s14 + $0x310] sm:$0xff]
    %v966 = vld [vmem:[%s14 + $0x318] sm:$0xff]
    %v967 = vld [vmem:[%s14 + $0x320] sm:$0xff]
    %v968 = vld [vmem:[%s14 + $0x328] sm:$0xff]
    %v969 = vld [vmem:[%s14 + $0x330] sm:$0xff]
    %v970 = vld [vmem:[%s14 + $0x338] sm:$0xff]
    %v971 = vld [vmem:[%s14 + $0x340] sm:$0xff]
    %v972 = vld [vmem:[%s14 + $0x348] sm:$0xff]
    %v973 = vld [vmem:[%s14 + $0x350] sm:$0xff]
    %v974 = vld [vmem:[%s14 + $0x358] sm:$0xff]
    %v975 = vld [vmem:[%s14 + $0x360] sm:$0xff]
    %v976 = vld [vmem:[%s14 + $0x368] sm:$0xff]
    %v977 = vld [vmem:[%s14 + $0x370] sm:$0xff]
    %v978 = vld [vmem:[%s14 + $0x378] sm:$0xff]
    %v979 = vld [vmem:[%s14 + $0x380] sm:$0xff]
    %v980 = vld [vmem:[%s14 + $0x388] sm:$0xff]
    %v981 = vld [vmem:[%s14 + $0x390] sm:$0xff]
    %v982 = vld [vmem:[%s14 + $0x398] sm:$0xff]
    %v983 = vld [vmem:[%s14 + $0x3a0] sm:$0xff]
    %v984 = vld [vmem:[%s14 + $0x3a8] sm:$0xff]
    %v985 = vld [vmem:[%s14 + $0x3b0] sm:$0xff]
    %v986 = vld [vmem:[%s14 + $0x3b8] sm:$0xff]
    %v987 = vld [vmem:[%s14 + $0x3c0] sm:$0xff]
    %v988 = vld [vmem:[%s14 + $0x3c8] sm:$0xff]
    %v989 = vld [vmem:[%s14 + $0x3d0] sm:$0xff]
    %v990 = vld [vmem:[%s14 + $0x3d8] sm:$0xff]
    %v991 = vld [vmem:[%s14 + $0x3e0] sm:$0xff]
    %v992 = vld [vmem:[%s14 + $0x3e8] sm:$0xff]
    %v993 = vld [vmem:[%s14 + $0x3f0] sm:$0xff]
    %v994 = vld [vmem:[%s14 + $0x3f8] sm:$0xff]
    %v995 = vld [vmem:[%s14 + $0x400] sm:$0xff]
    %v996 = vld [vmem:[%s14 + $0x408] sm:$0xff]
    %v997 = vld [vmem:[%s14 + $0x410] sm:$0xff]
    %v998 = vld [vmem:[%s14 + $0x418] sm:$0xff]
    %v999 = vld [vmem:[%s14 + $0x420] sm:$0xff]
    %v1000 = vld [vmem:[%s14 + $0x428] sm:$0xff]
    %v1001 = vld [vmem:[%s14 + $0x430] sm:$0xff]
    %v1002 = vld [vmem:[%s14 + $0x438] sm:$0xff]
    %v1003 = vld [vmem:[%s14 + $0x440] sm:$0xff]
    %v1004 = vld [vmem:[%s14 + $0x448] sm:$0xff]
    %v1005 = vld [vmem:[%s14 + $0x450] sm:$0xff]
    %v1006 = vld [vmem:[%s14 + $0x458] sm:$0xff]
    %v1007 = vld [vmem:[%s14 + $0x460] sm:$0xff]
    %v1008 = vld [vmem:[%s14 + $0x468] sm:$0xff]
    %v1009 = vld [vmem:[%s14 + $0x470] sm:$0xff]
    %v1010 = vld [vmem:[%s14 + $0x478] sm:$0xff]
    %v1011 = vld [vmem:[%s15] sm:$0x3f]
    %v1013 = vlaneseq
    %v1014 = vshrl.u32 %v1013, 7
    %v1015 = vsub.s32 0, %v1014
    %v1016 = vrot.slane %v1011, %v1015
    %v1017 = vlaneseq
    %v1018 = vshrl.u32 %v1017, 7
    %v1019 = vsub.s32 1, %v1018
    %v1020 = vrot.slane %v1011, %v1019
    %v1021 = vlaneseq
    %v1022 = vshrl.u32 %v1021, 7
    %v1023 = vsub.s32 2, %v1022
    %v1024 = vrot.slane %v1011, %v1023
    %v1025 = vlaneseq
    %v1026 = vshrl.u32 %v1025, 7
    %v1027 = vsub.s32 3, %v1026
    %v1028 = vrot.slane %v1011, %v1027
    %v1029 = vlaneseq
    %v1030 = vshrl.u32 %v1029, 7
    %v1031 = vsub.s32 4, %v1030
    %v1032 = vrot.slane %v1011, %v1031
    %v1033 = vlaneseq
    %v1034 = vshrl.u32 %v1033, 7
    %v1035 = vsub.s32 5, %v1034
    %v1036 = vrot.slane %v1011, %v1035
    %v1187 = vunpack.c.l.b16 %v867
    %v1188 = vunpack.c.h.b16 %v867
    %v1189 = vunpack.c.l.b16 %v868
    %v1190 = vunpack.c.h.b16 %v868
    %v1191 = vunpack.c.l.b16 %v869
    %v1192 = vunpack.c.h.b16 %v869
    %v1193 = vunpack.c.l.b16 %v870
    %v1194 = vunpack.c.h.b16 %v870
    %v1195 = vunpack.c.l.b16 %v871
    %v1196 = vunpack.c.h.b16 %v871
    %v1197 = vunpack.c.l.b16 %v872
    %v1198 = vunpack.c.h.b16 %v872
    %v1199 = vunpack.c.l.b16 %v873
    %v1200 = vunpack.c.h.b16 %v873
    %v1201 = vunpack.c.l.b16 %v874
    %v1202 = vunpack.c.h.b16 %v874
    %v1203 = vunpack.c.l.b16 %v875
    %v1204 = vunpack.c.h.b16 %v875
    %v1205 = vunpack.c.l.b16 %v876
    %v1206 = vunpack.c.h.b16 %v876
    %v1207 = vunpack.c.l.b16 %v877
    %v1208 = vunpack.c.h.b16 %v877
    %v1209 = vunpack.c.l.b16 %v878
    %v1210 = vunpack.c.h.b16 %v878
    %v1211 = vunpack.c.l.b16 %v879
    %v1212 = vunpack.c.h.b16 %v879
    %v1213 = vunpack.c.l.b16 %v880
    %v1214 = vunpack.c.h.b16 %v880
    %v1215 = vunpack.c.l.b16 %v881
    %v1216 = vunpack.c.h.b16 %v881
    %v1217 = vunpack.c.l.b16 %v882
    %v1218 = vunpack.c.h.b16 %v882
    %v1219 = vunpack.c.l.b16 %v883
    %v1220 = vunpack.c.h.b16 %v883
    %v1221 = vunpack.c.l.b16 %v884
    %v1222 = vunpack.c.h.b16 %v884
    %v1223 = vunpack.c.l.b16 %v885
    %v1224 = vunpack.c.h.b16 %v885
    %v1225 = vunpack.c.l.b16 %v886
    %v1226 = vunpack.c.h.b16 %v886
    %v1227 = vunpack.c.l.b16 %v887
    %v1228 = vunpack.c.h.b16 %v887
    %v1229 = vunpack.c.l.b16 %v888
    %v1230 = vunpack.c.h.b16 %v888
    %v1231 = vunpack.c.l.b16 %v889
    %v1232 = vunpack.c.h.b16 %v889
    %v1233 = vunpack.c.l.b16 %v890
    %v1234 = vunpack.c.h.b16 %v890
    %v1235 = vunpack.c.l.b16 %v891
    %v1236 = vunpack.c.h.b16 %v891
    %v1237 = vunpack.c.l.b16 %v892
    %v1238 = vunpack.c.h.b16 %v892
    %v1239 = vunpack.c.l.b16 %v893
    %v1240 = vunpack.c.h.b16 %v893
    %v1241 = vunpack.c.l.b16 %v894
    %v1242 = vunpack.c.h.b16 %v894
    %v1243 = vunpack.c.l.b16 %v895
    %v1244 = vunpack.c.h.b16 %v895
    %v1245 = vunpack.c.l.b16 %v896
    %v1246 = vunpack.c.h.b16 %v896
    %v1247 = vunpack.c.l.b16 %v897
    %v1248 = vunpack.c.h.b16 %v897
    %v1249 = vunpack.c.l.b16 %v898
    %v1250 = vunpack.c.h.b16 %v898
    %v1251 = vunpack.c.l.b16 %v899
    %v1252 = vunpack.c.h.b16 %v899
    %v1253 = vunpack.c.l.b16 %v900
    %v1254 = vunpack.c.h.b16 %v900
    %v1255 = vunpack.c.l.b16 %v901
    %v1256 = vunpack.c.h.b16 %v901
    %v1257 = vunpack.c.l.b16 %v902
    %v1258 = vunpack.c.h.b16 %v902
    %v1259 = vunpack.c.l.b16 %v903
    %v1260 = vunpack.c.h.b16 %v903
    %v1261 = vunpack.c.l.b16 %v904
    %v1262 = vunpack.c.h.b16 %v904
    %v1263 = vunpack.c.l.b16 %v905
    %v1264 = vunpack.c.h.b16 %v905
    %v1265 = vunpack.c.l.b16 %v906
    %v1266 = vunpack.c.h.b16 %v906
    %v1267 = vunpack.c.l.b16 %v907
    %v1268 = vunpack.c.h.b16 %v907
    %v1269 = vunpack.c.l.b16 %v908
    %v1270 = vunpack.c.h.b16 %v908
    %v1271 = vunpack.c.l.b16 %v909
    %v1272 = vunpack.c.h.b16 %v909
    %v1273 = vunpack.c.l.b16 %v910
    %v1274 = vunpack.c.h.b16 %v910
    %v1275 = vunpack.c.l.b16 %v911
    %v1276 = vunpack.c.h.b16 %v911
    %v1277 = vunpack.c.l.b16 %v912
    %v1278 = vunpack.c.h.b16 %v912
    %v1279 = vunpack.c.l.b16 %v913
    %v1280 = vunpack.c.h.b16 %v913
    %v1281 = vunpack.c.l.b16 %v914
    %v1282 = vunpack.c.h.b16 %v914
    %v1283 = vunpack.c.l.b16 %v915
    %v1284 = vunpack.c.h.b16 %v915
    %v1285 = vunpack.c.l.b16 %v916
    %v1286 = vunpack.c.h.b16 %v916
    %v1287 = vunpack.c.l.b16 %v917
    %v1288 = vunpack.c.h.b16 %v917
    %v1289 = vunpack.c.l.b16 %v918
    %v1290 = vunpack.c.h.b16 %v918
    %v1291 = vunpack.c.l.b16 %v919
    %v1292 = vunpack.c.h.b16 %v919
    %v1293 = vunpack.c.l.b16 %v920
    %v1294 = vunpack.c.h.b16 %v920
    %v1295 = vunpack.c.l.b16 %v921
    %v1296 = vunpack.c.h.b16 %v921
    %v1297 = vunpack.c.l.b16 %v922
    %v1298 = vunpack.c.h.b16 %v922
    %v1299 = vunpack.c.l.b16 %v923
    %v1300 = vunpack.c.h.b16 %v923
    %v1301 = vunpack.c.l.b16 %v924
    %v1302 = vunpack.c.h.b16 %v924
    %v1303 = vunpack.c.l.b16 %v925
    %v1304 = vunpack.c.h.b16 %v925
    %v1305 = vunpack.c.l.b16 %v926
    %v1306 = vunpack.c.h.b16 %v926
    %v1307 = vunpack.c.l.b16 %v927
    %v1308 = vunpack.c.h.b16 %v927
    %v1309 = vunpack.c.l.b16 %v928
    %v1310 = vunpack.c.h.b16 %v928
    %v1311 = vunpack.c.l.b16 %v929
    %v1312 = vunpack.c.h.b16 %v929
    %v1313 = vunpack.c.l.b16 %v930
    %v1314 = vunpack.c.h.b16 %v930
    %v1315 = vunpack.c.l.b16 %v931
    %v1316 = vunpack.c.h.b16 %v931
    %v1317 = vunpack.c.l.b16 %v932
    %v1318 = vunpack.c.h.b16 %v932
    %v1319 = vunpack.c.l.b16 %v933
    %v1320 = vunpack.c.h.b16 %v933
    %v1321 = vunpack.c.l.b16 %v934
    %v1322 = vunpack.c.h.b16 %v934
    %v1323 = vunpack.c.l.b16 %v935
    %v1324 = vunpack.c.h.b16 %v935
    %v1325 = vunpack.c.l.b16 %v936
    %v1326 = vunpack.c.h.b16 %v936
    %v1327 = vunpack.c.l.b16 %v937
    %v1328 = vunpack.c.h.b16 %v937
    %v1329 = vunpack.c.l.b16 %v938
    %v1330 = vunpack.c.h.b16 %v938
    %v1331 = vunpack.c.l.b16 %v939
    %v1332 = vunpack.c.h.b16 %v939
    %v1333 = vunpack.c.l.b16 %v940
    %v1334 = vunpack.c.h.b16 %v940
    %v1335 = vunpack.c.l.b16 %v941
    %v1336 = vunpack.c.h.b16 %v941
    %v1337 = vunpack.c.l.b16 %v942
    %v1338 = vunpack.c.h.b16 %v942
    %v1339 = vunpack.c.l.b16 %v943
    %v1340 = vunpack.c.h.b16 %v943
    %v1341 = vunpack.c.l.b16 %v944
    %v1342 = vunpack.c.h.b16 %v944
    %v1343 = vunpack.c.l.b16 %v945
    %v1344 = vunpack.c.h.b16 %v945
    %v1345 = vunpack.c.l.b16 %v946
    %v1346 = vunpack.c.h.b16 %v946
    %v1347 = vunpack.c.l.b16 %v947
    %v1348 = vunpack.c.h.b16 %v947
    %v1349 = vunpack.c.l.b16 %v948
    %v1350 = vunpack.c.h.b16 %v948
    %v1351 = vunpack.c.l.b16 %v949
    %v1352 = vunpack.c.h.b16 %v949
    %v1353 = vunpack.c.l.b16 %v950
    %v1354 = vunpack.c.h.b16 %v950
    %v1355 = vunpack.c.l.b16 %v951
    %v1356 = vunpack.c.h.b16 %v951
    %v1357 = vunpack.c.l.b16 %v952
    %v1358 = vunpack.c.h.b16 %v952
    %v1359 = vunpack.c.l.b16 %v953
    %v1360 = vunpack.c.h.b16 %v953
    %v1361 = vunpack.c.l.b16 %v954
    %v1362 = vunpack.c.h.b16 %v954
    %v1363 = vunpack.c.l.b16 %v955
    %v1364 = vunpack.c.h.b16 %v955
    %v1365 = vunpack.c.l.b16 %v956
    %v1366 = vunpack.c.h.b16 %v956
    %v1367 = vunpack.c.l.b16 %v957
    %v1368 = vunpack.c.h.b16 %v957
    %v1369 = vunpack.c.l.b16 %v958
    %v1370 = vunpack.c.h.b16 %v958
    %v1371 = vunpack.c.l.b16 %v959
    %v1372 = vunpack.c.h.b16 %v959
    %v1373 = vunpack.c.l.b16 %v960
    %v1374 = vunpack.c.h.b16 %v960
    %v1375 = vunpack.c.l.b16 %v961
    %v1376 = vunpack.c.h.b16 %v961
    %v1377 = vunpack.c.l.b16 %v962
    %v1378 = vunpack.c.h.b16 %v962
    %v1379 = vunpack.c.l.b16 %v963
    %v1380 = vunpack.c.h.b16 %v963
    %v1381 = vunpack.c.l.b16 %v964
    %v1382 = vunpack.c.h.b16 %v964
    %v1383 = vunpack.c.l.b16 %v965
    %v1384 = vunpack.c.h.b16 %v965
    %v1385 = vunpack.c.l.b16 %v966
    %v1386 = vunpack.c.h.b16 %v966
    %v1387 = vunpack.c.l.b16 %v967
    %v1388 = vunpack.c.h.b16 %v967
    %v1389 = vunpack.c.l.b16 %v968
    %v1390 = vunpack.c.h.b16 %v968
    %v1391 = vunpack.c.l.b16 %v969
    %v1392 = vunpack.c.h.b16 %v969
    %v1393 = vunpack.c.l.b16 %v970
    %v1394 = vunpack.c.h.b16 %v970
    %v1395 = vunpack.c.l.b16 %v971
    %v1396 = vunpack.c.h.b16 %v971
    %v1397 = vunpack.c.l.b16 %v972
    %v1398 = vunpack.c.h.b16 %v972
    %v1399 = vunpack.c.l.b16 %v973
    %v1400 = vunpack.c.h.b16 %v973
    %v1401 = vunpack.c.l.b16 %v974
    %v1402 = vunpack.c.h.b16 %v974
    %v1403 = vunpack.c.l.b16 %v975
    %v1404 = vunpack.c.h.b16 %v975
    %v1405 = vunpack.c.l.b16 %v976
    %v1406 = vunpack.c.h.b16 %v976
    %v1407 = vunpack.c.l.b16 %v977
    %v1408 = vunpack.c.h.b16 %v977
    %v1409 = vunpack.c.l.b16 %v978
    %v1410 = vunpack.c.h.b16 %v978
    %v1411 = vunpack.c.l.b16 %v979
    %v1412 = vunpack.c.h.b16 %v979
    %v1413 = vunpack.c.l.b16 %v980
    %v1414 = vunpack.c.h.b16 %v980
    %v1415 = vunpack.c.l.b16 %v981
    %v1416 = vunpack.c.h.b16 %v981
    %v1417 = vunpack.c.l.b16 %v982
    %v1418 = vunpack.c.h.b16 %v982
    %v1419 = vunpack.c.l.b16 %v983
    %v1420 = vunpack.c.h.b16 %v983
    %v1421 = vunpack.c.l.b16 %v984
    %v1422 = vunpack.c.h.b16 %v984
    %v1423 = vunpack.c.l.b16 %v985
    %v1424 = vunpack.c.h.b16 %v985
    %v1425 = vunpack.c.l.b16 %v986
    %v1426 = vunpack.c.h.b16 %v986
    %v1427 = vunpack.c.l.b16 %v987
    %v1428 = vunpack.c.h.b16 %v987
    %v1429 = vunpack.c.l.b16 %v988
    %v1430 = vunpack.c.h.b16 %v988
    %v1431 = vunpack.c.l.b16 %v989
    %v1432 = vunpack.c.h.b16 %v989
    %v1433 = vunpack.c.l.b16 %v990
    %v1434 = vunpack.c.h.b16 %v990
    %v1435 = vunpack.c.l.b16 %v991
    %v1436 = vunpack.c.h.b16 %v991
    %v1437 = vunpack.c.l.b16 %v992
    %v1438 = vunpack.c.h.b16 %v992
    %v1439 = vunpack.c.l.b16 %v993
    %v1440 = vunpack.c.h.b16 %v993
    %v1441 = vunpack.c.l.b16 %v994
    %v1442 = vunpack.c.h.b16 %v994
    %v1443 = vunpack.c.l.b16 %v995
    %v1444 = vunpack.c.h.b16 %v995
    %v1445 = vunpack.c.l.b16 %v996
    %v1446 = vunpack.c.h.b16 %v996
    %v1447 = vunpack.c.l.b16 %v997
    %v1448 = vunpack.c.h.b16 %v997
    %v1449 = vunpack.c.l.b16 %v998
    %v1450 = vunpack.c.h.b16 %v998
    %v1451 = vunpack.c.l.b16 %v999
    %v1452 = vunpack.c.h.b16 %v999
    %v1453 = vunpack.c.l.b16 %v1000
    %v1454 = vunpack.c.h.b16 %v1000
    %v1455 = vunpack.c.l.b16 %v1001
    %v1456 = vunpack.c.h.b16 %v1001
    %v1457 = vunpack.c.l.b16 %v1002
    %v1458 = vunpack.c.h.b16 %v1002
    %v1459 = vunpack.c.l.b16 %v1003
    %v1460 = vunpack.c.h.b16 %v1003
    %v1461 = vunpack.c.l.b16 %v1004
    %v1462 = vunpack.c.h.b16 %v1004
    %v1463 = vunpack.c.l.b16 %v1005
    %v1464 = vunpack.c.h.b16 %v1005
    %v1465 = vunpack.c.l.b16 %v1006
    %v1466 = vunpack.c.h.b16 %v1006
    %v1467 = vunpack.c.l.b16 %v1007
    %v1468 = vunpack.c.h.b16 %v1007
    %v1469 = vunpack.c.l.b16 %v1008
    %v1470 = vunpack.c.h.b16 %v1008
    %v1471 = vunpack.c.l.b16 %v1009
    %v1472 = vunpack.c.h.b16 %v1009
    %v1473 = vunpack.c.l.b16 %v1010
    %v1474 = vunpack.c.h.b16 %v1010
    %v1475 = vpack.c.b16 %v1193, %v1187
    %v1476 = vpack.c.b16 %v1194, %v1188
    %v1477 = vpack.c.b16 %v1195, %v1189
    %v1478 = vpack.c.b16 %v1196, %v1190
    %v1479 = vpack.c.b16 %v1197, %v1191
    %v1480 = vpack.c.b16 %v1198, %v1192
    %v1481 = vpack.c.b16 %v1205, %v1199
    %v1482 = vpack.c.b16 %v1206, %v1200
    %v1483 = vpack.c.b16 %v1207, %v1201
    %v1484 = vpack.c.b16 %v1208, %v1202
    %v1485 = vpack.c.b16 %v1209, %v1203
    %v1486 = vpack.c.b16 %v1210, %v1204
    %v1487 = vpack.c.b16 %v1217, %v1211
    %v1488 = vpack.c.b16 %v1218, %v1212
    %v1489 = vpack.c.b16 %v1219, %v1213
    %v1490 = vpack.c.b16 %v1220, %v1214
    %v1491 = vpack.c.b16 %v1221, %v1215
    %v1492 = vpack.c.b16 %v1222, %v1216
    %v1493 = vpack.c.b16 %v1229, %v1223
    %v1494 = vpack.c.b16 %v1230, %v1224
    %v1495 = vpack.c.b16 %v1231, %v1225
    %v1496 = vpack.c.b16 %v1232, %v1226
    %v1497 = vpack.c.b16 %v1233, %v1227
    %v1498 = vpack.c.b16 %v1234, %v1228
    %v1499 = vpack.c.b16 %v1241, %v1235
    %v1500 = vpack.c.b16 %v1242, %v1236
    %v1501 = vpack.c.b16 %v1243, %v1237
    %v1502 = vpack.c.b16 %v1244, %v1238
    %v1503 = vpack.c.b16 %v1245, %v1239
    %v1504 = vpack.c.b16 %v1246, %v1240
    %v1505 = vpack.c.b16 %v1253, %v1247
    %v1506 = vpack.c.b16 %v1254, %v1248
    %v1507 = vpack.c.b16 %v1255, %v1249
    %v1508 = vpack.c.b16 %v1256, %v1250
    %v1509 = vpack.c.b16 %v1257, %v1251
    %v1510 = vpack.c.b16 %v1258, %v1252
    %v1511 = vpack.c.b16 %v1265, %v1259
    %v1512 = vpack.c.b16 %v1266, %v1260
    %v1513 = vpack.c.b16 %v1267, %v1261
    %v1514 = vpack.c.b16 %v1268, %v1262
    %v1515 = vpack.c.b16 %v1269, %v1263
    %v1516 = vpack.c.b16 %v1270, %v1264
    %v1517 = vpack.c.b16 %v1277, %v1271
    %v1518 = vpack.c.b16 %v1278, %v1272
    %v1519 = vpack.c.b16 %v1279, %v1273
    %v1520 = vpack.c.b16 %v1280, %v1274
    %v1521 = vpack.c.b16 %v1281, %v1275
    %v1522 = vpack.c.b16 %v1282, %v1276
    %v1523 = vpack.c.b16 %v1289, %v1283
    %v1524 = vpack.c.b16 %v1290, %v1284
    %v1525 = vpack.c.b16 %v1291, %v1285
    %v1526 = vpack.c.b16 %v1292, %v1286
    %v1527 = vpack.c.b16 %v1293, %v1287
    %v1528 = vpack.c.b16 %v1294, %v1288
    %v1529 = vpack.c.b16 %v1301, %v1295
    %v1530 = vpack.c.b16 %v1302, %v1296
    %v1531 = vpack.c.b16 %v1303, %v1297
    %v1532 = vpack.c.b16 %v1304, %v1298
    %v1533 = vpack.c.b16 %v1305, %v1299
    %v1534 = vpack.c.b16 %v1306, %v1300
    %v1535 = vpack.c.b16 %v1313, %v1307
    %v1536 = vpack.c.b16 %v1314, %v1308
    %v1537 = vpack.c.b16 %v1315, %v1309
    %v1538 = vpack.c.b16 %v1316, %v1310
    %v1539 = vpack.c.b16 %v1317, %v1311
    %v1540 = vpack.c.b16 %v1318, %v1312
    %v1541 = vpack.c.b16 %v1325, %v1319
    %v1542 = vpack.c.b16 %v1326, %v1320
    %v1543 = vpack.c.b16 %v1327, %v1321
    %v1544 = vpack.c.b16 %v1328, %v1322
    %v1545 = vpack.c.b16 %v1329, %v1323
    %v1546 = vpack.c.b16 %v1330, %v1324
    %v1547 = vpack.c.b16 %v1337, %v1331
    %v1548 = vpack.c.b16 %v1338, %v1332
    %v1549 = vpack.c.b16 %v1339, %v1333
    %v1550 = vpack.c.b16 %v1340, %v1334
    %v1551 = vpack.c.b16 %v1341, %v1335
    %v1552 = vpack.c.b16 %v1342, %v1336
    %v1553 = vpack.c.b16 %v1349, %v1343
    %v1554 = vpack.c.b16 %v1350, %v1344
    %v1555 = vpack.c.b16 %v1351, %v1345
    %v1556 = vpack.c.b16 %v1352, %v1346
    %v1557 = vpack.c.b16 %v1353, %v1347
    %v1558 = vpack.c.b16 %v1354, %v1348
    %v1559 = vpack.c.b16 %v1361, %v1355
    %v1560 = vpack.c.b16 %v1362, %v1356
    %v1561 = vpack.c.b16 %v1363, %v1357
    %v1562 = vpack.c.b16 %v1364, %v1358
    %v1563 = vpack.c.b16 %v1365, %v1359
    %v1564 = vpack.c.b16 %v1366, %v1360
    %v1565 = vpack.c.b16 %v1373, %v1367
    %v1566 = vpack.c.b16 %v1374, %v1368
    %v1567 = vpack.c.b16 %v1375, %v1369
    %v1568 = vpack.c.b16 %v1376, %v1370
    %v1569 = vpack.c.b16 %v1377, %v1371
    %v1570 = vpack.c.b16 %v1378, %v1372
    %v1571 = vpack.c.b16 %v1385, %v1379
    %v1572 = vpack.c.b16 %v1386, %v1380
    %v1573 = vpack.c.b16 %v1387, %v1381
    %v1574 = vpack.c.b16 %v1388, %v1382
    %v1575 = vpack.c.b16 %v1389, %v1383
    %v1576 = vpack.c.b16 %v1390, %v1384
    %v1577 = vpack.c.b16 %v1397, %v1391
    %v1578 = vpack.c.b16 %v1398, %v1392
    %v1579 = vpack.c.b16 %v1399, %v1393
    %v1580 = vpack.c.b16 %v1400, %v1394
    %v1581 = vpack.c.b16 %v1401, %v1395
    %v1582 = vpack.c.b16 %v1402, %v1396
    %v1583 = vpack.c.b16 %v1409, %v1403
    %v1584 = vpack.c.b16 %v1410, %v1404
    %v1585 = vpack.c.b16 %v1411, %v1405
    %v1586 = vpack.c.b16 %v1412, %v1406
    %v1587 = vpack.c.b16 %v1413, %v1407
    %v1588 = vpack.c.b16 %v1414, %v1408
    %v1589 = vpack.c.b16 %v1421, %v1415
    %v1590 = vpack.c.b16 %v1422, %v1416
    %v1591 = vpack.c.b16 %v1423, %v1417
    %v1592 = vpack.c.b16 %v1424, %v1418
    %v1593 = vpack.c.b16 %v1425, %v1419
    %v1594 = vpack.c.b16 %v1426, %v1420
    %v1595 = vpack.c.b16 %v1433, %v1427
    %v1596 = vpack.c.b16 %v1434, %v1428
    %v1597 = vpack.c.b16 %v1435, %v1429
    %v1598 = vpack.c.b16 %v1436, %v1430
    %v1599 = vpack.c.b16 %v1437, %v1431
    %v1600 = vpack.c.b16 %v1438, %v1432
    %v1601 = vpack.c.b16 %v1445, %v1439
    %v1602 = vpack.c.b16 %v1446, %v1440
    %v1603 = vpack.c.b16 %v1447, %v1441
    %v1604 = vpack.c.b16 %v1448, %v1442
    %v1605 = vpack.c.b16 %v1449, %v1443
    %v1606 = vpack.c.b16 %v1450, %v1444
    %v1607 = vpack.c.b16 %v1457, %v1451
    %v1608 = vpack.c.b16 %v1458, %v1452
    %v1609 = vpack.c.b16 %v1459, %v1453
    %v1610 = vpack.c.b16 %v1460, %v1454
    %v1611 = vpack.c.b16 %v1461, %v1455
    %v1612 = vpack.c.b16 %v1462, %v1456
    %v1613 = vpack.c.b16 %v1469, %v1463
    %v1614 = vpack.c.b16 %v1470, %v1464
    %v1615 = vpack.c.b16 %v1471, %v1465
    %v1616 = vpack.c.b16 %v1472, %v1466
    %v1617 = vpack.c.b16 %v1473, %v1467
    %v1618 = vpack.c.b16 %v1474, %v1468
    %1763 = vmatprep.subr.bf16.mxu0 %v1476
    %1764 = vmatpush1.bf16.msra.mxu0 %v1475
    %1765 = vmatprep.subr.bf16.mxu0 %v1482
    %1766 = vmatpush1.bf16.msra.mxu0 %v1481
    %1767 = vmatprep.subr.bf16.mxu0 %v1488
    %1768 = vmatpush1.bf16.msra.mxu0 %v1487
    %1769 = vmatprep.subr.bf16.mxu0 %v1494
    %1770 = vmatpush1.bf16.msra.mxu0 %v1493
    %1771 = vmatprep.subr.bf16.mxu0 %v1500
    %1772 = vmatpush1.bf16.msra.mxu0 %v1499
    %1773 = vmatprep.subr.bf16.mxu0 %v1506
    %1774 = vmatpush1.bf16.msra.mxu0 %v1505
    %1775 = vmatprep.subr.bf16.mxu0 %v1512
    %1776 = vmatpush1.bf16.msra.mxu0 %v1511
    %1777 = vmatprep.subr.bf16.mxu0 %v1518
    %1778 = vmatpush1.bf16.msra.mxu0 %v1517
    %1779 = vmatprep.subr.bf16.mxu0 %v1524
    %1780 = vmatpush1.bf16.msra.mxu0 %v1523
    %1781 = vmatprep.subr.bf16.mxu0 %v1530
    %1782 = vmatpush1.bf16.msra.mxu0 %v1529
    %1783 = vmatprep.subr.bf16.mxu0 %v1536
    %1784 = vmatpush1.bf16.msra.mxu0 %v1535
    %1785 = vmatprep.subr.bf16.mxu0 %v1542
    %1786 = vmatpush1.bf16.msra.mxu0 %v1541
    %1787 = vmatprep.subr.bf16.mxu0 %v1548
    %1788 = vmatpush1.bf16.msra.mxu0 %v1547
    %1789 = vmatprep.subr.bf16.mxu0 %v1554
    %1790 = vmatpush1.bf16.msra.mxu0 %v1553
    %1791 = vmatprep.subr.bf16.mxu0 %v1560
    %1792 = vmatpush1.bf16.msra.mxu0 %v1559
    %1793 = vmatprep.subr.bf16.mxu0 %v1566
    %1794 = vmatpush1.bf16.msra.mxu0 %v1565
    %1795 = vmatprep.mubr.bf16.mxu0 %v865
    %1796 = vmatmul.mubr.bf16.gmra.mrb[0].mxu0 %v864
    %v1797 = vpop.f32.mrb[0].mxu0
    %v1798 = vadd.f32 %v1016, %v1797
    %v1799 = vpop.f32.mrb[0].mxu0
    %v1800 = vadd.f32 %v1020, %v1799
    %v1801 = vpop.f32.mrb[0].mxu0
    %v1802 = vpop.f32.mrb[0].mxu0
    %1803 = vdwg.mxu0
    %1804 = vmatprep.subr.bf16.mxu0 %v1572
    %1805 = vmatpush1.bf16.msra.mxu0 %v1571
    %1806 = vmatprep.subr.bf16.mxu0 %v1578
    %1807 = vmatpush1.bf16.msra.mxu0 %v1577
    %1808 = vmatprep.subr.bf16.mxu0 %v1584
    %1809 = vmatpush1.bf16.msra.mxu0 %v1583
    %1810 = vmatprep.subr.bf16.mxu0 %v1590
    %1811 = vmatpush1.bf16.msra.mxu0 %v1589
    %1812 = vmatprep.subr.bf16.mxu0 %v1596
    %1813 = vmatpush1.bf16.msra.mxu0 %v1595
    %1814 = vmatprep.subr.bf16.mxu0 %v1602
    %1815 = vmatpush1.bf16.msra.mxu0 %v1601
    %1816 = vmatprep.subr.bf16.mxu0 %v1608
    %1817 = vmatpush1.bf16.msra.mxu0 %v1607
    %1818 = vmatprep.subr.bf16.mxu0 %v1614
    %1819 = vmatpush1.bf16.msra.mxu0 %v1613
    %1820 = vmatprep.subr.bf16.mxu0 0
    %1821 = vmatpush1.bf16.msra.mxu0 0
    %1822 = vmatprep.subr.bf16.mxu0 0
    %1823 = vmatpush1.bf16.msra.mxu0 0
    %1824 = vmatprep.subr.bf16.mxu0 0
    %1825 = vmatpush1.bf16.msra.mxu0 0
    %1826 = vmatprep.subr.bf16.mxu0 0
    %1827 = vmatpush1.bf16.msra.mxu0 0
    %1828 = vmatprep.subr.bf16.mxu0 0
    %1829 = vmatpush1.bf16.msra.mxu0 0
    %1830 = vmatprep.subr.bf16.mxu0 0
    %1831 = vmatpush1.bf16.msra.mxu0 0
    %1832 = vmatprep.subr.bf16.mxu0 0
    %1833 = vmatpush1.bf16.msra.mxu0 0
    %1834 = vmatprep.subr.bf16.mxu0 0
    %1835 = vmatpush1.bf16.msra.mxu0 0
    %1836 = vmatprep.mubr.bf16.mxu0 0
    %1837 = vmatmul.mubr.bf16.gmra.mrb[0].mxu0 %v866
    %v1838 = vpop.f32.mrb[0].mxu0
    %v1839 = vadd.f32 %v1798, %v1838
    %v1840 = vpop.f32.mrb[0].mxu0
    %v1841 = vadd.f32 %v1800, %v1840
    %v1842 = vpop.f32.mrb[0].mxu0
    %v1843 = vpop.f32.mrb[0].mxu0
    %1844 = vdwg.mxu0
    %1845 = vmatprep.subr.bf16.mxu0 %v1478
    %1846 = vmatpush1.bf16.msra.mxu0 %v1477
    %1847 = vmatprep.subr.bf16.mxu0 %v1484
    %1848 = vmatpush1.bf16.msra.mxu0 %v1483
    %1849 = vmatprep.subr.bf16.mxu0 %v1490
    %1850 = vmatpush1.bf16.msra.mxu0 %v1489
    %1851 = vmatprep.subr.bf16.mxu0 %v1496
    %1852 = vmatpush1.bf16.msra.mxu0 %v1495
    %1853 = vmatprep.subr.bf16.mxu0 %v1502
    %1854 = vmatpush1.bf16.msra.mxu0 %v1501
    %1855 = vmatprep.subr.bf16.mxu0 %v1508
    %1856 = vmatpush1.bf16.msra.mxu0 %v1507
    %1857 = vmatprep.subr.bf16.mxu0 %v1514
    %1858 = vmatpush1.bf16.msra.mxu0 %v1513
    %1859 = vmatprep.subr.bf16.mxu0 %v1520
    %1860 = vmatpush1.bf16.msra.mxu0 %v1519
    %1861 = vmatprep.subr.bf16.mxu0 %v1526
    %1862 = vmatpush1.bf16.msra.mxu0 %v1525
    %1863 = vmatprep.subr.bf16.mxu0 %v1532
    %1864 = vmatpush1.bf16.msra.mxu0 %v1531
    %1865 = vmatprep.subr.bf16.mxu0 %v1538
    %1866 = vmatpush1.bf16.msra.mxu0 %v1537
    %1867 = vmatprep.subr.bf16.mxu0 %v1544
    %1868 = vmatpush1.bf16.msra.mxu0 %v1543
    %1869 = vmatprep.subr.bf16.mxu0 %v1550
    %1870 = vmatpush1.bf16.msra.mxu0 %v1549
    %1871 = vmatprep.subr.bf16.mxu0 %v1556
    %1872 = vmatpush1.bf16.msra.mxu0 %v1555
    %1873 = vmatprep.subr.bf16.mxu0 %v1562
    %1874 = vmatpush1.bf16.msra.mxu0 %v1561
    %1875 = vmatprep.subr.bf16.mxu0 %v1568
    %1876 = vmatpush1.bf16.msra.mxu0 %v1567
    %1877 = vmatprep.mubr.bf16.mxu0 %v865
    %1878 = vmatmul.mubr.bf16.gmra.mrb[0].mxu0 %v864
    %v1879 = vpop.f32.mrb[0].mxu0
    %v1880 = vadd.f32 %v1024, %v1879
    %v1881 = vpop.f32.mrb[0].mxu0
    %v1882 = vadd.f32 %v1028, %v1881
    %v1883 = vpop.f32.mrb[0].mxu0
    %v1884 = vpop.f32.mrb[0].mxu0
    %1885 = vdwg.mxu0
    %1886 = vmatprep.subr.bf16.mxu0 %v1574
    %1887 = vmatpush1.bf16.msra.mxu0 %v1573
    %1888 = vmatprep.subr.bf16.mxu0 %v1580
    %1889 = vmatpush1.bf16.msra.mxu0 %v1579
    %1890 = vmatprep.subr.bf16.mxu0 %v1586
    %1891 = vmatpush1.bf16.msra.mxu0 %v1585
    %1892 = vmatprep.subr.bf16.mxu0 %v1592
    %1893 = vmatpush1.bf16.msra.mxu0 %v1591
    %1894 = vmatprep.subr.bf16.mxu0 %v1598
    %1895 = vmatpush1.bf16.msra.mxu0 %v1597
    %1896 = vmatprep.subr.bf16.mxu0 %v1604
    %1897 = vmatpush1.bf16.msra.mxu0 %v1603
    %1898 = vmatprep.subr.bf16.mxu0 %v1610
    %1899 = vmatpush1.bf16.msra.mxu0 %v1609
    %1900 = vmatprep.subr.bf16.mxu0 %v1616
    %1901 = vmatpush1.bf16.msra.mxu0 %v1615
    %1902 = vmatprep.subr.bf16.mxu0 0
    %1903 = vmatpush1.bf16.msra.mxu0 0
    %1904 = vmatprep.subr.bf16.mxu0 0
    %1905 = vmatpush1.bf16.msra.mxu0 0
    %1906 = vmatprep.subr.bf16.mxu0 0
    %1907 = vmatpush1.bf16.msra.mxu0 0
    %1908 = vmatprep.subr.bf16.mxu0 0
    %1909 = vmatpush1.bf16.msra.mxu0 0
    %1910 = vmatprep.subr.bf16.mxu0 0
    %1911 = vmatpush1.bf16.msra.mxu0 0
    %1912 = vmatprep.subr.bf16.mxu0 0
    %1913 = vmatpush1.bf16.msra.mxu0 0
    %1914 = vmatprep.subr.bf16.mxu0 0
    %1915 = vmatpush1.bf16.msra.mxu0 0
    %1916 = vmatprep.subr.bf16.mxu0 0
    %1917 = vmatpush1.bf16.msra.mxu0 0
    %1918 = vmatprep.mubr.bf16.mxu0 0
    %1919 = vmatmul.mubr.bf16.gmra.mrb[0].mxu0 %v866
    %v1920 = vpop.f32.mrb[0].mxu0
    %v1921 = vadd.f32 %v1880, %v1920
    %v1922 = vpop.f32.mrb[0].mxu0
    %v1923 = vadd.f32 %v1882, %v1922
    %v1924 = vpop.f32.mrb[0].mxu0
    %v1925 = vpop.f32.mrb[0].mxu0
    %1926 = vdwg.mxu0
    %1927 = vmatprep.subr.bf16.mxu0 %v1480
    %1928 = vmatpush1.bf16.msra.mxu0 %v1479
    %1929 = vmatprep.subr.bf16.mxu0 %v1486
    %1930 = vmatpush1.bf16.msra.mxu0 %v1485
    %1931 = vmatprep.subr.bf16.mxu0 %v1492
    %1932 = vmatpush1.bf16.msra.mxu0 %v1491
    %1933 = vmatprep.subr.bf16.mxu0 %v1498
    %1934 = vmatpush1.bf16.msra.mxu0 %v1497
    %1935 = vmatprep.subr.bf16.mxu0 %v1504
    %1936 = vmatpush1.bf16.msra.mxu0 %v1503
    %1937 = vmatprep.subr.bf16.mxu0 %v1510
    %1938 = vmatpush1.bf16.msra.mxu0 %v1509
    %1939 = vmatprep.subr.bf16.mxu0 %v1516
    %1940 = vmatpush1.bf16.msra.mxu0 %v1515
    %1941 = vmatprep.subr.bf16.mxu0 %v1522
    %1942 = vmatpush1.bf16.msra.mxu0 %v1521
    %1943 = vmatprep.subr.bf16.mxu0 %v1528
    %1944 = vmatpush1.bf16.msra.mxu0 %v1527
    %1945 = vmatprep.subr.bf16.mxu0 %v1534
    %1946 = vmatpush1.bf16.msra.mxu0 %v1533
    %1947 = vmatprep.subr.bf16.mxu0 %v1540
    %1948 = vmatpush1.bf16.msra.mxu0 %v1539
    %1949 = vmatprep.subr.bf16.mxu0 %v1546
    %1950 = vmatpush1.bf16.msra.mxu0 %v1545
    %1951 = vmatprep.subr.bf16.mxu0 %v1552
    %1952 = vmatpush1.bf16.msra.mxu0 %v1551
    %1953 = vmatprep.subr.bf16.mxu0 %v1558
    %1954 = vmatpush1.bf16.msra.mxu0 %v1557
    %1955 = vmatprep.subr.bf16.mxu0 %v1564
    %1956 = vmatpush1.bf16.msra.mxu0 %v1563
    %1957 = vmatprep.subr.bf16.mxu0 %v1570
    %1958 = vmatpush1.bf16.msra.mxu0 %v1569
    %1959 = vmatprep.mubr.bf16.mxu0 %v865
    %1960 = vmatmul.mubr.bf16.gmra.mrb[0].mxu0 %v864
    %v1961 = vpop.f32.mrb[0].mxu0
    %v1962 = vadd.f32 %v1032, %v1961
    %v1963 = vpop.f32.mrb[0].mxu0
    %v1964 = vadd.f32 %v1036, %v1963
    %v1965 = vpop.f32.mrb[0].mxu0
    %v1966 = vpop.f32.mrb[0].mxu0
    %1967 = vdwg.mxu0
    %1968 = vmatprep.subr.bf16.mxu0 %v1576
    %1969 = vmatpush1.bf16.msra.mxu0 %v1575
    %1970 = vmatprep.subr.bf16.mxu0 %v1582
    %1971 = vmatpush1.bf16.msra.mxu0 %v1581
    %1972 = vmatprep.subr.bf16.mxu0 %v1588
    %1973 = vmatpush1.bf16.msra.mxu0 %v1587
    %1974 = vmatprep.subr.bf16.mxu0 %v1594
    %1975 = vmatpush1.bf16.msra.mxu0 %v1593
    %1976 = vmatprep.subr.bf16.mxu0 %v1600
    %1977 = vmatpush1.bf16.msra.mxu0 %v1599
    %1978 = vmatprep.subr.bf16.mxu0 %v1606
    %1979 = vmatpush1.bf16.msra.mxu0 %v1605
    %1980 = vmatprep.subr.bf16.mxu0 %v1612
    %1981 = vmatpush1.bf16.msra.mxu0 %v1611
    %1982 = vmatprep.subr.bf16.mxu0 %v1618
    %1983 = vmatpush1.bf16.msra.mxu0 %v1617
    %1984 = vmatprep.subr.bf16.mxu0 0
    %1985 = vmatpush1.bf16.msra.mxu0 0
    %1986 = vmatprep.subr.bf16.mxu0 0
    %1987 = vmatpush1.bf16.msra.mxu0 0
    %1988 = vmatprep.subr.bf16.mxu0 0
    %1989 = vmatpush1.bf16.msra.mxu0 0
    %1990 = vmatprep.subr.bf16.mxu0 0
    %1991 = vmatpush1.bf16.msra.mxu0 0
    %1992 = vmatprep.subr.bf16.mxu0 0
    %1993 = vmatpush1.bf16.msra.mxu0 0
    %1994 = vmatprep.subr.bf16.mxu0 0
    %1995 = vmatpush1.bf16.msra.mxu0 0
    %1996 = vmatprep.subr.bf16.mxu0 0
    %1997 = vmatpush1.bf16.msra.mxu0 0
    %1998 = vmatprep.subr.bf16.mxu0 0
    %1999 = vmatpush1.bf16.msra.mxu0 0
    %2000 = vmatprep.mubr.bf16.mxu0 0
    %2001 = vmatmul.mubr.bf16.gmra.mrb[0].mxu0 %v866
    %v2002 = vpop.f32.mrb[0].mxu0
    %v2003 = vadd.f32 %v1962, %v2002
    %v2004 = vpop.f32.mrb[0].mxu0
    %v2005 = vadd.f32 %v1964, %v2004
    %v2006 = vpop.f32.mrb[0].mxu0
    %v2007 = vpop.f32.mrb[0].mxu0
    %2008 = vdwg.mxu0
    %v2009 = vmax.f32 %v1839, 0.0
    %v2010 = vmax.f32 %v1841, 0.0
    %v2011 = vmax.f32 %v1921, 0.0
    %v2012 = vmax.f32 %v1923, 0.0
    %v2013 = vmax.f32 %v2003, 0.0
    %v2014 = vmax.f32 %v2005, 0.0
    %v2015 = vpack.c.bf16 %v2009, %v2009
    %v2016 = vpack.c.bf16 %v2010, %v2010
    %v2017 = vpack.c.bf16 %v2011, %v2011
    %v2018 = vpack.c.bf16 %v2012, %v2012
    %v2019 = vpack.c.bf16 %v2013, %v2013
    %v2020 = vpack.c.bf16 %v2014, %v2014
    %v2021 = vld [vmem:[%s16] sm:$0xff]
    %v2022 = vld [vmem:[%s16 + $0x8] sm:$0xf]
    %v2023 = vld [vmem:[%s16 + $0xc] sm:$0xff]
    %v2024 = vld [vmem:[%s16 + $0x14] sm:$0xf]
    %v2025 = vld [vmem:[%s16 + $0x18] sm:$0xff]
    %v2026 = vld [vmem:[%s16 + $0x20] sm:$0xf]
    %v2027 = vld [vmem:[%s16 + $0x24] sm:$0xff]
    %v2028 = vld [vmem:[%s16 + $0x2c] sm:$0xf]
    %v2029 = vld [vmem:[%s16 + $0x30] sm:$0xff]
    %v2030 = vld [vmem:[%s16 + $0x38] sm:$0xf]
    %v2031 = vld [vmem:[%s16 + $0x3c] sm:$0xff]
    %v2032 = vld [vmem:[%s16 + $0x44] sm:$0xf]
    %v2033 = vld [vmem:[%s16 + $0x48] sm:$0xff]
    %v2034 = vld [vmem:[%s16 + $0x50] sm:$0xf]
    %v2035 = vld [vmem:[%s16 + $0x54] sm:$0xff]
    %v2036 = vld [vmem:[%s16 + $0x5c] sm:$0xf]
    %v2037 = vld [vmem:[%s16 + $0x60] sm:$0xff]
    %v2038 = vld [vmem:[%s16 + $0x68] sm:$0xf]
    %v2039 = vld [vmem:[%s16 + $0x6c] sm:$0xff]
    %v2040 = vld [vmem:[%s16 + $0x74] sm:$0xf]
    %v2041 = vld [vmem:[%s16 + $0x78] sm:$0xff]
    %v2042 = vld [vmem:[%s16 + $0x80] sm:$0xf]
    %v2043 = vld [vmem:[%s16 + $0x84] sm:$0xff]
    %v2044 = vld [vmem:[%s16 + $0x8c] sm:$0xf]
    %v2045 = vld [vmem:[%s16 + $0x90] sm:$0xff]
    %v2046 = vld [vmem:[%s16 + $0x98] sm:$0xf]
    %v2047 = vld [vmem:[%s16 + $0x9c] sm:$0xff]
    %v2048 = vld [vmem:[%s16 + $0xa4] sm:$0xf]
    %v2049 = vld [vmem:[%s16 + $0xa8] sm:$0xff]
    %v2050 = vld [vmem:[%s16 + $0xb0] sm:$0xf]
    %v2051 = vld [vmem:[%s16 + $0xb4] sm:$0xff]
    %v2052 = vld [vmem:[%s16 + $0xbc] sm:$0xf]
    %v2053 = vld [vmem:[%s16 + $0xc0] sm:$0xff]
    %v2054 = vld [vmem:[%s16 + $0xc8] sm:$0xf]
    %v2055 = vld [vmem:[%s16 + $0xcc] sm:$0xff]
    %v2056 = vld [vmem:[%s16 + $0xd4] sm:$0xf]
    %v2057 = vld [vmem:[%s16 + $0xd8] sm:$0xff]
    %v2058 = vld [vmem:[%s16 + $0xe0] sm:$0xf]
    %v2059 = vld [vmem:[%s16 + $0xe4] sm:$0xff]
    %v2060 = vld [vmem:[%s16 + $0xec] sm:$0xf]
    %v2061 = vld [vmem:[%s16 + $0xf0] sm:$0xff]
    %v2062 = vld [vmem:[%s16 + $0xf8] sm:$0xf]
    %v2063 = vld [vmem:[%s16 + $0xfc] sm:$0xff]
    %v2064 = vld [vmem:[%s16 + $0x104] sm:$0xf]
    %v2065 = vld [vmem:[%s16 + $0x108] sm:$0xff]
    %v2066 = vld [vmem:[%s16 + $0x110] sm:$0xf]
    %v2067 = vld [vmem:[%s16 + $0x114] sm:$0xff]
    %v2068 = vld [vmem:[%s16 + $0x11c] sm:$0xf]
    %v2069 = vld [vmem:[%s16 + $0x120] sm:$0xff]
    %v2070 = vld [vmem:[%s16 + $0x128] sm:$0xf]
    %v2071 = vld [vmem:[%s16 + $0x12c] sm:$0xff]
    %v2072 = vld [vmem:[%s16 + $0x134] sm:$0xf]
    %v2073 = vld [vmem:[%s16 + $0x138] sm:$0xff]
    %v2074 = vld [vmem:[%s16 + $0x140] sm:$0xf]
    %v2075 = vld [vmem:[%s16 + $0x144] sm:$0xff]
    %v2076 = vld [vmem:[%s16 + $0x14c] sm:$0xf]
    %v2077 = vld [vmem:[%s16 + $0x150] sm:$0xff]
    %v2078 = vld [vmem:[%s16 + $0x158] sm:$0xf]
    %v2079 = vld [vmem:[%s16 + $0x15c] sm:$0xff]
    %v2080 = vld [vmem:[%s16 + $0x164] sm:$0xf]
    %v2081 = vld [vmem:[%s16 + $0x168] sm:$0xff]
    %v2082 = vld [vmem:[%s16 + $0x170] sm:$0xf]
    %v2083 = vld [vmem:[%s16 + $0x174] sm:$0xff]
    %v2084 = vld [vmem:[%s16 + $0x17c] sm:$0xf]
    %v2085 = vld [vmem:[%s16 + $0x180] sm:$0xff]
    %v2086 = vld [vmem:[%s16 + $0x188] sm:$0xf]
    %v2087 = vld [vmem:[%s16 + $0x18c] sm:$0xff]
    %v2088 = vld [vmem:[%s16 + $0x194] sm:$0xf]
    %v2089 = vld [vmem:[%s16 + $0x198] sm:$0xff]
    %v2090 = vld [vmem:[%s16 + $0x1a0] sm:$0xf]
    %v2091 = vld [vmem:[%s16 + $0x1a4] sm:$0xff]
    %v2092 = vld [vmem:[%s16 + $0x1ac] sm:$0xf]
    %v2093 = vld [vmem:[%s16 + $0x1b0] sm:$0xff]
    %v2094 = vld [vmem:[%s16 + $0x1b8] sm:$0xf]
    %v2095 = vld [vmem:[%s16 + $0x1bc] sm:$0xff]
    %v2096 = vld [vmem:[%s16 + $0x1c4] sm:$0xf]
    %v2097 = vld [vmem:[%s16 + $0x1c8] sm:$0xff]
    %v2098 = vld [vmem:[%s16 + $0x1d0] sm:$0xf]
    %v2099 = vld [vmem:[%s16 + $0x1d4] sm:$0xff]
    %v2100 = vld [vmem:[%s16 + $0x1dc] sm:$0xf]
    %v2101 = vld [vmem:[%s16 + $0x1e0] sm:$0xff]
    %v2102 = vld [vmem:[%s16 + $0x1e8] sm:$0xf]
    %v2103 = vld [vmem:[%s16 + $0x1ec] sm:$0xff]
    %v2104 = vld [vmem:[%s16 + $0x1f4] sm:$0xf]
    %v2105 = vld [vmem:[%s16 + $0x1f8] sm:$0xff]
    %v2106 = vld [vmem:[%s16 + $0x200] sm:$0xf]
    %v2107 = vld [vmem:[%s16 + $0x204] sm:$0xff]
    %v2108 = vld [vmem:[%s16 + $0x20c] sm:$0xf]
    %v2109 = vld [vmem:[%s16 + $0x210] sm:$0xff]
    %v2110 = vld [vmem:[%s16 + $0x218] sm:$0xf]
    %v2111 = vld [vmem:[%s16 + $0x21c] sm:$0xff]
    %v2112 = vld [vmem:[%s16 + $0x224] sm:$0xf]
    %v2113 = vld [vmem:[%s16 + $0x228] sm:$0xff]
    %v2114 = vld [vmem:[%s16 + $0x230] sm:$0xf]
    %v2115 = vld [vmem:[%s16 + $0x234] sm:$0xff]
    %v2116 = vld [vmem:[%s16 + $0x23c] sm:$0xf]
    %v2117 = vld [vmem:[%s16 + $0x240] sm:$0xff]
    %v2118 = vld [vmem:[%s16 + $0x248] sm:$0xf]
    %v2119 = vld [vmem:[%s16 + $0x24c] sm:$0xff]
    %v2120 = vld [vmem:[%s16 + $0x254] sm:$0xf]
    %v2121 = vld [vmem:[%s16 + $0x258] sm:$0xff]
    %v2122 = vld [vmem:[%s16 + $0x260] sm:$0xf]
    %v2123 = vld [vmem:[%s16 + $0x264] sm:$0xff]
    %v2124 = vld [vmem:[%s16 + $0x26c] sm:$0xf]
    %v2125 = vld [vmem:[%s16 + $0x270] sm:$0xff]
    %v2126 = vld [vmem:[%s16 + $0x278] sm:$0xf]
    %v2127 = vld [vmem:[%s16 + $0x27c] sm:$0xff]
    %v2128 = vld [vmem:[%s16 + $0x284] sm:$0xf]
    %v2129 = vld [vmem:[%s16 + $0x288] sm:$0xff]
    %v2130 = vld [vmem:[%s16 + $0x290] sm:$0xf]
    %v2131 = vld [vmem:[%s16 + $0x294] sm:$0xff]
    %v2132 = vld [vmem:[%s16 + $0x29c] sm:$0xf]
    %v2133 = vld [vmem:[%s16 + $0x2a0] sm:$0xff]
    %v2134 = vld [vmem:[%s16 + $0x2a8] sm:$0xf]
    %v2135 = vld [vmem:[%s16 + $0x2ac] sm:$0xff]
    %v2136 = vld [vmem:[%s16 + $0x2b4] sm:$0xf]
    %v2137 = vld [vmem:[%s16 + $0x2b8] sm:$0xff]
    %v2138 = vld [vmem:[%s16 + $0x2c0] sm:$0xf]
    %v2139 = vld [vmem:[%s16 + $0x2c4] sm:$0xff]
    %v2140 = vld [vmem:[%s16 + $0x2cc] sm:$0xf]
    %v2141 = vld [vmem:[%s16 + $0x2d0] sm:$0xff]
    %v2142 = vld [vmem:[%s16 + $0x2d8] sm:$0xf]
    %v2143 = vld [vmem:[%s16 + $0x2dc] sm:$0xff]
    %v2144 = vld [vmem:[%s16 + $0x2e4] sm:$0xf]
    %v2145 = vld [vmem:[%s16 + $0x2e8] sm:$0xff]
    %v2146 = vld [vmem:[%s16 + $0x2f0] sm:$0xf]
    %v2147 = vld [vmem:[%s16 + $0x2f4] sm:$0xff]
    %v2148 = vld [vmem:[%s16 + $0x2fc] sm:$0xf]
    %v2149 = vld [vmem:[%s16 + $0x300] sm:$0xff]
    %v2150 = vld [vmem:[%s16 + $0x308] sm:$0xf]
    %v2151 = vld [vmem:[%s16 + $0x30c] sm:$0xff]
    %v2152 = vld [vmem:[%s16 + $0x314] sm:$0xf]
    %v2153 = vld [vmem:[%s16 + $0x318] sm:$0xff]
    %v2154 = vld [vmem:[%s16 + $0x320] sm:$0xf]
    %v2155 = vld [vmem:[%s16 + $0x324] sm:$0xff]
    %v2156 = vld [vmem:[%s16 + $0x32c] sm:$0xf]
    %v2157 = vld [vmem:[%s16 + $0x330] sm:$0xff]
    %v2158 = vld [vmem:[%s16 + $0x338] sm:$0xf]
    %v2159 = vld [vmem:[%s16 + $0x33c] sm:$0xff]
    %v2160 = vld [vmem:[%s16 + $0x344] sm:$0xf]
    %v2161 = vld [vmem:[%s16 + $0x348] sm:$0xff]
    %v2162 = vld [vmem:[%s16 + $0x350] sm:$0xf]
    %v2163 = vld [vmem:[%s16 + $0x354] sm:$0xff]
    %v2164 = vld [vmem:[%s16 + $0x35c] sm:$0xf]
    %v2165 = vld [vmem:[%s16 + $0x360] sm:$0xff]
    %v2166 = vld [vmem:[%s16 + $0x368] sm:$0xf]
    %v2167 = vld [vmem:[%s16 + $0x36c] sm:$0xff]
    %v2168 = vld [vmem:[%s16 + $0x374] sm:$0xf]
    %v2169 = vld [vmem:[%s16 + $0x378] sm:$0xff]
    %v2170 = vld [vmem:[%s16 + $0x380] sm:$0xf]
    %v2171 = vld [vmem:[%s16 + $0x384] sm:$0xff]
    %v2172 = vld [vmem:[%s16 + $0x38c] sm:$0xf]
    %v2173 = vld [vmem:[%s16 + $0x390] sm:$0xff]
    %v2174 = vld [vmem:[%s16 + $0x398] sm:$0xf]
    %v2175 = vld [vmem:[%s16 + $0x39c] sm:$0xff]
    %v2176 = vld [vmem:[%s16 + $0x3a4] sm:$0xf]
    %v2177 = vld [vmem:[%s16 + $0x3a8] sm:$0xff]
    %v2178 = vld [vmem:[%s16 + $0x3b0] sm:$0xf]
    %v2179 = vld [vmem:[%s16 + $0x3b4] sm:$0xff]
    %v2180 = vld [vmem:[%s16 + $0x3bc] sm:$0xf]
    %v2181 = vld [vmem:[%s16 + $0x3c0] sm:$0xff]
    %v2182 = vld [vmem:[%s16 + $0x3c8] sm:$0xf]
    %v2183 = vld [vmem:[%s16 + $0x3cc] sm:$0xff]
    %v2184 = vld [vmem:[%s16 + $0x3d4] sm:$0xf]
    %v2185 = vld [vmem:[%s16 + $0x3d8] sm:$0xff]
    %v2186 = vld [vmem:[%s16 + $0x3e0] sm:$0xf]
    %v2187 = vld [vmem:[%s16 + $0x3e4] sm:$0xff]
    %v2188 = vld [vmem:[%s16 + $0x3ec] sm:$0xf]
    %v2189 = vld [vmem:[%s16 + $0x3f0] sm:$0xff]
    %v2190 = vld [vmem:[%s16 + $0x3f8] sm:$0xf]
    %v2191 = vld [vmem:[%s16 + $0x3fc] sm:$0xff]
    %v2192 = vld [vmem:[%s16 + $0x404] sm:$0xf]
    %v2193 = vld [vmem:[%s16 + $0x408] sm:$0xff]
    %v2194 = vld [vmem:[%s16 + $0x410] sm:$0xf]
    %v2195 = vld [vmem:[%s16 + $0x414] sm:$0xff]
    %v2196 = vld [vmem:[%s16 + $0x41c] sm:$0xf]
    %v2197 = vld [vmem:[%s16 + $0x420] sm:$0xff]
    %v2198 = vld [vmem:[%s16 + $0x428] sm:$0xf]
    %v2199 = vld [vmem:[%s16 + $0x42c] sm:$0xff]
    %v2200 = vld [vmem:[%s16 + $0x434] sm:$0xf]
    %v2201 = vld [vmem:[%s16 + $0x438] sm:$0xff]
    %v2202 = vld [vmem:[%s16 + $0x440] sm:$0xf]
    %v2203 = vld [vmem:[%s16 + $0x444] sm:$0xff]
    %v2204 = vld [vmem:[%s16 + $0x44c] sm:$0xf]
    %v2205 = vld [vmem:[%s16 + $0x450] sm:$0xff]
    %v2206 = vld [vmem:[%s16 + $0x458] sm:$0xf]
    %v2207 = vld [vmem:[%s16 + $0x45c] sm:$0xff]
    %v2208 = vld [vmem:[%s16 + $0x464] sm:$0xf]
    %v2209 = vld [vmem:[%s16 + $0x468] sm:$0xff]
    %v2210 = vld [vmem:[%s16 + $0x470] sm:$0xf]
    %v2211 = vld [vmem:[%s16 + $0x474] sm:$0xff]
    %v2212 = vld [vmem:[%s16 + $0x47c] sm:$0xf]
    %v2213 = vld [vmem:[%s17] sm:$0x7]
    %v2215 = vlaneseq
    %v2216 = vshrl.u32 %v2215, 7
    %v2217 = vsub.s32 0, %v2216
    %v2218 = vrot.slane %v2213, %v2217
    %v2219 = vlaneseq
    %v2220 = vshrl.u32 %v2219, 7
    %v2221 = vsub.s32 1, %v2220
    %v2222 = vrot.slane %v2213, %v2221
    %v2223 = vlaneseq
    %v2224 = vshrl.u32 %v2223, 7
    %v2225 = vsub.s32 2, %v2224
    %v2226 = vrot.slane %v2213, %v2225
    %v2422 = vunpack.c.l.b16 %v2021
    %v2423 = vunpack.c.h.b16 %v2021
    %v2424 = vunpack.c.l.b16 %v2022
    %v2425 = vunpack.c.l.b16 %v2023
    %v2426 = vunpack.c.h.b16 %v2023
    %v2427 = vunpack.c.l.b16 %v2024
    %v2428 = vunpack.c.l.b16 %v2025
    %v2429 = vunpack.c.h.b16 %v2025
    %v2430 = vunpack.c.l.b16 %v2026
    %v2431 = vunpack.c.l.b16 %v2027
    %v2432 = vunpack.c.h.b16 %v2027
    %v2433 = vunpack.c.l.b16 %v2028
    %v2434 = vunpack.c.l.b16 %v2029
    %v2435 = vunpack.c.h.b16 %v2029
    %v2436 = vunpack.c.l.b16 %v2030
    %v2437 = vunpack.c.l.b16 %v2031
    %v2438 = vunpack.c.h.b16 %v2031
    %v2439 = vunpack.c.l.b16 %v2032
    %v2440 = vunpack.c.l.b16 %v2033
    %v2441 = vunpack.c.h.b16 %v2033
    %v2442 = vunpack.c.l.b16 %v2034
    %v2443 = vunpack.c.l.b16 %v2035
    %v2444 = vunpack.c.h.b16 %v2035
    %v2445 = vunpack.c.l.b16 %v2036
    %v2446 = vunpack.c.l.b16 %v2037
    %v2447 = vunpack.c.h.b16 %v2037
    %v2448 = vunpack.c.l.b16 %v2038
    %v2449 = vunpack.c.l.b16 %v2039
    %v2450 = vunpack.c.h.b16 %v2039
    %v2451 = vunpack.c.l.b16 %v2040
    %v2452 = vunpack.c.l.b16 %v2041
    %v2453 = vunpack.c.h.b16 %v2041
    %v2454 = vunpack.c.l.b16 %v2042
    %v2455 = vunpack.c.l.b16 %v2043
    %v2456 = vunpack.c.h.b16 %v2043
    %v2457 = vunpack.c.l.b16 %v2044
    %v2458 = vunpack.c.l.b16 %v2045
    %v2459 = vunpack.c.h.b16 %v2045
    %v2460 = vunpack.c.l.b16 %v2046
    %v2461 = vunpack.c.l.b16 %v2047
    %v2462 = vunpack.c.h.b16 %v2047
    %v2463 = vunpack.c.l.b16 %v2048
    %v2464 = vunpack.c.l.b16 %v2049
    %v2465 = vunpack.c.h.b16 %v2049
    %v2466 = vunpack.c.l.b16 %v2050
    %v2467 = vunpack.c.l.b16 %v2051
    %v2468 = vunpack.c.h.b16 %v2051
    %v2469 = vunpack.c.l.b16 %v2052
    %v2470 = vunpack.c.l.b16 %v2053
    %v2471 = vunpack.c.h.b16 %v2053
    %v2472 = vunpack.c.l.b16 %v2054
    %v2473 = vunpack.c.l.b16 %v2055
    %v2474 = vunpack.c.h.b16 %v2055
    %v2475 = vunpack.c.l.b16 %v2056
    %v2476 = vunpack.c.l.b16 %v2057
    %v2477 = vunpack.c.h.b16 %v2057
    %v2478 = vunpack.c.l.b16 %v2058
    %v2479 = vunpack.c.l.b16 %v2059
    %v2480 = vunpack.c.h.b16 %v2059
    %v2481 = vunpack.c.l.b16 %v2060
    %v2482 = vunpack.c.l.b16 %v2061
    %v2483 = vunpack.c.h.b16 %v2061
    %v2484 = vunpack.c.l.b16 %v2062
    %v2485 = vunpack.c.l.b16 %v2063
    %v2486 = vunpack.c.h.b16 %v2063
    %v2487 = vunpack.c.l.b16 %v2064
    %v2488 = vunpack.c.l.b16 %v2065
    %v2489 = vunpack.c.h.b16 %v2065
    %v2490 = vunpack.c.l.b16 %v2066
    %v2491 = vunpack.c.l.b16 %v2067
    %v2492 = vunpack.c.h.b16 %v2067
    %v2493 = vunpack.c.l.b16 %v2068
    %v2494 = vunpack.c.l.b16 %v2069
    %v2495 = vunpack.c.h.b16 %v2069
    %v2496 = vunpack.c.l.b16 %v2070
    %v2497 = vunpack.c.l.b16 %v2071
    %v2498 = vunpack.c.h.b16 %v2071
    %v2499 = vunpack.c.l.b16 %v2072
    %v2500 = vunpack.c.l.b16 %v2073
    %v2501 = vunpack.c.h.b16 %v2073
    %v2502 = vunpack.c.l.b16 %v2074
    %v2503 = vunpack.c.l.b16 %v2075
    %v2504 = vunpack.c.h.b16 %v2075
    %v2505 = vunpack.c.l.b16 %v2076
    %v2506 = vunpack.c.l.b16 %v2077
    %v2507 = vunpack.c.h.b16 %v2077
    %v2508 = vunpack.c.l.b16 %v2078
    %v2509 = vunpack.c.l.b16 %v2079
    %v2510 = vunpack.c.h.b16 %v2079
    %v2511 = vunpack.c.l.b16 %v2080
    %v2512 = vunpack.c.l.b16 %v2081
    %v2513 = vunpack.c.h.b16 %v2081
    %v2514 = vunpack.c.l.b16 %v2082
    %v2515 = vunpack.c.l.b16 %v2083
    %v2516 = vunpack.c.h.b16 %v2083
    %v2517 = vunpack.c.l.b16 %v2084
    %v2518 = vunpack.c.l.b16 %v2085
    %v2519 = vunpack.c.h.b16 %v2085
    %v2520 = vunpack.c.l.b16 %v2086
    %v2521 = vunpack.c.l.b16 %v2087
    %v2522 = vunpack.c.h.b16 %v2087
    %v2523 = vunpack.c.l.b16 %v2088
    %v2524 = vunpack.c.l.b16 %v2089
    %v2525 = vunpack.c.h.b16 %v2089
    %v2526 = vunpack.c.l.b16 %v2090
    %v2527 = vunpack.c.l.b16 %v2091
    %v2528 = vunpack.c.h.b16 %v2091
    %v2529 = vunpack.c.l.b16 %v2092
    %v2530 = vunpack.c.l.b16 %v2093
    %v2531 = vunpack.c.h.b16 %v2093
    %v2532 = vunpack.c.l.b16 %v2094
    %v2533 = vunpack.c.l.b16 %v2095
    %v2534 = vunpack.c.h.b16 %v2095
    %v2535 = vunpack.c.l.b16 %v2096
    %v2536 = vunpack.c.l.b16 %v2097
    %v2537 = vunpack.c.h.b16 %v2097
    %v2538 = vunpack.c.l.b16 %v2098
    %v2539 = vunpack.c.l.b16 %v2099
    %v2540 = vunpack.c.h.b16 %v2099
    %v2541 = vunpack.c.l.b16 %v2100
    %v2542 = vunpack.c.l.b16 %v2101
    %v2543 = vunpack.c.h.b16 %v2101
    %v2544 = vunpack.c.l.b16 %v2102
    %v2545 = vunpack.c.l.b16 %v2103
    %v2546 = vunpack.c.h.b16 %v2103
    %v2547 = vunpack.c.l.b16 %v2104
    %v2548 = vunpack.c.l.b16 %v2105
    %v2549 = vunpack.c.h.b16 %v2105
    %v2550 = vunpack.c.l.b16 %v2106
    %v2551 = vunpack.c.l.b16 %v2107
    %v2552 = vunpack.c.h.b16 %v2107
    %v2553 = vunpack.c.l.b16 %v2108
    %v2554 = vunpack.c.l.b16 %v2109
    %v2555 = vunpack.c.h.b16 %v2109
    %v2556 = vunpack.c.l.b16 %v2110
    %v2557 = vunpack.c.l.b16 %v2111
    %v2558 = vunpack.c.h.b16 %v2111
    %v2559 = vunpack.c.l.b16 %v2112
    %v2560 = vunpack.c.l.b16 %v2113
    %v2561 = vunpack.c.h.b16 %v2113
    %v2562 = vunpack.c.l.b16 %v2114
    %v2563 = vunpack.c.l.b16 %v2115
    %v2564 = vunpack.c.h.b16 %v2115
    %v2565 = vunpack.c.l.b16 %v2116
    %v2566 = vunpack.c.l.b16 %v2117
    %v2567 = vunpack.c.h.b16 %v2117
    %v2568 = vunpack.c.l.b16 %v2118
    %v2569 = vunpack.c.l.b16 %v2119
    %v2570 = vunpack.c.h.b16 %v2119
    %v2571 = vunpack.c.l.b16 %v2120
    %v2572 = vunpack.c.l.b16 %v2121
    %v2573 = vunpack.c.h.b16 %v2121
    %v2574 = vunpack.c.l.b16 %v2122
    %v2575 = vunpack.c.l.b16 %v2123
    %v2576 = vunpack.c.h.b16 %v2123
    %v2577 = vunpack.c.l.b16 %v2124
    %v2578 = vunpack.c.l.b16 %v2125
    %v2579 = vunpack.c.h.b16 %v2125
    %v2580 = vunpack.c.l.b16 %v2126
    %v2581 = vunpack.c.l.b16 %v2127
    %v2582 = vunpack.c.h.b16 %v2127
    %v2583 = vunpack.c.l.b16 %v2128
    %v2584 = vunpack.c.l.b16 %v2129
    %v2585 = vunpack.c.h.b16 %v2129
    %v2586 = vunpack.c.l.b16 %v2130
    %v2587 = vunpack.c.l.b16 %v2131
    %v2588 = vunpack.c.h.b16 %v2131
    %v2589 = vunpack.c.l.b16 %v2132
    %v2590 = vunpack.c.l.b16 %v2133
    %v2591 = vunpack.c.h.b16 %v2133
    %v2592 = vunpack.c.l.b16 %v2134
    %v2593 = vunpack.c.l.b16 %v2135
    %v2594 = vunpack.c.h.b16 %v2135
    %v2595 = vunpack.c.l.b16 %v2136
    %v2596 = vunpack.c.l.b16 %v2137
    %v2597 = vunpack.c.h.b16 %v2137
    %v2598 = vunpack.c.l.b16 %v2138
    %v2599 = vunpack.c.l.b16 %v2139
    %v2600 = vunpack.c.h.b16 %v2139
    %v2601 = vunpack.c.l.b16 %v2140
    %v2602 = vunpack.c.l.b16 %v2141
    %v2603 = vunpack.c.h.b16 %v2141
    %v2604 = vunpack.c.l.b16 %v2142
    %v2605 = vunpack.c.l.b16 %v2143
    %v2606 = vunpack.c.h.b16 %v2143
    %v2607 = vunpack.c.l.b16 %v2144
    %v2608 = vunpack.c.l.b16 %v2145
    %v2609 = vunpack.c.h.b16 %v2145
    %v2610 = vunpack.c.l.b16 %v2146
    %v2611 = vunpack.c.l.b16 %v2147
    %v2612 = vunpack.c.h.b16 %v2147
    %v2613 = vunpack.c.l.b16 %v2148
    %v2614 = vunpack.c.l.b16 %v2149
    %v2615 = vunpack.c.h.b16 %v2149
    %v2616 = vunpack.c.l.b16 %v2150
    %v2617 = vunpack.c.l.b16 %v2151
    %v2618 = vunpack.c.h.b16 %v2151
    %v2619 = vunpack.c.l.b16 %v2152
    %v2620 = vunpack.c.l.b16 %v2153
    %v2621 = vunpack.c.h.b16 %v2153
    %v2622 = vunpack.c.l.b16 %v2154
    %v2623 = vunpack.c.l.b16 %v2155
    %v2624 = vunpack.c.h.b16 %v2155
    %v2625 = vunpack.c.l.b16 %v2156
    %v2626 = vunpack.c.l.b16 %v2157
    %v2627 = vunpack.c.h.b16 %v2157
    %v2628 = vunpack.c.l.b16 %v2158
    %v2629 = vunpack.c.l.b16 %v2159
    %v2630 = vunpack.c.h.b16 %v2159
    %v2631 = vunpack.c.l.b16 %v2160
    %v2632 = vunpack.c.l.b16 %v2161
    %v2633 = vunpack.c.h.b16 %v2161
    %v2634 = vunpack.c.l.b16 %v2162
    %v2635 = vunpack.c.l.b16 %v2163
    %v2636 = vunpack.c.h.b16 %v2163
    %v2637 = vunpack.c.l.b16 %v2164
    %v2638 = vunpack.c.l.b16 %v2165
    %v2639 = vunpack.c.h.b16 %v2165
    %v2640 = vunpack.c.l.b16 %v2166
    %v2641 = vunpack.c.l.b16 %v2167
    %v2642 = vunpack.c.h.b16 %v2167
    %v2643 = vunpack.c.l.b16 %v2168
    %v2644 = vunpack.c.l.b16 %v2169
    %v2645 = vunpack.c.h.b16 %v2169
    %v2646 = vunpack.c.l.b16 %v2170
    %v2647 = vunpack.c.l.b16 %v2171
    %v2648 = vunpack.c.h.b16 %v2171
    %v2649 = vunpack.c.l.b16 %v2172
    %v2650 = vunpack.c.l.b16 %v2173
    %v2651 = vunpack.c.h.b16 %v2173
    %v2652 = vunpack.c.l.b16 %v2174
    %v2653 = vunpack.c.l.b16 %v2175
    %v2654 = vunpack.c.h.b16 %v2175
    %v2655 = vunpack.c.l.b16 %v2176
    %v2656 = vunpack.c.l.b16 %v2177
    %v2657 = vunpack.c.h.b16 %v2177
    %v2658 = vunpack.c.l.b16 %v2178
    %v2659 = vunpack.c.l.b16 %v2179
    %v2660 = vunpack.c.h.b16 %v2179
    %v2661 = vunpack.c.l.b16 %v2180
    %v2662 = vunpack.c.l.b16 %v2181
    %v2663 = vunpack.c.h.b16 %v2181
    %v2664 = vunpack.c.l.b16 %v2182
    %v2665 = vunpack.c.l.b16 %v2183
    %v2666 = vunpack.c.h.b16 %v2183
    %v2667 = vunpack.c.l.b16 %v2184
    %v2668 = vunpack.c.l.b16 %v2185
    %v2669 = vunpack.c.h.b16 %v2185
    %v2670 = vunpack.c.l.b16 %v2186
    %v2671 = vunpack.c.l.b16 %v2187
    %v2672 = vunpack.c.h.b16 %v2187
    %v2673 = vunpack.c.l.b16 %v2188
    %v2674 = vunpack.c.l.b16 %v2189
    %v2675 = vunpack.c.h.b16 %v2189
    %v2676 = vunpack.c.l.b16 %v2190
    %v2677 = vunpack.c.l.b16 %v2191
    %v2678 = vunpack.c.h.b16 %v2191
    %v2679 = vunpack.c.l.b16 %v2192
    %v2680 = vunpack.c.l.b16 %v2193
    %v2681 = vunpack.c.h.b16 %v2193
    %v2682 = vunpack.c.l.b16 %v2194
    %v2683 = vunpack.c.l.b16 %v2195
    %v2684 = vunpack.c.h.b16 %v2195
    %v2685 = vunpack.c.l.b16 %v2196
    %v2686 = vunpack.c.l.b16 %v2197
    %v2687 = vunpack.c.h.b16 %v2197
    %v2688 = vunpack.c.l.b16 %v2198
    %v2689 = vunpack.c.l.b16 %v2199
    %v2690 = vunpack.c.h.b16 %v2199
    %v2691 = vunpack.c.l.b16 %v2200
    %v2692 = vunpack.c.l.b16 %v2201
    %v2693 = vunpack.c.h.b16 %v2201
    %v2694 = vunpack.c.l.b16 %v2202
    %v2695 = vunpack.c.l.b16 %v2203
    %v2696 = vunpack.c.h.b16 %v2203
    %v2697 = vunpack.c.l.b16 %v2204
    %v2698 = vunpack.c.l.b16 %v2205
    %v2699 = vunpack.c.h.b16 %v2205
    %v2700 = vunpack.c.l.b16 %v2206
    %v2701 = vunpack.c.l.b16 %v2207
    %v2702 = vunpack.c.h.b16 %v2207
    %v2703 = vunpack.c.l.b16 %v2208
    %v2704 = vunpack.c.l.b16 %v2209
    %v2705 = vunpack.c.h.b16 %v2209
    %v2706 = vunpack.c.l.b16 %v2210
    %v2707 = vunpack.c.l.b16 %v2211
    %v2708 = vunpack.c.h.b16 %v2211
    %v2709 = vunpack.c.l.b16 %v2212
    %v2710 = vpack.c.b16 %v2425, %v2422
    %v2711 = vpack.c.b16 %v2426, %v2423
    %v2712 = vpack.c.b16 %v2427, %v2424
    %v2713 = vpack.c.b16 %v2431, %v2428
    %v2714 = vpack.c.b16 %v2432, %v2429
    %v2715 = vpack.c.b16 %v2433, %v2430
    %v2716 = vpack.c.b16 %v2437, %v2434
    %v2717 = vpack.c.b16 %v2438, %v2435
    %v2718 = vpack.c.b16 %v2439, %v2436
    %v2719 = vpack.c.b16 %v2443, %v2440
    %v2720 = vpack.c.b16 %v2444, %v2441
    %v2721 = vpack.c.b16 %v2445, %v2442
    %v2722 = vpack.c.b16 %v2449, %v2446
    %v2723 = vpack.c.b16 %v2450, %v2447
    %v2724 = vpack.c.b16 %v2451, %v2448
    %v2725 = vpack.c.b16 %v2455, %v2452
    %v2726 = vpack.c.b16 %v2456, %v2453
    %v2727 = vpack.c.b16 %v2457, %v2454
    %v2728 = vpack.c.b16 %v2461, %v2458
    %v2729 = vpack.c.b16 %v2462, %v2459
    %v2730 = vpack.c.b16 %v2463, %v2460
    %v2731 = vpack.c.b16 %v2467, %v2464
    %v2732 = vpack.c.b16 %v2468, %v2465
    %v2733 = vpack.c.b16 %v2469, %v2466
    %v2734 = vpack.c.b16 %v2473, %v2470
    %v2735 = vpack.c.b16 %v2474, %v2471
    %v2736 = vpack.c.b16 %v2475, %v2472
    %v2737 = vpack.c.b16 %v2479, %v2476
    %v2738 = vpack.c.b16 %v2480, %v2477
    %v2739 = vpack.c.b16 %v2481, %v2478
    %v2740 = vpack.c.b16 %v2485, %v2482
    %v2741 = vpack.c.b16 %v2486, %v2483
    %v2742 = vpack.c.b16 %v2487, %v2484
    %v2743 = vpack.c.b16 %v2491, %v2488
    %v2744 = vpack.c.b16 %v2492, %v2489
    %v2745 = vpack.c.b16 %v2493, %v2490
    %v2746 = vpack.c.b16 %v2497, %v2494
    %v2747 = vpack.c.b16 %v2498, %v2495
    %v2748 = vpack.c.b16 %v2499, %v2496
    %v2749 = vpack.c.b16 %v2503, %v2500
    %v2750 = vpack.c.b16 %v2504, %v2501
    %v2751 = vpack.c.b16 %v2505, %v2502
    %v2752 = vpack.c.b16 %v2509, %v2506
    %v2753 = vpack.c.b16 %v2510, %v2507
    %v2754 = vpack.c.b16 %v2511, %v2508
    %v2755 = vpack.c.b16 %v2515, %v2512
    %v2756 = vpack.c.b16 %v2516, %v2513
    %v2757 = vpack.c.b16 %v2517, %v2514
    %v2758 = vpack.c.b16 %v2521, %v2518
    %v2759 = vpack.c.b16 %v2522, %v2519
    %v2760 = vpack.c.b16 %v2523, %v2520
    %v2761 = vpack.c.b16 %v2527, %v2524
    %v2762 = vpack.c.b16 %v2528, %v2525
    %v2763 = vpack.c.b16 %v2529, %v2526
    %v2764 = vpack.c.b16 %v2533, %v2530
    %v2765 = vpack.c.b16 %v2534, %v2531
    %v2766 = vpack.c.b16 %v2535, %v2532
    %v2767 = vpack.c.b16 %v2539, %v2536
    %v2768 = vpack.c.b16 %v2540, %v2537
    %v2769 = vpack.c.b16 %v2541, %v2538
    %v2770 = vpack.c.b16 %v2545, %v2542
    %v2771 = vpack.c.b16 %v2546, %v2543
    %v2772 = vpack.c.b16 %v2547, %v2544
    %v2773 = vpack.c.b16 %v2551, %v2548
    %v2774 = vpack.c.b16 %v2552, %v2549
    %v2775 = vpack.c.b16 %v2553, %v2550
    %v2776 = vpack.c.b16 %v2557, %v2554
    %v2777 = vpack.c.b16 %v2558, %v2555
    %v2778 = vpack.c.b16 %v2559, %v2556
    %v2779 = vpack.c.b16 %v2563, %v2560
    %v2780 = vpack.c.b16 %v2564, %v2561
    %v2781 = vpack.c.b16 %v2565, %v2562
    %v2782 = vpack.c.b16 %v2569, %v2566
    %v2783 = vpack.c.b16 %v2570, %v2567
    %v2784 = vpack.c.b16 %v2571, %v2568
    %v2785 = vpack.c.b16 %v2575, %v2572
    %v2786 = vpack.c.b16 %v2576, %v2573
    %v2787 = vpack.c.b16 %v2577, %v2574
    %v2788 = vpack.c.b16 %v2581, %v2578
    %v2789 = vpack.c.b16 %v2582, %v2579
    %v2790 = vpack.c.b16 %v2583, %v2580
    %v2791 = vpack.c.b16 %v2587, %v2584
    %v2792 = vpack.c.b16 %v2588, %v2585
    %v2793 = vpack.c.b16 %v2589, %v2586
    %v2794 = vpack.c.b16 %v2593, %v2590
    %v2795 = vpack.c.b16 %v2594, %v2591
    %v2796 = vpack.c.b16 %v2595, %v2592
    %v2797 = vpack.c.b16 %v2599, %v2596
    %v2798 = vpack.c.b16 %v2600, %v2597
    %v2799 = vpack.c.b16 %v2601, %v2598
    %v2800 = vpack.c.b16 %v2605, %v2602
    %v2801 = vpack.c.b16 %v2606, %v2603
    %v2802 = vpack.c.b16 %v2607, %v2604
    %v2803 = vpack.c.b16 %v2611, %v2608
    %v2804 = vpack.c.b16 %v2612, %v2609
    %v2805 = vpack.c.b16 %v2613, %v2610
    %v2806 = vpack.c.b16 %v2617, %v2614
    %v2807 = vpack.c.b16 %v2618, %v2615
    %v2808 = vpack.c.b16 %v2619, %v2616
    %v2809 = vpack.c.b16 %v2623, %v2620
    %v2810 = vpack.c.b16 %v2624, %v2621
    %v2811 = vpack.c.b16 %v2625, %v2622
    %v2812 = vpack.c.b16 %v2629, %v2626
    %v2813 = vpack.c.b16 %v2630, %v2627
    %v2814 = vpack.c.b16 %v2631, %v2628
    %v2815 = vpack.c.b16 %v2635, %v2632
    %v2816 = vpack.c.b16 %v2636, %v2633
    %v2817 = vpack.c.b16 %v2637, %v2634
    %v2818 = vpack.c.b16 %v2641, %v2638
    %v2819 = vpack.c.b16 %v2642, %v2639
    %v2820 = vpack.c.b16 %v2643, %v2640
    %v2821 = vpack.c.b16 %v2647, %v2644
    %v2822 = vpack.c.b16 %v2648, %v2645
    %v2823 = vpack.c.b16 %v2649, %v2646
    %v2824 = vpack.c.b16 %v2653, %v2650
    %v2825 = vpack.c.b16 %v2654, %v2651
    %v2826 = vpack.c.b16 %v2655, %v2652
    %v2827 = vpack.c.b16 %v2659, %v2656
    %v2828 = vpack.c.b16 %v2660, %v2657
    %v2829 = vpack.c.b16 %v2661, %v2658
    %v2830 = vpack.c.b16 %v2665, %v2662
    %v2831 = vpack.c.b16 %v2666, %v2663
    %v2832 = vpack.c.b16 %v2667, %v2664
    %v2833 = vpack.c.b16 %v2671, %v2668
    %v2834 = vpack.c.b16 %v2672, %v2669
    %v2835 = vpack.c.b16 %v2673, %v2670
    %v2836 = vpack.c.b16 %v2677, %v2674
    %v2837 = vpack.c.b16 %v2678, %v2675
    %v2838 = vpack.c.b16 %v2679, %v2676
    %v2839 = vpack.c.b16 %v2683, %v2680
    %v2840 = vpack.c.b16 %v2684, %v2681
    %v2841 = vpack.c.b16 %v2685, %v2682
    %v2842 = vpack.c.b16 %v2689, %v2686
    %v2843 = vpack.c.b16 %v2690, %v2687
    %v2844 = vpack.c.b16 %v2691, %v2688
    %v2845 = vpack.c.b16 %v2695, %v2692
    %v2846 = vpack.c.b16 %v2696, %v2693
    %v2847 = vpack.c.b16 %v2697, %v2694
    %v2848 = vpack.c.b16 %v2701, %v2698
    %v2849 = vpack.c.b16 %v2702, %v2699
    %v2850 = vpack.c.b16 %v2703, %v2700
    %v2851 = vpack.c.b16 %v2707, %v2704
    %v2852 = vpack.c.b16 %v2708, %v2705
    %v2853 = vpack.c.b16 %v2709, %v2706
    %2998 = vmatprep.subr.bf16.mxu0 %v2711
    %2999 = vmatpush1.bf16.msra.mxu0 %v2710
    %3000 = vmatprep.subr.bf16.mxu0 %v2714
    %3001 = vmatpush1.bf16.msra.mxu0 %v2713
    %3002 = vmatprep.subr.bf16.mxu0 %v2717
    %3003 = vmatpush1.bf16.msra.mxu0 %v2716
    %3004 = vmatprep.subr.bf16.mxu0 %v2720
    %3005 = vmatpush1.bf16.msra.mxu0 %v2719
    %3006 = vmatprep.subr.bf16.mxu0 %v2723
    %3007 = vmatpush1.bf16.msra.mxu0 %v2722
    %3008 = vmatprep.subr.bf16.mxu0 %v2726
    %3009 = vmatpush1.bf16.msra.mxu0 %v2725
    %3010 = vmatprep.subr.bf16.mxu0 %v2729
    %3011 = vmatpush1.bf16.msra.mxu0 %v2728
    %3012 = vmatprep.subr.bf16.mxu0 %v2732
    %3013 = vmatpush1.bf16.msra.mxu0 %v2731
    %3014 = vmatprep.subr.bf16.mxu0 %v2735
    %3015 = vmatpush1.bf16.msra.mxu0 %v2734
    %3016 = vmatprep.subr.bf16.mxu0 %v2738
    %3017 = vmatpush1.bf16.msra.mxu0 %v2737
    %3018 = vmatprep.subr.bf16.mxu0 %v2741
    %3019 = vmatpush1.bf16.msra.mxu0 %v2740
    %3020 = vmatprep.subr.bf16.mxu0 %v2744
    %3021 = vmatpush1.bf16.msra.mxu0 %v2743
    %3022 = vmatprep.subr.bf16.mxu0 %v2747
    %3023 = vmatpush1.bf16.msra.mxu0 %v2746
    %3024 = vmatprep.subr.bf16.mxu0 %v2750
    %3025 = vmatpush1.bf16.msra.mxu0 %v2749
    %3026 = vmatprep.subr.bf16.mxu0 %v2753
    %3027 = vmatpush1.bf16.msra.mxu0 %v2752
    %3028 = vmatprep.subr.bf16.mxu0 %v2756
    %3029 = vmatpush1.bf16.msra.mxu0 %v2755
    %3030 = vmatprep.mubr.bf16.mxu0 %v2016
    %3031 = vmatmul.mubr.bf16.gmra.mrb[0].mxu0 %v2015
    %v3032 = vpop.f32.mrb[0].mxu0
    %v3033 = vadd.f32 %v2218, %v3032
    %v3034 = vpop.f32.mrb[0].mxu0
    %v3035 = vadd.f32 %v2222, %v3034
    %v3036 = vpop.f32.mrb[0].mxu0
    %v3037 = vpop.f32.mrb[0].mxu0
    %3038 = vdwg.mxu0
    %3039 = vmatprep.subr.bf16.mxu0 %v2759
    %3040 = vmatpush1.bf16.msra.mxu0 %v2758
    %3041 = vmatprep.subr.bf16.mxu0 %v2762
    %3042 = vmatpush1.bf16.msra.mxu0 %v2761
    %3043 = vmatprep.subr.bf16.mxu0 %v2765
    %3044 = vmatpush1.bf16.msra.mxu0 %v2764
    %3045 = vmatprep.subr.bf16.mxu0 %v2768
    %3046 = vmatpush1.bf16.msra.mxu0 %v2767
    %3047 = vmatprep.subr.bf16.mxu0 %v2771
    %3048 = vmatpush1.bf16.msra.mxu0 %v2770
    %3049 = vmatprep.subr.bf16.mxu0 %v2774
    %3050 = vmatpush1.bf16.msra.mxu0 %v2773
    %3051 = vmatprep.subr.bf16.mxu0 %v2777
    %3052 = vmatpush1.bf16.msra.mxu0 %v2776
    %3053 = vmatprep.subr.bf16.mxu0 %v2780
    %3054 = vmatpush1.bf16.msra.mxu0 %v2779
    %3055 = vmatprep.subr.bf16.mxu0 %v2783
    %3056 = vmatpush1.bf16.msra.mxu0 %v2782
    %3057 = vmatprep.subr.bf16.mxu0 %v2786
    %3058 = vmatpush1.bf16.msra.mxu0 %v2785
    %3059 = vmatprep.subr.bf16.mxu0 %v2789
    %3060 = vmatpush1.bf16.msra.mxu0 %v2788
    %3061 = vmatprep.subr.bf16.mxu0 %v2792
    %3062 = vmatpush1.bf16.msra.mxu0 %v2791
    %3063 = vmatprep.subr.bf16.mxu0 %v2795
    %3064 = vmatpush1.bf16.msra.mxu0 %v2794
    %3065 = vmatprep.subr.bf16.mxu0 %v2798
    %3066 = vmatpush1.bf16.msra.mxu0 %v2797
    %3067 = vmatprep.subr.bf16.mxu0 %v2801
    %3068 = vmatpush1.bf16.msra.mxu0 %v2800
    %3069 = vmatprep.subr.bf16.mxu0 %v2804
    %3070 = vmatpush1.bf16.msra.mxu0 %v2803
    %3071 = vmatprep.mubr.bf16.mxu0 %v2018
    %3072 = vmatmul.mubr.bf16.gmra.mrb[0].mxu0 %v2017
    %v3073 = vpop.f32.mrb[0].mxu0
    %v3074 = vadd.f32 %v3033, %v3073
    %v3075 = vpop.f32.mrb[0].mxu0
    %v3076 = vadd.f32 %v3035, %v3075
    %v3077 = vpop.f32.mrb[0].mxu0
    %v3078 = vpop.f32.mrb[0].mxu0
    %3079 = vdwg.mxu0
    %3080 = vmatprep.subr.bf16.mxu0 %v2807
    %3081 = vmatpush1.bf16.msra.mxu0 %v2806
    %3082 = vmatprep.subr.bf16.mxu0 %v2810
    %3083 = vmatpush1.bf16.msra.mxu0 %v2809
    %3084 = vmatprep.subr.bf16.mxu0 %v2813
    %3085 = vmatpush1.bf16.msra.mxu0 %v2812
    %3086 = vmatprep.subr.bf16.mxu0 %v2816
    %3087 = vmatpush1.bf16.msra.mxu0 %v2815
    %3088 = vmatprep.subr.bf16.mxu0 %v2819
    %3089 = vmatpush1.bf16.msra.mxu0 %v2818
    %3090 = vmatprep.subr.bf16.mxu0 %v2822
    %3091 = vmatpush1.bf16.msra.mxu0 %v2821
    %3092 = vmatprep.subr.bf16.mxu0 %v2825
    %3093 = vmatpush1.bf16.msra.mxu0 %v2824
    %3094 = vmatprep.subr.bf16.mxu0 %v2828
    %3095 = vmatpush1.bf16.msra.mxu0 %v2827
    %3096 = vmatprep.subr.bf16.mxu0 %v2831
    %3097 = vmatpush1.bf16.msra.mxu0 %v2830
    %3098 = vmatprep.subr.bf16.mxu0 %v2834
    %3099 = vmatpush1.bf16.msra.mxu0 %v2833
    %3100 = vmatprep.subr.bf16.mxu0 %v2837
    %3101 = vmatpush1.bf16.msra.mxu0 %v2836
    %3102 = vmatprep.subr.bf16.mxu0 %v2840
    %3103 = vmatpush1.bf16.msra.mxu0 %v2839
    %3104 = vmatprep.subr.bf16.mxu0 %v2843
    %3105 = vmatpush1.bf16.msra.mxu0 %v2842
    %3106 = vmatprep.subr.bf16.mxu0 %v2846
    %3107 = vmatpush1.bf16.msra.mxu0 %v2845
    %3108 = vmatprep.subr.bf16.mxu0 %v2849
    %3109 = vmatpush1.bf16.msra.mxu0 %v2848
    %3110 = vmatprep.subr.bf16.mxu0 %v2852
    %3111 = vmatpush1.bf16.msra.mxu0 %v2851
    %3112 = vmatprep.mubr.bf16.mxu0 %v2020
    %3113 = vmatmul.mubr.bf16.gmra.mrb[0].mxu0 %v2019
    %v3114 = vpop.f32.mrb[0].mxu0
    %v3115 = vadd.f32 %v3074, %v3114
    %v3116 = vpop.f32.mrb[0].mxu0
    %v3117 = vadd.f32 %v3076, %v3116
    %v3118 = vpop.f32.mrb[0].mxu0
    %v3119 = vpop.f32.mrb[0].mxu0
    %3120 = vdwg.mxu0
    %3121 = vmatprep.subr.bf16.mxu0 0
    %3122 = vmatpush1.bf16.msra.mxu0 %v2712
    %3123 = vmatprep.subr.bf16.mxu0 0
    %3124 = vmatpush1.bf16.msra.mxu0 %v2715
    %3125 = vmatprep.subr.bf16.mxu0 0
    %3126 = vmatpush1.bf16.msra.mxu0 %v2718
    %3127 = vmatprep.subr.bf16.mxu0 0
    %3128 = vmatpush1.bf16.msra.mxu0 %v2721
    %3129 = vmatprep.subr.bf16.mxu0 0
    %3130 = vmatpush1.bf16.msra.mxu0 %v2724
    %3131 = vmatprep.subr.bf16.mxu0 0
    %3132 = vmatpush1.bf16.msra.mxu0 %v2727
    %3133 = vmatprep.subr.bf16.mxu0 0
    %3134 = vmatpush1.bf16.msra.mxu0 %v2730
    %3135 = vmatprep.subr.bf16.mxu0 0
    %3136 = vmatpush1.bf16.msra.mxu0 %v2733
    %3137 = vmatprep.subr.bf16.mxu0 0
    %3138 = vmatpush1.bf16.msra.mxu0 %v2736
    %3139 = vmatprep.subr.bf16.mxu0 0
    %3140 = vmatpush1.bf16.msra.mxu0 %v2739
    %3141 = vmatprep.subr.bf16.mxu0 0
    %3142 = vmatpush1.bf16.msra.mxu0 %v2742
    %3143 = vmatprep.subr.bf16.mxu0 0
    %3144 = vmatpush1.bf16.msra.mxu0 %v2745
    %3145 = vmatprep.subr.bf16.mxu0 0
    %3146 = vmatpush1.bf16.msra.mxu0 %v2748
    %3147 = vmatprep.subr.bf16.mxu0 0
    %3148 = vmatpush1.bf16.msra.mxu0 %v2751
    %3149 = vmatprep.subr.bf16.mxu0 0
    %3150 = vmatpush1.bf16.msra.mxu0 %v2754
    %3151 = vmatprep.subr.bf16.mxu0 0
    %3152 = vmatpush1.bf16.msra.mxu0 %v2757
    %3153 = vmatprep.mubr.bf16.mxu0 %v2016
    %3154 = vmatmul.mubr.bf16.gmra.mrb[0].mxu0 %v2015
    %v3155 = vpop.f32.mrb[0].mxu0
    %v3156 = vadd.f32 %v2226, %v3155
    %v3157 = vpop.f32.mrb[0].mxu0
    %v3158 = vpop.f32.mrb[0].mxu0
    %v3159 = vpop.f32.mrb[0].mxu0
    %3160 = vdwg.mxu0
    %3161 = vmatprep.subr.bf16.mxu0 0
    %3162 = vmatpush1.bf16.msra.mxu0 %v2760
    %3163 = vmatprep.subr.bf16.mxu0 0
    %3164 = vmatpush1.bf16.msra.mxu0 %v2763
    %3165 = vmatprep.subr.bf16.mxu0 0
    %3166 = vmatpush1.bf16.msra.mxu0 %v2766
    %3167 = vmatprep.subr.bf16.mxu0 0
    %3168 = vmatpush1.bf16.msra.mxu0 %v2769
    %3169 = vmatprep.subr.bf16.mxu0 0
    %3170 = vmatpush1.bf16.msra.mxu0 %v2772
    %3171 = vmatprep.subr.bf16.mxu0 0
    %3172 = vmatpush1.bf16.msra.mxu0 %v2775
    %3173 = vmatprep.subr.bf16.mxu0 0
    %3174 = vmatpush1.bf16.msra.mxu0 %v2778
    %3175 = vmatprep.subr.bf16.mxu0 0
    %3176 = vmatpush1.bf16.msra.mxu0 %v2781
    %3177 = vmatprep.subr.bf16.mxu0 0
    %3178 = vmatpush1.bf16.msra.mxu0 %v2784
    %3179 = vmatprep.subr.bf16.mxu0 0
    %3180 = vmatpush1.bf16.msra.mxu0 %v2787
    %3181 = vmatprep.subr.bf16.mxu0 0
    %3182 = vmatpush1.bf16.msra.mxu0 %v2790
    %3183 = vmatprep.subr.bf16.mxu0 0
    %3184 = vmatpush1.bf16.msra.mxu0 %v2793
    %3185 = vmatprep.subr.bf16.mxu0 0
    %3186 = vmatpush1.bf16.msra.mxu0 %v2796
    %3187 = vmatprep.subr.bf16.mxu0 0
    %3188 = vmatpush1.bf16.msra.mxu0 %v2799
    %3189 = vmatprep.subr.bf16.mxu0 0
    %3190 = vmatpush1.bf16.msra.mxu0 %v2802
    %3191 = vmatprep.subr.bf16.mxu0 0
    %3192 = vmatpush1.bf16.msra.mxu0 %v2805
    %3193 = vmatprep.mubr.bf16.mxu0 %v2018
    %3194 = vmatmul.mubr.bf16.gmra.mrb[0].mxu0 %v2017
    %v3195 = vpop.f32.mrb[0].mxu0
    %v3196 = vadd.f32 %v3156, %v3195
    %v3197 = vpop.f32.mrb[0].mxu0
    %v3198 = vpop.f32.mrb[0].mxu0
    %v3199 = vpop.f32.mrb[0].mxu0
    %3200 = vdwg.mxu0
    %3201 = vmatprep.subr.bf16.mxu0 0
    %3202 = vmatpush1.bf16.msra.mxu0 %v2808
    %3203 = vmatprep.subr.bf16.mxu0 0
    %3204 = vmatpush1.bf16.msra.mxu0 %v2811
    %3205 = vmatprep.subr.bf16.mxu0 0
    %3206 = vmatpush1.bf16.msra.mxu0 %v2814
    %3207 = vmatprep.subr.bf16.mxu0 0
    %3208 = vmatpush1.bf16.msra.mxu0 %v2817
    %3209 = vmatprep.subr.bf16.mxu0 0
    %3210 = vmatpush1.bf16.msra.mxu0 %v2820
    %3211 = vmatprep.subr.bf16.mxu0 0
    %3212 = vmatpush1.bf16.msra.mxu0 %v2823
    %3213 = vmatprep.subr.bf16.mxu0 0
    %3214 = vmatpush1.bf16.msra.mxu0 %v2826
    %3215 = vmatprep.subr.bf16.mxu0 0
    %3216 = vmatpush1.bf16.msra.mxu0 %v2829
    %3217 = vmatprep.subr.bf16.mxu0 0
    %3218 = vmatpush1.bf16.msra.mxu0 %v2832
    %3219 = vmatprep.subr.bf16.mxu0 0
    %3220 = vmatpush1.bf16.msra.mxu0 %v2835
    %3221 = vmatprep.subr.bf16.mxu0 0
    %3222 = vmatpush1.bf16.msra.mxu0 %v2838
    %3223 = vmatprep.subr.bf16.mxu0 0
    %3224 = vmatpush1.bf16.msra.mxu0 %v2841
    %3225 = vmatprep.subr.bf16.mxu0 0
    %3226 = vmatpush1.bf16.msra.mxu0 %v2844
    %3227 = vmatprep.subr.bf16.mxu0 0
    %3228 = vmatpush1.bf16.msra.mxu0 %v2847
    %3229 = vmatprep.subr.bf16.mxu0 0
    %3230 = vmatpush1.bf16.msra.mxu0 %v2850
    %3231 = vmatprep.subr.bf16.mxu0 0
    %3232 = vmatpush1.bf16.msra.mxu0 %v2853
    %3233 = vmatprep.mubr.bf16.mxu0 %v2020
    %3234 = vmatmul.mubr.bf16.gmra.mrb[0].mxu0 %v2019
    %v3235 = vpop.f32.mrb[0].mxu0
    %v3236 = vadd.f32 %v3196, %v3235
    %v3237 = vpop.f32.mrb[0].mxu0
    %v3238 = vpop.f32.mrb[0].mxu0
    %v3239 = vpop.f32.mrb[0].mxu0
    %3240 = vdwg.mxu0
    %v3241 = vmax.f32 %v3115, 0.0
    %v3242 = vmax.f32 %v3117, 0.0
    %v3243 = vmax.f32 %v3236, 0.0
    %v3244 = vpack.c.bf16 %v3241, %v3241
    %v3245 = vpack.c.bf16 %v3242, %v3242
    %v3246 = vpack.c.bf16 %v3243, %v3243
    %v3247 = vld [vmem:[%s18] sm:$0xf]
    %v3248 = vld [vmem:[%s18 + $0x4] sm:$0xf]
    %v3249 = vld [vmem:[%s18 + $0x8] sm:$0xf]
    %v3250 = vld [vmem:[%s18 + $0xc] sm:$0xf]
    %v3251 = vld [vmem:[%s18 + $0x10] sm:$0xf]
    %v3252 = vld [vmem:[%s18 + $0x14] sm:$0xf]
    %v3253 = vld [vmem:[%s18 + $0x18] sm:$0xf]
    %v3254 = vld [vmem:[%s18 + $0x1c] sm:$0xf]
    %v3255 = vld [vmem:[%s18 + $0x20] sm:$0xf]
    %v3256 = vld [vmem:[%s18 + $0x24] sm:$0xf]
    %v3257 = vld [vmem:[%s18 + $0x28] sm:$0xf]
    %v3258 = vld [vmem:[%s18 + $0x2c] sm:$0xf]
    %v3259 = vld [vmem:[%s18 + $0x30] sm:$0xf]
    %v3260 = vld [vmem:[%s18 + $0x34] sm:$0xf]
    %v3261 = vld [vmem:[%s18 + $0x38] sm:$0xf]
    %v3262 = vld [vmem:[%s18 + $0x3c] sm:$0xf]
    %v3263 = vld [vmem:[%s18 + $0x40] sm:$0xf]
    %v3264 = vld [vmem:[%s18 + $0x44] sm:$0xf]
    %v3265 = vld [vmem:[%s18 + $0x48] sm:$0xf]
    %v3266 = vld [vmem:[%s18 + $0x4c] sm:$0xf]
    %v3267 = vld [vmem:[%s18 + $0x50] sm:$0xf]
    %v3268 = vld [vmem:[%s18 + $0x54] sm:$0xf]
    %v3269 = vld [vmem:[%s18 + $0x58] sm:$0xf]
    %v3270 = vld [vmem:[%s18 + $0x5c] sm:$0xf]
    %v3271 = vld [vmem:[%s18 + $0x60] sm:$0xf]
    %v3272 = vld [vmem:[%s18 + $0x64] sm:$0xf]
    %v3273 = vld [vmem:[%s18 + $0x68] sm:$0xf]
    %v3274 = vld [vmem:[%s18 + $0x6c] sm:$0xf]
    %v3275 = vld [vmem:[%s18 + $0x70] sm:$0xf]
    %v3276 = vld [vmem:[%s18 + $0x74] sm:$0xf]
    %v3277 = vld [vmem:[%s18 + $0x78] sm:$0xf]
    %v3278 = vld [vmem:[%s18 + $0x7c] sm:$0xf]
    %v3279 = vld [vmem:[%s18 + $0x80] sm:$0xf]
    %v3280 = vld [vmem:[%s18 + $0x84] sm:$0xf]
    %v3281 = vld [vmem:[%s18 + $0x88] sm:$0xf]
    %v3282 = vld [vmem:[%s18 + $0x8c] sm:$0xf]
    %v3283 = vld [vmem:[%s18 + $0x90] sm:$0xf]
    %v3284 = vld [vmem:[%s18 + $0x94] sm:$0xf]
    %v3285 = vld [vmem:[%s18 + $0x98] sm:$0xf]
    %v3286 = vld [vmem:[%s18 + $0x9c] sm:$0xf]
    %v3287 = vld [vmem:[%s18 + $0xa0] sm:$0xf]
    %v3288 = vld [vmem:[%s18 + $0xa4] sm:$0xf]
    %v3289 = vld [vmem:[%s18 + $0xa8] sm:$0xf]
    %v3290 = vld [vmem:[%s18 + $0xac] sm:$0xf]
    %v3291 = vld [vmem:[%s18 + $0xb0] sm:$0xf]
    %v3292 = vld [vmem:[%s18 + $0xb4] sm:$0xf]
    %v3293 = vld [vmem:[%s18 + $0xb8] sm:$0xf]
    %v3294 = vld [vmem:[%s18 + $0xbc] sm:$0xf]
    %v3295 = vld [vmem:[%s19] sm:$0x1]
    %v3297 = vlaneseq
    %v3298 = vshrl.u32 %v3297, 7
    %v3299 = vsub.s32 0, %v3298
    %v3300 = vrot.slane %v3295, %v3299
    %v3350 = vunpack.c.l.b16 %v3247
    %v3351 = vunpack.c.l.b16 %v3248
    %v3352 = vunpack.c.l.b16 %v3249
    %v3353 = vunpack.c.l.b16 %v3250
    %v3354 = vunpack.c.l.b16 %v3251
    %v3355 = vunpack.c.l.b16 %v3252
    %v3356 = vunpack.c.l.b16 %v3253
    %v3357 = vunpack.c.l.b16 %v3254
    %v3358 = vunpack.c.l.b16 %v3255
    %v3359 = vunpack.c.l.b16 %v3256
    %v3360 = vunpack.c.l.b16 %v3257
    %v3361 = vunpack.c.l.b16 %v3258
    %v3362 = vunpack.c.l.b16 %v3259
    %v3363 = vunpack.c.l.b16 %v3260
    %v3364 = vunpack.c.l.b16 %v3261
    %v3365 = vunpack.c.l.b16 %v3262
    %v3366 = vunpack.c.l.b16 %v3263
    %v3367 = vunpack.c.l.b16 %v3264
    %v3368 = vunpack.c.l.b16 %v3265
    %v3369 = vunpack.c.l.b16 %v3266
    %v3370 = vunpack.c.l.b16 %v3267
    %v3371 = vunpack.c.l.b16 %v3268
    %v3372 = vunpack.c.l.b16 %v3269
    %v3373 = vunpack.c.l.b16 %v3270
    %v3374 = vunpack.c.l.b16 %v3271
    %v3375 = vunpack.c.l.b16 %v3272
    %v3376 = vunpack.c.l.b16 %v3273
    %v3377 = vunpack.c.l.b16 %v3274
    %v3378 = vunpack.c.l.b16 %v3275
    %v3379 = vunpack.c.l.b16 %v3276
    %v3380 = vunpack.c.l.b16 %v3277
    %v3381 = vunpack.c.l.b16 %v3278
    %v3382 = vunpack.c.l.b16 %v3279
    %v3383 = vunpack.c.l.b16 %v3280
    %v3384 = vunpack.c.l.b16 %v3281
    %v3385 = vunpack.c.l.b16 %v3282
    %v3386 = vunpack.c.l.b16 %v3283
    %v3387 = vunpack.c.l.b16 %v3284
    %v3388 = vunpack.c.l.b16 %v3285
    %v3389 = vunpack.c.l.b16 %v3286
    %v3390 = vunpack.c.l.b16 %v3287
    %v3391 = vunpack.c.l.b16 %v3288
    %v3392 = vunpack.c.l.b16 %v3289
    %v3393 = vunpack.c.l.b16 %v3290
    %v3394 = vunpack.c.l.b16 %v3291
    %v3395 = vunpack.c.l.b16 %v3292
    %v3396 = vunpack.c.l.b16 %v3293
    %v3397 = vunpack.c.l.b16 %v3294
    %v3398 = vpack.c.b16 %v3351, %v3350
    %v3399 = vpack.c.b16 %v3353, %v3352
    %v3400 = vpack.c.b16 %v3355, %v3354
    %v3401 = vpack.c.b16 %v3357, %v3356
    %v3402 = vpack.c.b16 %v3359, %v3358
    %v3403 = vpack.c.b16 %v3361, %v3360
    %v3404 = vpack.c.b16 %v3363, %v3362
    %v3405 = vpack.c.b16 %v3365, %v3364
    %v3406 = vpack.c.b16 %v3367, %v3366
    %v3407 = vpack.c.b16 %v3369, %v3368
    %v3408 = vpack.c.b16 %v3371, %v3370
    %v3409 = vpack.c.b16 %v3373, %v3372
    %v3410 = vpack.c.b16 %v3375, %v3374
    %v3411 = vpack.c.b16 %v3377, %v3376
    %v3412 = vpack.c.b16 %v3379, %v3378
    %v3413 = vpack.c.b16 %v3381, %v3380
    %v3414 = vpack.c.b16 %v3383, %v3382
    %v3415 = vpack.c.b16 %v3385, %v3384
    %v3416 = vpack.c.b16 %v3387, %v3386
    %v3417 = vpack.c.b16 %v3389, %v3388
    %v3418 = vpack.c.b16 %v3391, %v3390
    %v3419 = vpack.c.b16 %v3393, %v3392
    %v3420 = vpack.c.b16 %v3395, %v3394
    %v3421 = vpack.c.b16 %v3397, %v3396
    %3446 = vmatprep.subr.bf16.mxu0 0
    %3447 = vmatpush1.bf16.msra.mxu0 %v3398
    %3448 = vmatprep.subr.bf16.mxu0 0
    %3449 = vmatpush1.bf16.msra.mxu0 %v3399
    %3450 = vmatprep.subr.bf16.mxu0 0
    %3451 = vmatpush1.bf16.msra.mxu0 %v3400
    %3452 = vmatprep.subr.bf16.mxu0 0
    %3453 = vmatpush1.bf16.msra.mxu0 %v3401
    %3454 = vmatprep.subr.bf16.mxu0 0
    %3455 = vmatpush1.bf16.msra.mxu0 %v3402
    %3456 = vmatprep.subr.bf16.mxu0 0
    %3457 = vmatpush1.bf16.msra.mxu0 %v3403
    %3458 = vmatprep.subr.bf16.mxu0 0
    %3459 = vmatpush1.bf16.msra.mxu0 %v3404
    %3460 = vmatprep.subr.bf16.mxu0 0
    %3461 = vmatpush1.bf16.msra.mxu0 %v3405
    %3462 = vmatprep.subr.bf16.mxu0 0
    %3463 = vmatpush1.bf16.msra.mxu0 %v3406
    %3464 = vmatprep.subr.bf16.mxu0 0
    %3465 = vmatpush1.bf16.msra.mxu0 %v3407
    %3466 = vmatprep.subr.bf16.mxu0 0
    %3467 = vmatpush1.bf16.msra.mxu0 %v3408
    %3468 = vmatprep.subr.bf16.mxu0 0
    %3469 = vmatpush1.bf16.msra.mxu0 %v3409
    %3470 = vmatprep.subr.bf16.mxu0 0
    %3471 = vmatpush1.bf16.msra.mxu0 %v3410
    %3472 = vmatprep.subr.bf16.mxu0 0
    %3473 = vmatpush1.bf16.msra.mxu0 %v3411
    %3474 = vmatprep.subr.bf16.mxu0 0
    %3475 = vmatpush1.bf16.msra.mxu0 %v3412
    %3476 = vmatprep.subr.bf16.mxu0 0
    %3477 = vmatpush1.bf16.msra.mxu0 %v3413
    %3478 = vmatprep.mubr.bf16.mxu0 %v3245
    %3479 = vmatmul.mubr.bf16.gmra.mrb[0].mxu0 %v3244
    %v3480 = vpop.f32.mrb[0].mxu0
    %v3481 = vadd.f32 %v3300, %v3480
    %v3482 = vpop.f32.mrb[0].mxu0
    %v3483 = vpop.f32.mrb[0].mxu0
    %v3484 = vpop.f32.mrb[0].mxu0
    %3485 = vdwg.mxu0
    %3486 = vmatprep.subr.bf16.mxu0 0
    %3487 = vmatpush1.bf16.msra.mxu0 %v3414
    %3488 = vmatprep.subr.bf16.mxu0 0
    %3489 = vmatpush1.bf16.msra.mxu0 %v3415
    %3490 = vmatprep.subr.bf16.mxu0 0
    %3491 = vmatpush1.bf16.msra.mxu0 %v3416
    %3492 = vmatprep.subr.bf16.mxu0 0
    %3493 = vmatpush1.bf16.msra.mxu0 %v3417
    %3494 = vmatprep.subr.bf16.mxu0 0
    %3495 = vmatpush1.bf16.msra.mxu0 %v3418
    %3496 = vmatprep.subr.bf16.mxu0 0
    %3497 = vmatpush1.bf16.msra.mxu0 %v3419
    %3498 = vmatprep.subr.bf16.mxu0 0
    %3499 = vmatpush1.bf16.msra.mxu0 %v3420
    %3500 = vmatprep.subr.bf16.mxu0 0
    %3501 = vmatpush1.bf16.msra.mxu0 %v3421
    %3502 = vmatprep.subr.bf16.mxu0 0
    %3503 = vmatpush1.bf16.msra.mxu0 0
    %3504 = vmatprep.subr.bf16.mxu0 0
    %3505 = vmatpush1.bf16.msra.mxu0 0
    %3506 = vmatprep.subr.bf16.mxu0 0
    %3507 = vmatpush1.bf16.msra.mxu0 0
    %3508 = vmatprep.subr.bf16.mxu0 0
    %3509 = vmatpush1.bf16.msra.mxu0 0
    %3510 = vmatprep.subr.bf16.mxu0 0
    %3511 = vmatpush1.bf16.msra.mxu0 0
    %3512 = vmatprep.subr.bf16.mxu0 0
    %3513 = vmatpush1.bf16.msra.mxu0 0
    %3514 = vmatprep.subr.bf16.mxu0 0
    %3515 = vmatpush1.bf16.msra.mxu0 0
    %3516 = vmatprep.subr.bf16.mxu0 0
    %3517 = vmatpush1.bf16.msra.mxu0 0
    %3518 = vmatprep.mubr.bf16.mxu0 0
    %3519 = vmatmul.mubr.bf16.gmra.mrb[0].mxu0 %v3246
    %v3520 = vpop.f32.mrb[0].mxu0
    %v3521 = vadd.f32 %v3481, %v3520
    %v3522 = vpop.f32.mrb[0].mxu0
    %v3523 = vpop.f32.mrb[0].mxu0
    %v3524 = vpop.f32.mrb[0].mxu0
    %3525 = vdwg.mxu0
    %v3526 = vmax.f32 %v3521, 0.0
    %v3527 = vld [vmem:[#allocation9] sm:$0xff]
    %v3528 = vld [vmem:[#allocation9 + $0x8] sm:$0xff]
    %v3529 = vld [vmem:[#allocation9 + $0x10] sm:$0xff]
    %v3530 = vld [vmem:[#allocation9 + $0x18] sm:$0xff]
    %v3531 = vld [vmem:[#allocation9 + $0x20] sm:$0xff]
    %v3532 = vld [vmem:[#allocation9 + $0x28] sm:$0xff]
    %v3533 = vld [vmem:[#allocation9 + $0x30] sm:$0xff]
    %v3534 = vld [vmem:[#allocation9 + $0x38] sm:$0xff]
    %v3535 = vld [vmem:[#allocation9 + $0x40] sm:$0xff]
    %v3536 = vld [vmem:[#allocation9 + $0x48] sm:$0xff]
    %v3537 = vld [vmem:[#allocation9 + $0x50] sm:$0xff]
    %v3538 = vld [vmem:[#allocation9 + $0x58] sm:$0xff]
    %v3539 = vld [vmem:[#allocation9 + $0x60] sm:$0xff]
    %v3540 = vld [vmem:[#allocation9 + $0x68] sm:$0xff]
    %v3541 = vld [vmem:[#allocation9 + $0x70] sm:$0xff]
    %v3542 = vld [vmem:[#allocation9 + $0x78] sm:$0xff]
    %v3543 = vld [vmem:[%s21] sm:$0x1]
    %v3545 = vlaneseq
    %v3546 = vshrl.u32 %v3545, 7
    %v3547 = vsub.s32 0, %v3546
    %v3548 = vrot.slane %v3543, %v3547
    %3550 = vmatprep.subr.mxu0 0.0
    %3551 = vmatpush1.msra.mxu0 %v3527
    %3552 = vmatprep.subr.mxu0 0.0
    %3553 = vmatpush1.msra.mxu0 %v3528
    %3554 = vmatprep.subr.mxu0 0.0
    %3555 = vmatpush1.msra.mxu0 %v3529
    %3556 = vmatprep.subr.mxu0 0.0
    %3557 = vmatpush1.msra.mxu0 %v3530
    %3558 = vmatprep.subr.mxu0 0.0
    %3559 = vmatpush1.msra.mxu0 %v3531
    %3560 = vmatprep.subr.mxu0 0.0
    %3561 = vmatpush1.msra.mxu0 %v3532
    %3562 = vmatprep.subr.mxu0 0.0
    %3563 = vmatpush1.msra.mxu0 %v3533
    %3564 = vmatprep.subr.mxu0 0.0
    %3565 = vmatpush1.msra.mxu0 %v3534
    %3566 = vmatprep.subr.mxu0 0.0
    %3567 = vmatpush1.msra.mxu0 %v3535
    %3568 = vmatprep.subr.mxu0 0.0
    %3569 = vmatpush1.msra.mxu0 %v3536
    %3570 = vmatprep.subr.mxu0 0.0
    %3571 = vmatpush1.msra.mxu0 %v3537
    %3572 = vmatprep.subr.mxu0 0.0
    %3573 = vmatpush1.msra.mxu0 %v3538
    %3574 = vmatprep.subr.mxu0 0.0
    %3575 = vmatpush1.msra.mxu0 %v3539
    %3576 = vmatprep.subr.mxu0 0.0
    %3577 = vmatpush1.msra.mxu0 %v3540
    %3578 = vmatprep.subr.mxu0 0.0
    %3579 = vmatpush1.msra.mxu0 %v3541
    %3580 = vmatprep.subr.mxu0 0.0
    %3581 = vmatpush1.msra.mxu0 %v3542
    %3582 = vmatprep.subr.mxu0 0.0
    %3583 = vmatpush1.msra.mxu0 0.0
    %3584 = vmatprep.subr.mxu0 0.0
    %3585 = vmatpush1.msra.mxu0 0.0
    %3586 = vmatprep.subr.mxu0 0.0
    %3587 = vmatpush1.msra.mxu0 0.0
    %3588 = vmatprep.subr.mxu0 0.0
    %3589 = vmatpush1.msra.mxu0 0.0
    %3590 = vmatprep.subr.mxu0 0.0
    %3591 = vmatpush1.msra.mxu0 0.0
    %3592 = vmatprep.subr.mxu0 0.0
    %3593 = vmatpush1.msra.mxu0 0.0
    %3594 = vmatprep.subr.mxu0 0.0
    %3595 = vmatpush1.msra.mxu0 0.0
    %3596 = vmatprep.subr.mxu0 0.0
    %3597 = vmatpush1.msra.mxu0 0.0
    %3598 = vmatprep.subr.mxu0 0.0
    %3599 = vmatpush1.msra.mxu0 0.0
    %3600 = vmatprep.subr.mxu0 0.0
    %3601 = vmatpush1.msra.mxu0 0.0
    %3602 = vmatprep.subr.mxu0 0.0
    %3603 = vmatpush1.msra.mxu0 0.0
    %3604 = vmatprep.subr.mxu0 0.0
    %3605 = vmatpush1.msra.mxu0 0.0
    %3606 = vmatprep.subr.mxu0 0.0
    %3607 = vmatpush1.msra.mxu0 0.0
    %3608 = vmatprep.subr.mxu0 0.0
    %3609 = vmatpush1.msra.mxu0 0.0
    %3610 = vmatprep.subr.mxu0 0.0
    %3611 = vmatpush1.msra.mxu0 0.0
    %3612 = vmatprep.subr.mxu0 0.0
    %3613 = vmatpush1.msra.mxu0 0.0
    %3614 = vmatprep.mubr.f32.mxu0 0.0
    %3615 = vmatmul.mubr.f32.gmra.mrb[0].mxu0 %v3526
    %v3616 = vpop.f32.mrb[0].mxu0
    %v3617 = vadd.f32 %v3548, %v3616
    %v3618 = vpop.f32.mrb[0].mxu0
    %3619 = vdwg.mxu0
    %v3620 = vlaneseq
    %v3621 = vand.u32 %v3620, 127
    %vm3622 = vcmp.eq.s32.totalorder %v3621, 0
    %v3623 = vxor.u32 %v3617, 2147483648
    %v3624 = vmul.f32 %v3623, 1.442695
    %v3625 = vpow.pop %v3624
    %v3626 = vadd.f32 %v3625, 1.0
    %v3627 = vrcp.pop %v3626
    %v3628 = vmul.f32 1.0, %v3627
    %v3629 = vsel %vm3622, %v3628, %v3617
    %3630 = vst [vmem:[%s22] sm:$0xff] %v3629
    // Predicated region
    $region110: #{grasp_head_forward.1} parent=1 // pred_check
      _
    $region111: #{grasp_head_forward.1} parent=1 // pred_check_branch
      %3632 = sbr.rel (0) target = $region113
    $region112: #{grasp_head_forward.1} parent=1 // pred_region
      _
    $region113: #{grasp_head_forward.1} parent=1 // pred_fallthru
      _
    // Predicated region
    $region114: #{grasp_head_forward.1} parent=1 // pred_check
      _
    $region115: #{grasp_head_forward.1} parent=1 // pred_check_branch
      %3634 = sbr.rel (0) target = $region117
    $region116: #{grasp_head_forward.1} parent=1 // pred_region
      _
    $region117: #{grasp_head_forward.1} parent=1 // pred_fallthru
      _
    %3635 = vsyncpa [#allocation3], 1
    %3636 = vsyncpa [#allocation5], 1
    %3637 = vsyncpa [#allocation8], 1

</llo_original>
